<compile_context>
chip_gen: v6e
topology: v6e:2x2x1
jax: 0.10.0
libtpu: 0.0.40
codegen_flags: <defaults>
</compile_context>

<pallas_src>
import functools
import math

import jax
import jax.numpy as jnp
from jax.experimental import pallas as pl
from jax.experimental.pallas import tpu as pltpu


def _layer_norm(h, w, b, eps=1e-5):
    mu = jnp.mean(h, axis=-1, keepdims=True)
    var = jnp.mean((h - mu) ** 2, axis=-1, keepdims=True)
    return (h - mu) * jax.lax.rsqrt(var + eps) * w + b


def _new_gelu(x):
    return 0.5 * x * (1.0 + jnp.tanh(math.sqrt(2.0 / math.pi) * (x + 0.044715 * x ** 3)))


def rotary_block_kernel(
    x_ref,
    cos_ref, sin1_ref, sin2_ref,
    ln1_w_ref, ln1_b_ref,
    wattn_ref, battn_ref,
    wproj_ref, bproj_ref,
    ln2_w_ref, ln2_b_ref,
    w1_ref, b1_ref,
    w2_ref, b2_ref,
    out_ref,
    *, n_head,
):
    x = x_ref[...]                               # (Bb, T, C) f32
    Bb, T, C = x.shape
    D = C // n_head
    half = D // 2
    xr = x.reshape(Bb * T, C)                    # fold batch into the matmul M dim

    cos = cos_ref[...]                           # (Bb*T, C)
    sin1 = sin1_ref[...]                         # signed sin, first half of each head
    sin2 = sin2_ref[...]                         # signed sin, second half of each head

    # ---- attention branch: x + attn(ln_1(x)) ----
    h = _layer_norm(xr, ln1_w_ref[...], ln1_b_ref[...])
    qkv = (jnp.dot(h.astype(wattn_ref.dtype), wattn_ref[...],
                   preferred_element_type=jnp.float32) + battn_ref[...])
    q = qkv[:, 0 * C:1 * C]
    k = qkv[:, 1 * C:2 * C]
    v = qkv[:, 2 * C:3 * C]

    # Full-width rotary.  Per head: rotate(u) = [-u[half:], u[:half]].  The two rolls
    # over the full C axis give u[(i +/- half) mod C]; the pre-signed sin tables are
    # zero on the lanes where the full-width roll crossed a head boundary.
    def rope(u):
        up = pltpu.roll(u, C - half, 1)          # u[(i + half) mod C]
        dn = pltpu.roll(u, half, 1)              # u[(i - half) mod C]
        return u * cos + up * sin1 + dn * sin2

    q = rope(q).reshape(Bb, T, C)
    k = rope(k).reshape(Bb, T, C)
    v = v.reshape(Bb, T, C)

    row = jax.lax.broadcasted_iota(jnp.int32, (T, T), 0)
    col = jax.lax.broadcasted_iota(jnp.int32, (T, T), 1)
    causal = row >= col
    scale = 1.0 / math.sqrt(D)

    # Head dim is tiny (K = D), so these matmuls are MXU-starved no matter the tiling;
    # keep them as a static loop of batch-folded einsums so the big GEMMs
    # (qkv / proj / MLP) remain the MXU critical path.
    head_outs = []
    for hd in range(n_head):
        sl = slice(hd * D, (hd + 1) * D)
        qh = q[:, :, sl].astype(jnp.bfloat16)
        kh = k[:, :, sl].astype(jnp.bfloat16)
        vh = v[:, :, sl].astype(jnp.bfloat16)
        s = jnp.einsum("btd,bsd->bts", qh, kh,
                       preferred_element_type=jnp.float32) * scale
        s = jnp.where(causal, s, -1e30)          # finite mask: safe if K-tiling added
        s = s - jnp.max(s, axis=-1, keepdims=True)
        p = jnp.exp(s)
        p = p * pl.reciprocal(jnp.sum(p, axis=-1, keepdims=True), approx=True)
        head_outs.append(jnp.einsum("bts,bsd->btd", p.astype(jnp.bfloat16), vh,
                                    preferred_element_type=jnp.float32))
    y = jnp.concatenate(head_outs, axis=-1).reshape(Bb * T, C)
    y = (jnp.dot(y.astype(wproj_ref.dtype), wproj_ref[...],
                 preferred_element_type=jnp.float32) + bproj_ref[...])
    x1 = xr + y

    # ---- MLP branch: x1 + mlpf(ln_2(x1)) ----
    h2 = _layer_norm(x1, ln2_w_ref[...], ln2_b_ref[...])
    m = (jnp.dot(h2.astype(w1_ref.dtype), w1_ref[...],
                 preferred_element_type=jnp.float32) + b1_ref[...])
    m = _new_gelu(m)
    m = (jnp.dot(m.astype(w2_ref.dtype), w2_ref[...],
                 preferred_element_type=jnp.float32) + b2_ref[...])

    out_ref[...] = (x1 + m).reshape(Bb, T, C)
    # TODO(synk): for large T, switch attention to flash-style K/V tiling with online
    # softmax and row-tile the MLP so the (T,T) and (T,4C) buffers stay within VMEM.


def _const_spec(arr):
    nd = arr.ndim
    return pl.BlockSpec(arr.shape, lambda b, _nd=nd: (0,) * _nd)


def rotary_block(x, params, cos, sin, *, n_head, block_b=1):
    """x: (B, T, C) f32.  params: dict of pre-transposed f32 weights.  cos/sin: (T, D)."""
    B, T, C = x.shape
    assert B % block_b == 0 and C % n_head == 0
    D = C // n_head
    half = D // 2

    # Full-width rotary tables, tiled to (block_b*T, C), with rotate_half signs baked in.
    j = jnp.arange(D)
    sin_up = jnp.where(j < half, -sin, 0.0)      # pairs with roll giving u[i + half]
    sin_dn = jnp.where(j >= half, sin, 0.0)      # pairs with roll giving u[i - half]
    tile = (block_b, n_head)
    cos_f = jnp.tile(cos, tile).astype(jnp.float32)
    sin1_f = jnp.tile(sin_up, tile).astype(jnp.float32)
    sin2_f = jnp.tile(sin_dn, tile).astype(jnp.float32)

    bf16 = jnp.bfloat16
    param_list = [
        params["ln1_w"], params["ln1_b"],
        params["wattn"].astype(bf16), params["battn"],
        params["wproj"].astype(bf16), params["bproj"],
        params["ln2_w"], params["ln2_b"],
        params["w1"].astype(bf16), params["b1"],
        params["w2"].astype(bf16), params["b2"],
    ]
    tables = [cos_f, sin1_f, sin2_f]

    in_specs = (
        [pl.BlockSpec((block_b, T, C), lambda b: (b, 0, 0))]
        + [_const_spec(t) for t in tables]
        + [_const_spec(p) for p in param_list]
    )
    # TODO(synk): single-buffer the constant weight/table BlockSpecs
    # (pipeline_mode=pl.Buffered(1)) to halve weight-resident VMEM on v7x.

    kernel = functools.partial(rotary_block_kernel, n_head=n_head)
    return pl.pallas_call(
        kernel,
        grid=(B // block_b,),
        in_specs=in_specs,
        out_specs=pl.BlockSpec((block_b, T, C), lambda b: (b, 0, 0)),
        out_shape=jax.ShapeDtypeStruct((B, T, C), jnp.float32),
        compiler_params=pltpu.CompilerParams(
            dimension_semantics=("parallel",),
            vmem_limit_bytes=64 * 1024 * 1024,
        ),
    )(x, cos_f, sin1_f, sin2_f, *param_list)


def make_params(key, n_embd):
    """Deterministic synthetic parameters (PyTorch Linear weights pre-transposed to (in, out))."""
    C = n_embd
    ks = jax.random.split(key, 8)
    s = 0.02
    return {
        "ln1_w": jnp.ones((1, C), jnp.float32),
        "ln1_b": jnp.zeros((1, C), jnp.float32),
        "wattn": s * jax.random.normal(ks[0], (C, 3 * C), jnp.float32),
        "battn": s * jax.random.normal(ks[1], (1, 3 * C), jnp.float32),
        "wproj": s * jax.random.normal(ks[2], (C, C), jnp.float32),
        "bproj": s * jax.random.normal(ks[3], (1, C), jnp.float32),
        "ln2_w": jnp.ones((1, C), jnp.float32),
        "ln2_b": jnp.zeros((1, C), jnp.float32),
        "w1": s * jax.random.normal(ks[4], (C, 4 * C), jnp.float32),
        "b1": s * jax.random.normal(ks[5], (1, 4 * C), jnp.float32),
        "w2": s * jax.random.normal(ks[6], (4 * C, C), jnp.float32),
        "b2": s * jax.random.normal(ks[7], (1, C), jnp.float32),
    }


def make_rotary_tables(n_seq, n_embd, n_head, base=10000.0):
    """cos/sin caches, Eq. (34) of RoFormer, shape (n_seq, n_embd // n_head)."""
    d = n_embd // n_head
    inv_freq = 1.0 / base ** (jnp.arange(0, d, 2, dtype=jnp.float32) / d)
    t = jnp.arange(n_seq, dtype=jnp.float32)
    freqs = jnp.einsum("i,j->ij", t, inv_freq)
    emb = jnp.concatenate([freqs, freqs], axis=-1)          # (n_seq, d)
    return jnp.cos(emb), jnp.sin(emb)


def rotary_block_reference(x, params, cos, sin, *, n_head):
    """Pure-JAX f32 reference mirroring the PyTorch RotaryBlock forward."""
    B, T, C = x.shape
    D = C // n_head

    def ln(h, w, b, eps=1e-5):
        mu = jnp.mean(h, axis=-1, keepdims=True)
        var = jnp.mean((h - mu) ** 2, axis=-1, keepdims=True)
        return (h - mu) / jnp.sqrt(var + eps) * w + b

    def rotate(u):
        return jnp.concatenate([-u[..., D // 2:], u[..., :D // 2]], axis=-1)

    h = ln(x, params["ln1_w"], params["ln1_b"])
    qkv = h @ params["wattn"] + params["battn"]
    q, k, v = jnp.split(qkv, 3, axis=-1)
    q = q.reshape(B, T, n_head, D).transpose(0, 2, 1, 3)
    k = k.reshape(B, T, n_head, D).transpose(0, 2, 1, 3)
    v = v.reshape(B, T, n_head, D).transpose(0, 2, 1, 3)
    c, s = cos[None, None], sin[None, None]
    q = q * c + rotate(q) * s
    k = k * c + rotate(k) * s
    att = q @ jnp.swapaxes(k, -1, -2) * (1.0 / math.sqrt(D))
    mask = jnp.tril(jnp.ones((T, T), bool))
    att = jnp.where(mask, att, -jnp.inf)
    att = jax.nn.softmax(att, axis=-1)
    y = (att @ v).transpose(0, 2, 1, 3).reshape(B, T, C)
    y = y @ params["wproj"] + params["bproj"]
    x1 = x + y
    h2 = ln(x1, params["ln2_w"], params["ln2_b"])
    m = h2 @ params["w1"] + params["b1"]
    m = _new_gelu(m)
    m = m @ params["w2"] + params["b2"]
    return x1 + m


if __name__ == "__main__":
    B, T, C, H = 4, 16, 128, 8          # batch, seq, n_embd, n_head  (head dim = 16)
    key = jax.random.PRNGKey(0)
    kx, kp = jax.random.split(key)

    x = jax.random.normal(kx, (B, T, C), jnp.float32)
    params = make_params(kp, C)
    cos, sin = make_rotary_tables(T, C, H)

    out = rotary_block(x, params, cos, sin, n_head=H, block_b=2)
    jax.block_until_ready(out)
    assert out.shape == (B, T, C)

    ref = rotary_block_reference(x, params, cos, sin, n_head=H)
    err = float(jnp.max(jnp.abs(out - ref)))
    assert err < 3e-2, f"kernel/reference mismatch: max abs err = {err}"
    print("KERNEL_OK")
</pallas_src>

<mosaic_0001>
module attributes {stable_mosaic.version = 11 : i64} {
  func.func @rotary_block_kernel(%arg0: i32, %arg1: memref<2x16x128xf32, #tpu.memory_space<vmem>>, %arg2: memref<32x128xf32, #tpu.memory_space<vmem>>, %arg3: memref<32x128xf32, #tpu.memory_space<vmem>>, %arg4: memref<32x128xf32, #tpu.memory_space<vmem>>, %arg5: memref<1x128xf32, #tpu.memory_space<vmem>>, %arg6: memref<1x128xf32, #tpu.memory_space<vmem>>, %arg7: memref<128x384xbf16, #tpu.memory_space<vmem>>, %arg8: memref<1x384xf32, #tpu.memory_space<vmem>>, %arg9: memref<128x128xbf16, #tpu.memory_space<vmem>>, %arg10: memref<1x128xf32, #tpu.memory_space<vmem>>, %arg11: memref<1x128xf32, #tpu.memory_space<vmem>>, %arg12: memref<1x128xf32, #tpu.memory_space<vmem>>, %arg13: memref<128x512xbf16, #tpu.memory_space<vmem>>, %arg14: memref<1x512xf32, #tpu.memory_space<vmem>>, %arg15: memref<512x128xbf16, #tpu.memory_space<vmem>>, %arg16: memref<1x128xf32, #tpu.memory_space<vmem>>, %arg17: memref<2x16x128xf32, #tpu.memory_space<vmem>>) attributes {dimension_semantics = [#tpu.dimension_semantics<parallel>], iteration_bounds = array<i64: 2>, scalar_prefetch = 0 : i64, scratch_operands = 0 : i64, tpu.core_type = #tpu.core_type<tc>, window_params = [{transform_indices = @transform_0, window_bounds = array<i64: 2, 16, 128>}, {pipeline_mode = #tpu.pipeline_mode<synchronous>, transform_indices = @transform_1, window_bounds = array<i64: 32, 128>}, {pipeline_mode = #tpu.pipeline_mode<synchronous>, transform_indices = @transform_2, window_bounds = array<i64: 32, 128>}, {pipeline_mode = #tpu.pipeline_mode<synchronous>, transform_indices = @transform_3, window_bounds = array<i64: 32, 128>}, {pipeline_mode = #tpu.pipeline_mode<synchronous>, transform_indices = @transform_4, window_bounds = array<i64: 1, 128>}, {pipeline_mode = #tpu.pipeline_mode<synchronous>, transform_indices = @transform_5, window_bounds = array<i64: 1, 128>}, {pipeline_mode = #tpu.pipeline_mode<synchronous>, transform_indices = @transform_6, window_bounds = array<i64: 128, 384>}, {pipeline_mode = #tpu.pipeline_mode<synchronous>, transform_indices = @transform_7, window_bounds = array<i64: 1, 384>}, {pipeline_mode = #tpu.pipeline_mode<synchronous>, transform_indices = @transform_8, window_bounds = array<i64: 128, 128>}, {pipeline_mode = #tpu.pipeline_mode<synchronous>, transform_indices = @transform_9, window_bounds = array<i64: 1, 128>}, {pipeline_mode = #tpu.pipeline_mode<synchronous>, transform_indices = @transform_10, window_bounds = array<i64: 1, 128>}, {pipeline_mode = #tpu.pipeline_mode<synchronous>, transform_indices = @transform_11, window_bounds = array<i64: 1, 128>}, {pipeline_mode = #tpu.pipeline_mode<synchronous>, transform_indices = @transform_12, window_bounds = array<i64: 128, 512>}, {pipeline_mode = #tpu.pipeline_mode<synchronous>, transform_indices = @transform_13, window_bounds = array<i64: 1, 512>}, {pipeline_mode = #tpu.pipeline_mode<synchronous>, transform_indices = @transform_14, window_bounds = array<i64: 512, 128>}, {pipeline_mode = #tpu.pipeline_mode<synchronous>, transform_indices = @transform_15, window_bounds = array<i64: 1, 128>}, {transform_indices = @transform_16, window_bounds = array<i64: 2, 16, 128>}]} {
    %c0 = arith.constant 0 : index
    %c0_0 = arith.constant 0 : index
    %c0_1 = arith.constant 0 : index
    %0 = vector.load %arg1[%c0, %c0_0, %c0_1] : memref<2x16x128xf32, #tpu.memory_space<vmem>>, vector<2x16x128xf32>
    %1 = vector.shape_cast %0 : vector<2x16x128xf32> to vector<32x128xf32>
    %c0_2 = arith.constant 0 : index
    %c0_3 = arith.constant 0 : index
    %2 = vector.load %arg2[%c0_2, %c0_3] : memref<32x128xf32, #tpu.memory_space<vmem>>, vector<32x128xf32>
    %c0_4 = arith.constant 0 : index
    %c0_5 = arith.constant 0 : index
    %3 = vector.load %arg3[%c0_4, %c0_5] : memref<32x128xf32, #tpu.memory_space<vmem>>, vector<32x128xf32>
    %c0_6 = arith.constant 0 : index
    %c0_7 = arith.constant 0 : index
    %4 = vector.load %arg4[%c0_6, %c0_7] : memref<32x128xf32, #tpu.memory_space<vmem>>, vector<32x128xf32>
    %c0_8 = arith.constant 0 : index
    %c0_9 = arith.constant 0 : index
    %5 = vector.load %arg5[%c0_8, %c0_9] : memref<1x128xf32, #tpu.memory_space<vmem>>, vector<1x128xf32>
    %c0_10 = arith.constant 0 : index
    %c0_11 = arith.constant 0 : index
    %6 = vector.load %arg6[%c0_10, %c0_11] : memref<1x128xf32, #tpu.memory_space<vmem>>, vector<1x128xf32>
    %cst = arith.constant dense<0.000000e+00> : vector<32xf32>
    %7 = vector.multi_reduction <add>, %1, %cst [1] : vector<32x128xf32> to vector<32xf32>
    %8 = vector.shape_cast %7 : vector<32xf32> to vector<32x1xf32>
    %cst_12 = arith.constant 1.280000e+02 : f32
    %9 = vector.broadcast %cst_12 : f32 to vector<32x1xf32>
    %10 = arith.divf %8, %9 : vector<32x1xf32>
    %11 = vector.broadcast %10 : vector<32x1xf32> to vector<32x128xf32>
    %12 = arith.subf %1, %11 : vector<32x128xf32>
    %13 = arith.mulf %12, %12 : vector<32x128xf32>
    %cst_13 = arith.constant dense<0.000000e+00> : vector<32xf32>
    %14 = vector.multi_reduction <add>, %13, %cst_13 [1] : vector<32x128xf32> to vector<32xf32>
    %15 = vector.shape_cast %14 : vector<32xf32> to vector<32x1xf32>
    %cst_14 = arith.constant 1.280000e+02 : f32
    %16 = vector.broadcast %cst_14 : f32 to vector<32x1xf32>
    %17 = arith.divf %15, %16 : vector<32x1xf32>
    %18 = vector.broadcast %10 : vector<32x1xf32> to vector<32x128xf32>
    %19 = arith.subf %1, %18 : vector<32x128xf32>
    %cst_15 = arith.constant 9.99999974E-6 : f32
    %20 = vector.broadcast %cst_15 : f32 to vector<32x1xf32>
    %21 = arith.addf %17, %20 : vector<32x1xf32>
    %22 = math.rsqrt %21 : vector<32x1xf32>
    %23 = vector.broadcast %22 : vector<32x1xf32> to vector<32x128xf32>
    %24 = arith.mulf %19, %23 : vector<32x128xf32>
    %25 = vector.broadcast %5 : vector<1x128xf32> to vector<32x128xf32>
    %26 = arith.mulf %24, %25 : vector<32x128xf32>
    %27 = vector.broadcast %6 : vector<1x128xf32> to vector<32x128xf32>
    %28 = arith.addf %26, %27 : vector<32x128xf32>
    %29 = arith.truncf %28 : vector<32x128xf32> to vector<32x128xbf16>
    %c0_16 = arith.constant 0 : index
    %c0_17 = arith.constant 0 : index
    %30 = vector.load %arg7[%c0_16, %c0_17] : memref<128x384xbf16, #tpu.memory_space<vmem>>, vector<128x384xbf16>
    %cst_18 = arith.constant dense<0.000000e+00> : vector<32x384xf32>
    %31 = tpu.matmul %29, %30, %cst_18 {dimension_numbers = #tpu.dot_dimension_numbers<[1], [0], [0], [1], [0, 0, 1, 1], [], []>} : vector<32x128xbf16>, vector<128x384xbf16>, vector<32x384xf32> -> vector<32x384xf32>
    %c0_19 = arith.constant 0 : index
    %c0_20 = arith.constant 0 : index
    %32 = vector.load %arg8[%c0_19, %c0_20] : memref<1x384xf32, #tpu.memory_space<vmem>>, vector<1x384xf32>
    %33 = vector.broadcast %32 : vector<1x384xf32> to vector<32x384xf32>
    %34 = arith.addf %31, %33 : vector<32x384xf32>
    %35 = vector.extract_strided_slice %34 {offsets = [0, 0], sizes = [32, 128], strides = [1, 1]} : vector<32x384xf32> to vector<32x128xf32>
    %36 = vector.extract_strided_slice %34 {offsets = [0, 128], sizes = [32, 128], strides = [1, 1]} : vector<32x384xf32> to vector<32x128xf32>
    %37 = vector.extract_strided_slice %34 {offsets = [0, 256], sizes = [32, 128], strides = [1, 1]} : vector<32x384xf32> to vector<32x128xf32>
    %c120_i32 = arith.constant 120 : i32
    %38 = tpu.dynamic_rotate %35 by %c120_i32 dim 1 : vector<32x128xf32>, i32 -> vector<32x128xf32>
    %c8_i32 = arith.constant 8 : i32
    %39 = tpu.dynamic_rotate %35 by %c8_i32 dim 1 : vector<32x128xf32>, i32 -> vector<32x128xf32>
    %40 = arith.mulf %35, %2 : vector<32x128xf32>
    %41 = arith.mulf %38, %3 : vector<32x128xf32>
    %42 = arith.addf %40, %41 : vector<32x128xf32>
    %43 = arith.mulf %39, %4 : vector<32x128xf32>
    %44 = arith.addf %42, %43 : vector<32x128xf32>
    %45 = vector.shape_cast %44 : vector<32x128xf32> to vector<2x16x128xf32>
    %c120_i32_21 = arith.constant 120 : i32
    %46 = tpu.dynamic_rotate %36 by %c120_i32_21 dim 1 : vector<32x128xf32>, i32 -> vector<32x128xf32>
    %c8_i32_22 = arith.constant 8 : i32
    %47 = tpu.dynamic_rotate %36 by %c8_i32_22 dim 1 : vector<32x128xf32>, i32 -> vector<32x128xf32>
    %48 = arith.mulf %36, %2 : vector<32x128xf32>
    %49 = arith.mulf %46, %3 : vector<32x128xf32>
    %50 = arith.addf %48, %49 : vector<32x128xf32>
    %51 = arith.mulf %47, %4 : vector<32x128xf32>
    %52 = arith.addf %50, %51 : vector<32x128xf32>
    %53 = vector.shape_cast %52 : vector<32x128xf32> to vector<2x16x128xf32>
    %54 = vector.shape_cast %37 : vector<32x128xf32> to vector<2x16x128xf32>
    %55 = tpu.iota {dimensions = array<i32: 0>} : vector<16x16xi32>
    %56 = tpu.iota {dimensions = array<i32: 1>} : vector<16x16xi32>
    %57 = arith.cmpi sge, %55, %56 : vector<16x16xi32>
    %58 = vector.extract_strided_slice %45 {offsets = [0, 0, 0], sizes = [2, 16, 16], strides = [1, 1, 1]} : vector<2x16x128xf32> to vector<2x16x16xf32>
    %59 = arith.truncf %58 : vector<2x16x16xf32> to vector<2x16x16xbf16>
    %60 = vector.extract_strided_slice %53 {offsets = [0, 0, 0], sizes = [2, 16, 16], strides = [1, 1, 1]} : vector<2x16x128xf32> to vector<2x16x16xf32>
    %61 = arith.truncf %60 : vector<2x16x16xf32> to vector<2x16x16xbf16>
    %62 = vector.extract_strided_slice %54 {offsets = [0, 0, 0], sizes = [2, 16, 16], strides = [1, 1, 1]} : vector<2x16x128xf32> to vector<2x16x16xf32>
    %63 = arith.truncf %62 : vector<2x16x16xf32> to vector<2x16x16xbf16>
    "tpu.trace_start"() <{level = 10 : i32, message = "btd,bsd->bts"}> : () -> ()
    %cst_23 = arith.constant dense<0.000000e+00> : vector<2x16x16xf32>
    %64 = tpu.matmul %59, %61, %cst_23 {dimension_numbers = #tpu.dot_dimension_numbers<[2], [2], [1], [1], [0, 0, 0, 1, 1, 1], [0], [0]>} : vector<2x16x16xbf16>, vector<2x16x16xbf16>, vector<2x16x16xf32> -> vector<2x16x16xf32>
    "tpu.trace_stop"() : () -> ()
    %cst_24 = arith.constant 2.500000e-01 : f32
    %65 = vector.broadcast %cst_24 : f32 to vector<2x16x16xf32>
    %66 = arith.mulf %64, %65 : vector<2x16x16xf32>
    %cst_25 = arith.constant -1.000000e+30 : f32
    %67 = vector.shape_cast %57 : vector<16x16xi1> to vector<1x16x16xi1>
    %68 = vector.broadcast %67 : vector<1x16x16xi1> to vector<2x16x16xi1>
    %69 = vector.broadcast %cst_25 : f32 to vector<2x16x16xf32>
    %70 = arith.select %68, %66, %69 : vector<2x16x16xi1>, vector<2x16x16xf32>
    %cst_26 = arith.constant dense<0xFF800000> : vector<2x16xf32>
    %71 = vector.multi_reduction <maximumf>, %70, %cst_26 [2] : vector<2x16x16xf32> to vector<2x16xf32>
    %72 = vector.shape_cast %71 : vector<2x16xf32> to vector<2x16x1xf32>
    %73 = vector.broadcast %72 : vector<2x16x1xf32> to vector<2x16x16xf32>
    %74 = arith.subf %70, %73 : vector<2x16x16xf32>
    %75 = math.exp %74 : vector<2x16x16xf32>
    %cst_27 = arith.constant dense<0.000000e+00> : vector<2x16xf32>
    %76 = vector.multi_reduction <add>, %75, %cst_27 [2] : vector<2x16x16xf32> to vector<2x16xf32>
    %77 = vector.shape_cast %76 : vector<2x16xf32> to vector<2x16x1xf32>
    %78 = tpu.reciprocal %77 {approx = true} : vector<2x16x1xf32> -> vector<2x16x1xf32>
    %79 = vector.broadcast %78 : vector<2x16x1xf32> to vector<2x16x16xf32>
    %80 = arith.mulf %75, %79 : vector<2x16x16xf32>
    %81 = arith.truncf %80 : vector<2x16x16xf32> to vector<2x16x16xbf16>
    "tpu.trace_start"() <{level = 10 : i32, message = "bts,bsd->btd"}> : () -> ()
    %cst_28 = arith.constant dense<0.000000e+00> : vector<2x16x16xf32>
    %82 = tpu.matmul %81, %63, %cst_28 {dimension_numbers = #tpu.dot_dimension_numbers<[2], [1], [1], [2], [0, 0, 0, 1, 1, 2], [0], [0]>} : vector<2x16x16xbf16>, vector<2x16x16xbf16>, vector<2x16x16xf32> -> vector<2x16x16xf32>
    "tpu.trace_stop"() : () -> ()
    %83 = vector.extract_strided_slice %45 {offsets = [0, 0, 16], sizes = [2, 16, 16], strides = [1, 1, 1]} : vector<2x16x128xf32> to vector<2x16x16xf32>
    %84 = arith.truncf %83 : vector<2x16x16xf32> to vector<2x16x16xbf16>
    %85 = vector.extract_strided_slice %53 {offsets = [0, 0, 16], sizes = [2, 16, 16], strides = [1, 1, 1]} : vector<2x16x128xf32> to vector<2x16x16xf32>
    %86 = arith.truncf %85 : vector<2x16x16xf32> to vector<2x16x16xbf16>
    %87 = vector.extract_strided_slice %54 {offsets = [0, 0, 16], sizes = [2, 16, 16], strides = [1, 1, 1]} : vector<2x16x128xf32> to vector<2x16x16xf32>
    %88 = arith.truncf %87 : vector<2x16x16xf32> to vector<2x16x16xbf16>
    "tpu.trace_start"() <{level = 10 : i32, message = "btd,bsd->bts"}> : () -> ()
    %cst_29 = arith.constant dense<0.000000e+00> : vector<2x16x16xf32>
    %89 = tpu.matmul %84, %86, %cst_29 {dimension_numbers = #tpu.dot_dimension_numbers<[2], [2], [1], [1], [0, 0, 0, 1, 1, 1], [0], [0]>} : vector<2x16x16xbf16>, vector<2x16x16xbf16>, vector<2x16x16xf32> -> vector<2x16x16xf32>
    "tpu.trace_stop"() : () -> ()
    %cst_30 = arith.constant 2.500000e-01 : f32
    %90 = vector.broadcast %cst_30 : f32 to vector<2x16x16xf32>
    %91 = arith.mulf %89, %90 : vector<2x16x16xf32>
    %cst_31 = arith.constant -1.000000e+30 : f32
    %92 = vector.shape_cast %57 : vector<16x16xi1> to vector<1x16x16xi1>
    %93 = vector.broadcast %92 : vector<1x16x16xi1> to vector<2x16x16xi1>
    %94 = vector.broadcast %cst_31 : f32 to vector<2x16x16xf32>
    %95 = arith.select %93, %91, %94 : vector<2x16x16xi1>, vector<2x16x16xf32>
    %cst_32 = arith.constant dense<0xFF800000> : vector<2x16xf32>
    %96 = vector.multi_reduction <maximumf>, %95, %cst_32 [2] : vector<2x16x16xf32> to vector<2x16xf32>
    %97 = vector.shape_cast %96 : vector<2x16xf32> to vector<2x16x1xf32>
    %98 = vector.broadcast %97 : vector<2x16x1xf32> to vector<2x16x16xf32>
    %99 = arith.subf %95, %98 : vector<2x16x16xf32>
    %100 = math.exp %99 : vector<2x16x16xf32>
    %cst_33 = arith.constant dense<0.000000e+00> : vector<2x16xf32>
    %101 = vector.multi_reduction <add>, %100, %cst_33 [2] : vector<2x16x16xf32> to vector<2x16xf32>
    %102 = vector.shape_cast %101 : vector<2x16xf32> to vector<2x16x1xf32>
    %103 = tpu.reciprocal %102 {approx = true} : vector<2x16x1xf32> -> vector<2x16x1xf32>
    %104 = vector.broadcast %103 : vector<2x16x1xf32> to vector<2x16x16xf32>
    %105 = arith.mulf %100, %104 : vector<2x16x16xf32>
    %106 = arith.truncf %105 : vector<2x16x16xf32> to vector<2x16x16xbf16>
    "tpu.trace_start"() <{level = 10 : i32, message = "bts,bsd->btd"}> : () -> ()
    %cst_34 = arith.constant dense<0.000000e+00> : vector<2x16x16xf32>
    %107 = tpu.matmul %106, %88, %cst_34 {dimension_numbers = #tpu.dot_dimension_numbers<[2], [1], [1], [2], [0, 0, 0, 1, 1, 2], [0], [0]>} : vector<2x16x16xbf16>, vector<2x16x16xbf16>, vector<2x16x16xf32> -> vector<2x16x16xf32>
    "tpu.trace_stop"() : () -> ()
    %108 = vector.extract_strided_slice %45 {offsets = [0, 0, 32], sizes = [2, 16, 16], strides = [1, 1, 1]} : vector<2x16x128xf32> to vector<2x16x16xf32>
    %109 = arith.truncf %108 : vector<2x16x16xf32> to vector<2x16x16xbf16>
    %110 = vector.extract_strided_slice %53 {offsets = [0, 0, 32], sizes = [2, 16, 16], strides = [1, 1, 1]} : vector<2x16x128xf32> to vector<2x16x16xf32>
    %111 = arith.truncf %110 : vector<2x16x16xf32> to vector<2x16x16xbf16>
    %112 = vector.extract_strided_slice %54 {offsets = [0, 0, 32], sizes = [2, 16, 16], strides = [1, 1, 1]} : vector<2x16x128xf32> to vector<2x16x16xf32>
    %113 = arith.truncf %112 : vector<2x16x16xf32> to vector<2x16x16xbf16>
    "tpu.trace_start"() <{level = 10 : i32, message = "btd,bsd->bts"}> : () -> ()
    %cst_35 = arith.constant dense<0.000000e+00> : vector<2x16x16xf32>
    %114 = tpu.matmul %109, %111, %cst_35 {dimension_numbers = #tpu.dot_dimension_numbers<[2], [2], [1], [1], [0, 0, 0, 1, 1, 1], [0], [0]>} : vector<2x16x16xbf16>, vector<2x16x16xbf16>, vector<2x16x16xf32> -> vector<2x16x16xf32>
    "tpu.trace_stop"() : () -> ()
    %cst_36 = arith.constant 2.500000e-01 : f32
    %115 = vector.broadcast %cst_36 : f32 to vector<2x16x16xf32>
    %116 = arith.mulf %114, %115 : vector<2x16x16xf32>
    %cst_37 = arith.constant -1.000000e+30 : f32
    %117 = vector.shape_cast %57 : vector<16x16xi1> to vector<1x16x16xi1>
    %118 = vector.broadcast %117 : vector<1x16x16xi1> to vector<2x16x16xi1>
    %119 = vector.broadcast %cst_37 : f32 to vector<2x16x16xf32>
    %120 = arith.select %118, %116, %119 : vector<2x16x16xi1>, vector<2x16x16xf32>
    %cst_38 = arith.constant dense<0xFF800000> : vector<2x16xf32>
    %121 = vector.multi_reduction <maximumf>, %120, %cst_38 [2] : vector<2x16x16xf32> to vector<2x16xf32>
    %122 = vector.shape_cast %121 : vector<2x16xf32> to vector<2x16x1xf32>
    %123 = vector.broadcast %122 : vector<2x16x1xf32> to vector<2x16x16xf32>
    %124 = arith.subf %120, %123 : vector<2x16x16xf32>
    %125 = math.exp %124 : vector<2x16x16xf32>
    %cst_39 = arith.constant dense<0.000000e+00> : vector<2x16xf32>
    %126 = vector.multi_reduction <add>, %125, %cst_39 [2] : vector<2x16x16xf32> to vector<2x16xf32>
    %127 = vector.shape_cast %126 : vector<2x16xf32> to vector<2x16x1xf32>
    %128 = tpu.reciprocal %127 {approx = true} : vector<2x16x1xf32> -> vector<2x16x1xf32>
    %129 = vector.broadcast %128 : vector<2x16x1xf32> to vector<2x16x16xf32>
    %130 = arith.mulf %125, %129 : vector<2x16x16xf32>
    %131 = arith.truncf %130 : vector<2x16x16xf32> to vector<2x16x16xbf16>
    "tpu.trace_start"() <{level = 10 : i32, message = "bts,bsd->btd"}> : () -> ()
    %cst_40 = arith.constant dense<0.000000e+00> : vector<2x16x16xf32>
    %132 = tpu.matmul %131, %113, %cst_40 {dimension_numbers = #tpu.dot_dimension_numbers<[2], [1], [1], [2], [0, 0, 0, 1, 1, 2], [0], [0]>} : vector<2x16x16xbf16>, vector<2x16x16xbf16>, vector<2x16x16xf32> -> vector<2x16x16xf32>
    "tpu.trace_stop"() : () -> ()
    %133 = vector.extract_strided_slice %45 {offsets = [0, 0, 48], sizes = [2, 16, 16], strides = [1, 1, 1]} : vector<2x16x128xf32> to vector<2x16x16xf32>
    %134 = arith.truncf %133 : vector<2x16x16xf32> to vector<2x16x16xbf16>
    %135 = vector.extract_strided_slice %53 {offsets = [0, 0, 48], sizes = [2, 16, 16], strides = [1, 1, 1]} : vector<2x16x128xf32> to vector<2x16x16xf32>
    %136 = arith.truncf %135 : vector<2x16x16xf32> to vector<2x16x16xbf16>
    %137 = vector.extract_strided_slice %54 {offsets = [0, 0, 48], sizes = [2, 16, 16], strides = [1, 1, 1]} : vector<2x16x128xf32> to vector<2x16x16xf32>
    %138 = arith.truncf %137 : vector<2x16x16xf32> to vector<2x16x16xbf16>
    "tpu.trace_start"() <{level = 10 : i32, message = "btd,bsd->bts"}> : () -> ()
    %cst_41 = arith.constant dense<0.000000e+00> : vector<2x16x16xf32>
    %139 = tpu.matmul %134, %136, %cst_41 {dimension_numbers = #tpu.dot_dimension_numbers<[2], [2], [1], [1], [0, 0, 0, 1, 1, 1], [0], [0]>} : vector<2x16x16xbf16>, vector<2x16x16xbf16>, vector<2x16x16xf32> -> vector<2x16x16xf32>
    "tpu.trace_stop"() : () -> ()
    %cst_42 = arith.constant 2.500000e-01 : f32
    %140 = vector.broadcast %cst_42 : f32 to vector<2x16x16xf32>
    %141 = arith.mulf %139, %140 : vector<2x16x16xf32>
    %cst_43 = arith.constant -1.000000e+30 : f32
    %142 = vector.shape_cast %57 : vector<16x16xi1> to vector<1x16x16xi1>
    %143 = vector.broadcast %142 : vector<1x16x16xi1> to vector<2x16x16xi1>
    %144 = vector.broadcast %cst_43 : f32 to vector<2x16x16xf32>
    %145 = arith.select %143, %141, %144 : vector<2x16x16xi1>, vector<2x16x16xf32>
    %cst_44 = arith.constant dense<0xFF800000> : vector<2x16xf32>
    %146 = vector.multi_reduction <maximumf>, %145, %cst_44 [2] : vector<2x16x16xf32> to vector<2x16xf32>
    %147 = vector.shape_cast %146 : vector<2x16xf32> to vector<2x16x1xf32>
    %148 = vector.broadcast %147 : vector<2x16x1xf32> to vector<2x16x16xf32>
    %149 = arith.subf %145, %148 : vector<2x16x16xf32>
    %150 = math.exp %149 : vector<2x16x16xf32>
    %cst_45 = arith.constant dense<0.000000e+00> : vector<2x16xf32>
    %151 = vector.multi_reduction <add>, %150, %cst_45 [2] : vector<2x16x16xf32> to vector<2x16xf32>
    %152 = vector.shape_cast %151 : vector<2x16xf32> to vector<2x16x1xf32>
    %153 = tpu.reciprocal %152 {approx = true} : vector<2x16x1xf32> -> vector<2x16x1xf32>
    %154 = vector.broadcast %153 : vector<2x16x1xf32> to vector<2x16x16xf32>
    %155 = arith.mulf %150, %154 : vector<2x16x16xf32>
    %156 = arith.truncf %155 : vector<2x16x16xf32> to vector<2x16x16xbf16>
    "tpu.trace_start"() <{level = 10 : i32, message = "bts,bsd->btd"}> : () -> ()
    %cst_46 = arith.constant dense<0.000000e+00> : vector<2x16x16xf32>
    %157 = tpu.matmul %156, %138, %cst_46 {dimension_numbers = #tpu.dot_dimension_numbers<[2], [1], [1], [2], [0, 0, 0, 1, 1, 2], [0], [0]>} : vector<2x16x16xbf16>, vector<2x16x16xbf16>, vector<2x16x16xf32> -> vector<2x16x16xf32>
    "tpu.trace_stop"() : () -> ()
    %158 = vector.extract_strided_slice %45 {offsets = [0, 0, 64], sizes = [2, 16, 16], strides = [1, 1, 1]} : vector<2x16x128xf32> to vector<2x16x16xf32>
    %159 = arith.truncf %158 : vector<2x16x16xf32> to vector<2x16x16xbf16>
    %160 = vector.extract_strided_slice %53 {offsets = [0, 0, 64], sizes = [2, 16, 16], strides = [1, 1, 1]} : vector<2x16x128xf32> to vector<2x16x16xf32>
    %161 = arith.truncf %160 : vector<2x16x16xf32> to vector<2x16x16xbf16>
    %162 = vector.extract_strided_slice %54 {offsets = [0, 0, 64], sizes = [2, 16, 16], strides = [1, 1, 1]} : vector<2x16x128xf32> to vector<2x16x16xf32>
    %163 = arith.truncf %162 : vector<2x16x16xf32> to vector<2x16x16xbf16>
    "tpu.trace_start"() <{level = 10 : i32, message = "btd,bsd->bts"}> : () -> ()
    %cst_47 = arith.constant dense<0.000000e+00> : vector<2x16x16xf32>
    %164 = tpu.matmul %159, %161, %cst_47 {dimension_numbers = #tpu.dot_dimension_numbers<[2], [2], [1], [1], [0, 0, 0, 1, 1, 1], [0], [0]>} : vector<2x16x16xbf16>, vector<2x16x16xbf16>, vector<2x16x16xf32> -> vector<2x16x16xf32>
    "tpu.trace_stop"() : () -> ()
    %cst_48 = arith.constant 2.500000e-01 : f32
    %165 = vector.broadcast %cst_48 : f32 to vector<2x16x16xf32>
    %166 = arith.mulf %164, %165 : vector<2x16x16xf32>
    %cst_49 = arith.constant -1.000000e+30 : f32
    %167 = vector.shape_cast %57 : vector<16x16xi1> to vector<1x16x16xi1>
    %168 = vector.broadcast %167 : vector<1x16x16xi1> to vector<2x16x16xi1>
    %169 = vector.broadcast %cst_49 : f32 to vector<2x16x16xf32>
    %170 = arith.select %168, %166, %169 : vector<2x16x16xi1>, vector<2x16x16xf32>
    %cst_50 = arith.constant dense<0xFF800000> : vector<2x16xf32>
    %171 = vector.multi_reduction <maximumf>, %170, %cst_50 [2] : vector<2x16x16xf32> to vector<2x16xf32>
    %172 = vector.shape_cast %171 : vector<2x16xf32> to vector<2x16x1xf32>
    %173 = vector.broadcast %172 : vector<2x16x1xf32> to vector<2x16x16xf32>
    %174 = arith.subf %170, %173 : vector<2x16x16xf32>
    %175 = math.exp %174 : vector<2x16x16xf32>
    %cst_51 = arith.constant dense<0.000000e+00> : vector<2x16xf32>
    %176 = vector.multi_reduction <add>, %175, %cst_51 [2] : vector<2x16x16xf32> to vector<2x16xf32>
    %177 = vector.shape_cast %176 : vector<2x16xf32> to vector<2x16x1xf32>
    %178 = tpu.reciprocal %177 {approx = true} : vector<2x16x1xf32> -> vector<2x16x1xf32>
    %179 = vector.broadcast %178 : vector<2x16x1xf32> to vector<2x16x16xf32>
    %180 = arith.mulf %175, %179 : vector<2x16x16xf32>
    %181 = arith.truncf %180 : vector<2x16x16xf32> to vector<2x16x16xbf16>
    "tpu.trace_start"() <{level = 10 : i32, message = "bts,bsd->btd"}> : () -> ()
    %cst_52 = arith.constant dense<0.000000e+00> : vector<2x16x16xf32>
    %182 = tpu.matmul %181, %163, %cst_52 {dimension_numbers = #tpu.dot_dimension_numbers<[2], [1], [1], [2], [0, 0, 0, 1, 1, 2], [0], [0]>} : vector<2x16x16xbf16>, vector<2x16x16xbf16>, vector<2x16x16xf32> -> vector<2x16x16xf32>
    "tpu.trace_stop"() : () -> ()
    %183 = vector.extract_strided_slice %45 {offsets = [0, 0, 80], sizes = [2, 16, 16], strides = [1, 1, 1]} : vector<2x16x128xf32> to vector<2x16x16xf32>
    %184 = arith.truncf %183 : vector<2x16x16xf32> to vector<2x16x16xbf16>
    %185 = vector.extract_strided_slice %53 {offsets = [0, 0, 80], sizes = [2, 16, 16], strides = [1, 1, 1]} : vector<2x16x128xf32> to vector<2x16x16xf32>
    %186 = arith.truncf %185 : vector<2x16x16xf32> to vector<2x16x16xbf16>
    %187 = vector.extract_strided_slice %54 {offsets = [0, 0, 80], sizes = [2, 16, 16], strides = [1, 1, 1]} : vector<2x16x128xf32> to vector<2x16x16xf32>
    %188 = arith.truncf %187 : vector<2x16x16xf32> to vector<2x16x16xbf16>
    "tpu.trace_start"() <{level = 10 : i32, message = "btd,bsd->bts"}> : () -> ()
    %cst_53 = arith.constant dense<0.000000e+00> : vector<2x16x16xf32>
    %189 = tpu.matmul %184, %186, %cst_53 {dimension_numbers = #tpu.dot_dimension_numbers<[2], [2], [1], [1], [0, 0, 0, 1, 1, 1], [0], [0]>} : vector<2x16x16xbf16>, vector<2x16x16xbf16>, vector<2x16x16xf32> -> vector<2x16x16xf32>
    "tpu.trace_stop"() : () -> ()
    %cst_54 = arith.constant 2.500000e-01 : f32
    %190 = vector.broadcast %cst_54 : f32 to vector<2x16x16xf32>
    %191 = arith.mulf %189, %190 : vector<2x16x16xf32>
    %cst_55 = arith.constant -1.000000e+30 : f32
    %192 = vector.shape_cast %57 : vector<16x16xi1> to vector<1x16x16xi1>
    %193 = vector.broadcast %192 : vector<1x16x16xi1> to vector<2x16x16xi1>
    %194 = vector.broadcast %cst_55 : f32 to vector<2x16x16xf32>
    %195 = arith.select %193, %191, %194 : vector<2x16x16xi1>, vector<2x16x16xf32>
    %cst_56 = arith.constant dense<0xFF800000> : vector<2x16xf32>
    %196 = vector.multi_reduction <maximumf>, %195, %cst_56 [2] : vector<2x16x16xf32> to vector<2x16xf32>
    %197 = vector.shape_cast %196 : vector<2x16xf32> to vector<2x16x1xf32>
    %198 = vector.broadcast %197 : vector<2x16x1xf32> to vector<2x16x16xf32>
    %199 = arith.subf %195, %198 : vector<2x16x16xf32>
    %200 = math.exp %199 : vector<2x16x16xf32>
    %cst_57 = arith.constant dense<0.000000e+00> : vector<2x16xf32>
    %201 = vector.multi_reduction <add>, %200, %cst_57 [2] : vector<2x16x16xf32> to vector<2x16xf32>
    %202 = vector.shape_cast %201 : vector<2x16xf32> to vector<2x16x1xf32>
    %203 = tpu.reciprocal %202 {approx = true} : vector<2x16x1xf32> -> vector<2x16x1xf32>
    %204 = vector.broadcast %203 : vector<2x16x1xf32> to vector<2x16x16xf32>
    %205 = arith.mulf %200, %204 : vector<2x16x16xf32>
    %206 = arith.truncf %205 : vector<2x16x16xf32> to vector<2x16x16xbf16>
    "tpu.trace_start"() <{level = 10 : i32, message = "bts,bsd->btd"}> : () -> ()
    %cst_58 = arith.constant dense<0.000000e+00> : vector<2x16x16xf32>
    %207 = tpu.matmul %206, %188, %cst_58 {dimension_numbers = #tpu.dot_dimension_numbers<[2], [1], [1], [2], [0, 0, 0, 1, 1, 2], [0], [0]>} : vector<2x16x16xbf16>, vector<2x16x16xbf16>, vector<2x16x16xf32> -> vector<2x16x16xf32>
    "tpu.trace_stop"() : () -> ()
    %208 = vector.extract_strided_slice %45 {offsets = [0, 0, 96], sizes = [2, 16, 16], strides = [1, 1, 1]} : vector<2x16x128xf32> to vector<2x16x16xf32>
    %209 = arith.truncf %208 : vector<2x16x16xf32> to vector<2x16x16xbf16>
    %210 = vector.extract_strided_slice %53 {offsets = [0, 0, 96], sizes = [2, 16, 16], strides = [1, 1, 1]} : vector<2x16x128xf32> to vector<2x16x16xf32>
    %211 = arith.truncf %210 : vector<2x16x16xf32> to vector<2x16x16xbf16>
    %212 = vector.extract_strided_slice %54 {offsets = [0, 0, 96], sizes = [2, 16, 16], strides = [1, 1, 1]} : vector<2x16x128xf32> to vector<2x16x16xf32>
    %213 = arith.truncf %212 : vector<2x16x16xf32> to vector<2x16x16xbf16>
    "tpu.trace_start"() <{level = 10 : i32, message = "btd,bsd->bts"}> : () -> ()
    %cst_59 = arith.constant dense<0.000000e+00> : vector<2x16x16xf32>
    %214 = tpu.matmul %209, %211, %cst_59 {dimension_numbers = #tpu.dot_dimension_numbers<[2], [2], [1], [1], [0, 0, 0, 1, 1, 1], [0], [0]>} : vector<2x16x16xbf16>, vector<2x16x16xbf16>, vector<2x16x16xf32> -> vector<2x16x16xf32>
    "tpu.trace_stop"() : () -> ()
    %cst_60 = arith.constant 2.500000e-01 : f32
    %215 = vector.broadcast %cst_60 : f32 to vector<2x16x16xf32>
    %216 = arith.mulf %214, %215 : vector<2x16x16xf32>
    %cst_61 = arith.constant -1.000000e+30 : f32
    %217 = vector.shape_cast %57 : vector<16x16xi1> to vector<1x16x16xi1>
    %218 = vector.broadcast %217 : vector<1x16x16xi1> to vector<2x16x16xi1>
    %219 = vector.broadcast %cst_61 : f32 to vector<2x16x16xf32>
    %220 = arith.select %218, %216, %219 : vector<2x16x16xi1>, vector<2x16x16xf32>
    %cst_62 = arith.constant dense<0xFF800000> : vector<2x16xf32>
    %221 = vector.multi_reduction <maximumf>, %220, %cst_62 [2] : vector<2x16x16xf32> to vector<2x16xf32>
    %222 = vector.shape_cast %221 : vector<2x16xf32> to vector<2x16x1xf32>
    %223 = vector.broadcast %222 : vector<2x16x1xf32> to vector<2x16x16xf32>
    %224 = arith.subf %220, %223 : vector<2x16x16xf32>
    %225 = math.exp %224 : vector<2x16x16xf32>
    %cst_63 = arith.constant dense<0.000000e+00> : vector<2x16xf32>
    %226 = vector.multi_reduction <add>, %225, %cst_63 [2] : vector<2x16x16xf32> to vector<2x16xf32>
    %227 = vector.shape_cast %226 : vector<2x16xf32> to vector<2x16x1xf32>
    %228 = tpu.reciprocal %227 {approx = true} : vector<2x16x1xf32> -> vector<2x16x1xf32>
    %229 = vector.broadcast %228 : vector<2x16x1xf32> to vector<2x16x16xf32>
    %230 = arith.mulf %225, %229 : vector<2x16x16xf32>
    %231 = arith.truncf %230 : vector<2x16x16xf32> to vector<2x16x16xbf16>
    "tpu.trace_start"() <{level = 10 : i32, message = "bts,bsd->btd"}> : () -> ()
    %cst_64 = arith.constant dense<0.000000e+00> : vector<2x16x16xf32>
    %232 = tpu.matmul %231, %213, %cst_64 {dimension_numbers = #tpu.dot_dimension_numbers<[2], [1], [1], [2], [0, 0, 0, 1, 1, 2], [0], [0]>} : vector<2x16x16xbf16>, vector<2x16x16xbf16>, vector<2x16x16xf32> -> vector<2x16x16xf32>
    "tpu.trace_stop"() : () -> ()
    %233 = vector.extract_strided_slice %45 {offsets = [0, 0, 112], sizes = [2, 16, 16], strides = [1, 1, 1]} : vector<2x16x128xf32> to vector<2x16x16xf32>
    %234 = arith.truncf %233 : vector<2x16x16xf32> to vector<2x16x16xbf16>
    %235 = vector.extract_strided_slice %53 {offsets = [0, 0, 112], sizes = [2, 16, 16], strides = [1, 1, 1]} : vector<2x16x128xf32> to vector<2x16x16xf32>
    %236 = arith.truncf %235 : vector<2x16x16xf32> to vector<2x16x16xbf16>
    %237 = vector.extract_strided_slice %54 {offsets = [0, 0, 112], sizes = [2, 16, 16], strides = [1, 1, 1]} : vector<2x16x128xf32> to vector<2x16x16xf32>
    %238 = arith.truncf %237 : vector<2x16x16xf32> to vector<2x16x16xbf16>
    "tpu.trace_start"() <{level = 10 : i32, message = "btd,bsd->bts"}> : () -> ()
    %cst_65 = arith.constant dense<0.000000e+00> : vector<2x16x16xf32>
    %239 = tpu.matmul %234, %236, %cst_65 {dimension_numbers = #tpu.dot_dimension_numbers<[2], [2], [1], [1], [0, 0, 0, 1, 1, 1], [0], [0]>} : vector<2x16x16xbf16>, vector<2x16x16xbf16>, vector<2x16x16xf32> -> vector<2x16x16xf32>
    "tpu.trace_stop"() : () -> ()
    %cst_66 = arith.constant 2.500000e-01 : f32
    %240 = vector.broadcast %cst_66 : f32 to vector<2x16x16xf32>
    %241 = arith.mulf %239, %240 : vector<2x16x16xf32>
    %cst_67 = arith.constant -1.000000e+30 : f32
    %242 = vector.shape_cast %57 : vector<16x16xi1> to vector<1x16x16xi1>
    %243 = vector.broadcast %242 : vector<1x16x16xi1> to vector<2x16x16xi1>
    %244 = vector.broadcast %cst_67 : f32 to vector<2x16x16xf32>
    %245 = arith.select %243, %241, %244 : vector<2x16x16xi1>, vector<2x16x16xf32>
    %cst_68 = arith.constant dense<0xFF800000> : vector<2x16xf32>
    %246 = vector.multi_reduction <maximumf>, %245, %cst_68 [2] : vector<2x16x16xf32> to vector<2x16xf32>
    %247 = vector.shape_cast %246 : vector<2x16xf32> to vector<2x16x1xf32>
    %248 = vector.broadcast %247 : vector<2x16x1xf32> to vector<2x16x16xf32>
    %249 = arith.subf %245, %248 : vector<2x16x16xf32>
    %250 = math.exp %249 : vector<2x16x16xf32>
    %cst_69 = arith.constant dense<0.000000e+00> : vector<2x16xf32>
    %251 = vector.multi_reduction <add>, %250, %cst_69 [2] : vector<2x16x16xf32> to vector<2x16xf32>
    %252 = vector.shape_cast %251 : vector<2x16xf32> to vector<2x16x1xf32>
    %253 = tpu.reciprocal %252 {approx = true} : vector<2x16x1xf32> -> vector<2x16x1xf32>
    %254 = vector.broadcast %253 : vector<2x16x1xf32> to vector<2x16x16xf32>
    %255 = arith.mulf %250, %254 : vector<2x16x16xf32>
    %256 = arith.truncf %255 : vector<2x16x16xf32> to vector<2x16x16xbf16>
    "tpu.trace_start"() <{level = 10 : i32, message = "bts,bsd->btd"}> : () -> ()
    %cst_70 = arith.constant dense<0.000000e+00> : vector<2x16x16xf32>
    %257 = tpu.matmul %256, %238, %cst_70 {dimension_numbers = #tpu.dot_dimension_numbers<[2], [1], [1], [2], [0, 0, 0, 1, 1, 2], [0], [0]>} : vector<2x16x16xbf16>, vector<2x16x16xbf16>, vector<2x16x16xf32> -> vector<2x16x16xf32>
    "tpu.trace_stop"() : () -> ()
    %258 = tpu.concatenate %82, %107, %132, %157, %182, %207, %232, %257 in 2 : vector<2x16x16xf32>, vector<2x16x16xf32>, vector<2x16x16xf32>, vector<2x16x16xf32>, vector<2x16x16xf32>, vector<2x16x16xf32>, vector<2x16x16xf32>, vector<2x16x16xf32> -> vector<2x16x128xf32>
    %259 = vector.shape_cast %258 : vector<2x16x128xf32> to vector<32x128xf32>
    %260 = arith.truncf %259 : vector<32x128xf32> to vector<32x128xbf16>
    %c0_71 = arith.constant 0 : index
    %c0_72 = arith.constant 0 : index
    %261 = vector.load %arg9[%c0_71, %c0_72] : memref<128x128xbf16, #tpu.memory_space<vmem>>, vector<128x128xbf16>
    %cst_73 = arith.constant dense<0.000000e+00> : vector<32x128xf32>
    %262 = tpu.matmul %260, %261, %cst_73 {dimension_numbers = #tpu.dot_dimension_numbers<[1], [0], [0], [1], [0, 0, 1, 1], [], []>} : vector<32x128xbf16>, vector<128x128xbf16>, vector<32x128xf32> -> vector<32x128xf32>
    %c0_74 = arith.constant 0 : index
    %c0_75 = arith.constant 0 : index
    %263 = vector.load %arg10[%c0_74, %c0_75] : memref<1x128xf32, #tpu.memory_space<vmem>>, vector<1x128xf32>
    %264 = vector.broadcast %263 : vector<1x128xf32> to vector<32x128xf32>
    %265 = arith.addf %262, %264 : vector<32x128xf32>
    %266 = arith.addf %1, %265 : vector<32x128xf32>
    %c0_76 = arith.constant 0 : index
    %c0_77 = arith.constant 0 : index
    %267 = vector.load %arg11[%c0_76, %c0_77] : memref<1x128xf32, #tpu.memory_space<vmem>>, vector<1x128xf32>
    %c0_78 = arith.constant 0 : index
    %c0_79 = arith.constant 0 : index
    %268 = vector.load %arg12[%c0_78, %c0_79] : memref<1x128xf32, #tpu.memory_space<vmem>>, vector<1x128xf32>
    %cst_80 = arith.constant dense<0.000000e+00> : vector<32xf32>
    %269 = vector.multi_reduction <add>, %266, %cst_80 [1] : vector<32x128xf32> to vector<32xf32>
    %270 = vector.shape_cast %269 : vector<32xf32> to vector<32x1xf32>
    %cst_81 = arith.constant 1.280000e+02 : f32
    %271 = vector.broadcast %cst_81 : f32 to vector<32x1xf32>
    %272 = arith.divf %270, %271 : vector<32x1xf32>
    %273 = vector.broadcast %272 : vector<32x1xf32> to vector<32x128xf32>
    %274 = arith.subf %266, %273 : vector<32x128xf32>
    %275 = arith.mulf %274, %274 : vector<32x128xf32>
    %cst_82 = arith.constant dense<0.000000e+00> : vector<32xf32>
    %276 = vector.multi_reduction <add>, %275, %cst_82 [1] : vector<32x128xf32> to vector<32xf32>
    %277 = vector.shape_cast %276 : vector<32xf32> to vector<32x1xf32>
    %cst_83 = arith.constant 1.280000e+02 : f32
    %278 = vector.broadcast %cst_83 : f32 to vector<32x1xf32>
    %279 = arith.divf %277, %278 : vector<32x1xf32>
    %280 = vector.broadcast %272 : vector<32x1xf32> to vector<32x128xf32>
    %281 = arith.subf %266, %280 : vector<32x128xf32>
    %cst_84 = arith.constant 9.99999974E-6 : f32
    %282 = vector.broadcast %cst_84 : f32 to vector<32x1xf32>
    %283 = arith.addf %279, %282 : vector<32x1xf32>
    %284 = math.rsqrt %283 : vector<32x1xf32>
    %285 = vector.broadcast %284 : vector<32x1xf32> to vector<32x128xf32>
    %286 = arith.mulf %281, %285 : vector<32x128xf32>
    %287 = vector.broadcast %267 : vector<1x128xf32> to vector<32x128xf32>
    %288 = arith.mulf %286, %287 : vector<32x128xf32>
    %289 = vector.broadcast %268 : vector<1x128xf32> to vector<32x128xf32>
    %290 = arith.addf %288, %289 : vector<32x128xf32>
    %291 = arith.truncf %290 : vector<32x128xf32> to vector<32x128xbf16>
    %c0_85 = arith.constant 0 : index
    %c0_86 = arith.constant 0 : index
    %292 = vector.load %arg13[%c0_85, %c0_86] : memref<128x512xbf16, #tpu.memory_space<vmem>>, vector<128x512xbf16>
    %cst_87 = arith.constant dense<0.000000e+00> : vector<32x512xf32>
    %293 = tpu.matmul %291, %292, %cst_87 {dimension_numbers = #tpu.dot_dimension_numbers<[1], [0], [0], [1], [0, 0, 1, 1], [], []>} : vector<32x128xbf16>, vector<128x512xbf16>, vector<32x512xf32> -> vector<32x512xf32>
    %c0_88 = arith.constant 0 : index
    %c0_89 = arith.constant 0 : index
    %294 = vector.load %arg14[%c0_88, %c0_89] : memref<1x512xf32, #tpu.memory_space<vmem>>, vector<1x512xf32>
    %295 = vector.broadcast %294 : vector<1x512xf32> to vector<32x512xf32>
    %296 = arith.addf %293, %295 : vector<32x512xf32>
    %cst_90 = arith.constant 5.000000e-01 : f32
    %297 = vector.broadcast %cst_90 : f32 to vector<32x512xf32>
    %298 = arith.mulf %297, %296 : vector<32x512xf32>
    %299 = arith.mulf %296, %296 : vector<32x512xf32>
    %300 = arith.mulf %296, %299 : vector<32x512xf32>
    %cst_91 = arith.constant 4.471500e-02 : f32
    %301 = vector.broadcast %cst_91 : f32 to vector<32x512xf32>
    %302 = arith.mulf %301, %300 : vector<32x512xf32>
    %303 = arith.addf %296, %302 : vector<32x512xf32>
    %cst_92 = arith.constant 0.797884583 : f32
    %304 = vector.broadcast %cst_92 : f32 to vector<32x512xf32>
    %305 = arith.mulf %304, %303 : vector<32x512xf32>
    %306 = math.tanh %305 : vector<32x512xf32>
    %cst_93 = arith.constant 1.000000e+00 : f32
    %307 = vector.broadcast %cst_93 : f32 to vector<32x512xf32>
    %308 = arith.addf %307, %306 : vector<32x512xf32>
    %309 = arith.mulf %298, %308 : vector<32x512xf32>
    %310 = arith.truncf %309 : vector<32x512xf32> to vector<32x512xbf16>
    %c0_94 = arith.constant 0 : index
    %c0_95 = arith.constant 0 : index
    %311 = vector.load %arg15[%c0_94, %c0_95] : memref<512x128xbf16, #tpu.memory_space<vmem>>, vector<512x128xbf16>
    %cst_96 = arith.constant dense<0.000000e+00> : vector<32x128xf32>
    %312 = tpu.matmul %310, %311, %cst_96 {dimension_numbers = #tpu.dot_dimension_numbers<[1], [0], [0], [1], [0, 0, 1, 1], [], []>} : vector<32x512xbf16>, vector<512x128xbf16>, vector<32x128xf32> -> vector<32x128xf32>
    %c0_97 = arith.constant 0 : index
    %c0_98 = arith.constant 0 : index
    %313 = vector.load %arg16[%c0_97, %c0_98] : memref<1x128xf32, #tpu.memory_space<vmem>>, vector<1x128xf32>
    %314 = vector.broadcast %313 : vector<1x128xf32> to vector<32x128xf32>
    %315 = arith.addf %312, %314 : vector<32x128xf32>
    %316 = arith.addf %266, %315 : vector<32x128xf32>
    %317 = vector.shape_cast %316 : vector<32x128xf32> to vector<2x16x128xf32>
    %c0_99 = arith.constant 0 : index
    %c0_100 = arith.constant 0 : index
    %c0_101 = arith.constant 0 : index
    %318 = vector.load %arg17[%c0_99, %c0_100, %c0_101] : memref<2x16x128xf32, #tpu.memory_space<vmem>>, vector<2x16x128xf32>
    tpu.vector_store %arg17[%c0_99, %c0_100, %c0_101], %317 {strides = array<i32>} : memref<2x16x128xf32, #tpu.memory_space<vmem>>, vector<2x16x128xf32>,
    return
  }
  func.func @transform_0(%arg0: i32) -> (i32, i32, i32) {
    %c0_i32 = arith.constant 0 : i32
    %c0_i32_0 = arith.constant 0 : i32
    %c0_i32_1 = arith.constant 0 : i32
    return %arg0, %c0_i32, %c0_i32_0 : i32, i32, i32
  }
  func.func @transform_1(%arg0: i32) -> (i32, i32) {
    %c0_i32 = arith.constant 0 : i32
    %c0_i32_0 = arith.constant 0 : i32
    %c0_i32_1 = arith.constant 0 : i32
    return %c0_i32, %c0_i32_0 : i32, i32
  }
  func.func @transform_2(%arg0: i32) -> (i32, i32) {
    %c0_i32 = arith.constant 0 : i32
    %c0_i32_0 = arith.constant 0 : i32
    %c0_i32_1 = arith.constant 0 : i32
    return %c0_i32, %c0_i32_0 : i32, i32
  }
  func.func @transform_3(%arg0: i32) -> (i32, i32) {
    %c0_i32 = arith.constant 0 : i32
    %c0_i32_0 = arith.constant 0 : i32
    %c0_i32_1 = arith.constant 0 : i32
    return %c0_i32, %c0_i32_0 : i32, i32
  }
  func.func @transform_4(%arg0: i32) -> (i32, i32) {
    %c0_i32 = arith.constant 0 : i32
    %c0_i32_0 = arith.constant 0 : i32
    %c0_i32_1 = arith.constant 0 : i32
    return %c0_i32, %c0_i32_0 : i32, i32
  }
  func.func @transform_5(%arg0: i32) -> (i32, i32) {
    %c0_i32 = arith.constant 0 : i32
    %c0_i32_0 = arith.constant 0 : i32
    %c0_i32_1 = arith.constant 0 : i32
    return %c0_i32, %c0_i32_0 : i32, i32
  }
  func.func @transform_6(%arg0: i32) -> (i32, i32) {
    %c0_i32 = arith.constant 0 : i32
    %c0_i32_0 = arith.constant 0 : i32
    %c0_i32_1 = arith.constant 0 : i32
    return %c0_i32, %c0_i32_0 : i32, i32
  }
  func.func @transform_7(%arg0: i32) -> (i32, i32) {
    %c0_i32 = arith.constant 0 : i32
    %c0_i32_0 = arith.constant 0 : i32
    %c0_i32_1 = arith.constant 0 : i32
    return %c0_i32, %c0_i32_0 : i32, i32
  }
  func.func @transform_8(%arg0: i32) -> (i32, i32) {
    %c0_i32 = arith.constant 0 : i32
    %c0_i32_0 = arith.constant 0 : i32
    %c0_i32_1 = arith.constant 0 : i32
    return %c0_i32, %c0_i32_0 : i32, i32
  }
  func.func @transform_9(%arg0: i32) -> (i32, i32) {
    %c0_i32 = arith.constant 0 : i32
    %c0_i32_0 = arith.constant 0 : i32
    %c0_i32_1 = arith.constant 0 : i32
    return %c0_i32, %c0_i32_0 : i32, i32
  }
  func.func @transform_10(%arg0: i32) -> (i32, i32) {
    %c0_i32 = arith.constant 0 : i32
    %c0_i32_0 = arith.constant 0 : i32
    %c0_i32_1 = arith.constant 0 : i32
    return %c0_i32, %c0_i32_0 : i32, i32
  }
  func.func @transform_11(%arg0: i32) -> (i32, i32) {
    %c0_i32 = arith.constant 0 : i32
    %c0_i32_0 = arith.constant 0 : i32
    %c0_i32_1 = arith.constant 0 : i32
    return %c0_i32, %c0_i32_0 : i32, i32
  }
  func.func @transform_12(%arg0: i32) -> (i32, i32) {
    %c0_i32 = arith.constant 0 : i32
    %c0_i32_0 = arith.constant 0 : i32
    %c0_i32_1 = arith.constant 0 : i32
    return %c0_i32, %c0_i32_0 : i32, i32
  }
  func.func @transform_13(%arg0: i32) -> (i32, i32) {
    %c0_i32 = arith.constant 0 : i32
    %c0_i32_0 = arith.constant 0 : i32
    %c0_i32_1 = arith.constant 0 : i32
    return %c0_i32, %c0_i32_0 : i32, i32
  }
  func.func @transform_14(%arg0: i32) -> (i32, i32) {
    %c0_i32 = arith.constant 0 : i32
    %c0_i32_0 = arith.constant 0 : i32
    %c0_i32_1 = arith.constant 0 : i32
    return %c0_i32, %c0_i32_0 : i32, i32
  }
  func.func @transform_15(%arg0: i32) -> (i32, i32) {
    %c0_i32 = arith.constant 0 : i32
    %c0_i32_0 = arith.constant 0 : i32
    %c0_i32_1 = arith.constant 0 : i32
    return %c0_i32, %c0_i32_0 : i32, i32
  }
  func.func @transform_16(%arg0: i32) -> (i32, i32, i32) {
    %c0_i32 = arith.constant 0 : i32
    %c0_i32_0 = arith.constant 0 : i32
    %c0_i32_1 = arith.constant 0 : i32
    return %arg0, %c0_i32, %c0_i32_0 : i32, i32, i32
  }
}

</mosaic_0001>

<llo_original>
// kernel: tpu_custom_call.1
$region0: #{tpu_custom_call.1}
  #allocation0 [shape = 'u32[]', space=smem, size = 0x4, offset = 0x4, fixed_abs, tag = 'smem constant byte address 0x4 - core index']
  #allocation1 [shape = 'u32[144,128]{1,0:T(1,128)}', space=vmem, size = 0x12000, scoped, tag = 'internal scratch']
  %s0 = inlined_call_operand.hbm [shape: f32[4,16,128], index: 0, kind: input, shape index: {}]
  %s1 = inlined_call_operand.hbm [shape: f32[32,128], index: 1, kind: input, shape index: {}]
  %s2 = inlined_call_operand.hbm [shape: f32[32,128], index: 2, kind: input, shape index: {}]
  %s3 = inlined_call_operand.hbm [shape: f32[32,128], index: 3, kind: input, shape index: {}]
  %s4 = inlined_call_operand.hbm [shape: f32[1,128], index: 4, kind: input, shape index: {}]
  %s5 = inlined_call_operand.vmem [shape: f32[1,128], index: 5, kind: input, shape index: {}]
  %s6 = inlined_call_operand.hbm [shape: bf16[128,384], index: 6, kind: input, shape index: {}]
  %s7 = inlined_call_operand.vmem [shape: f32[1,384], index: 7, kind: input, shape index: {}]
  %s8 = inlined_call_operand.hbm [shape: bf16[128,128], index: 8, kind: input, shape index: {}]
  %s9 = inlined_call_operand.vmem [shape: f32[1,128], index: 9, kind: input, shape index: {}]
  %s10 = inlined_call_operand.vmem [shape: f32[1,128], index: 10, kind: input, shape index: {}]
  %s11 = inlined_call_operand.vmem [shape: f32[1,128], index: 11, kind: input, shape index: {}]
  %s12 = inlined_call_operand.hbm [shape: bf16[128,512], index: 12, kind: input, shape index: {}]
  %s13 = inlined_call_operand.vmem [shape: f32[1,512], index: 13, kind: input, shape index: {}]
  %s14 = inlined_call_operand.hbm [shape: bf16[512,128], index: 14, kind: input, shape index: {}]
  %s15 = inlined_call_operand.vmem [shape: f32[1,128], index: 15, kind: input, shape index: {}]
  %s16 = inlined_call_operand.hbm [shape: f32[4,16,128], index: 16, kind: output, shape index: {}]
  %s17 = sld [smem:[#allocation0]]
  $region133: #{tpu_custom_call.1} parent=0
    _
  %s19 = ssub.s32 1, %s17
  %s20 = scalar_select 0, %s19, %s17
  $region1: #{tpu_custom_call.1} parent=0
    #allocation2 [shape = 'u8[32768]{0}', space=vmem, size = 0x8000, scoped, tag = 'input window, operand 0']
    #allocation3 [shape = 's32[2]{0}', space=sflag, size = 0x8, scoped, tag = 'scoped memory for tpu_custom_call.1']
    #allocation4 [shape = 's32[2]{0}', space=sflag, size = 0x8, scoped, tag = 'scoped memory for tpu_custom_call.1']
    #allocation5 [shape = 'u8[16384]{0}', space=vmem, size = 0x4000, scoped, tag = 'input window, operand 1, single buffered']
    #allocation6 [shape = 's32[1]{0}', space=sflag, size = 0x4, scoped, tag = 'scoped memory for tpu_custom_call.1']
    #allocation7 [shape = 'u8[16384]{0}', space=vmem, size = 0x4000, scoped, tag = 'input window, operand 2, single buffered']
    #allocation8 [shape = 'u8[16384]{0}', space=vmem, size = 0x4000, scoped, tag = 'input window, operand 3, single buffered']
    #allocation9 [shape = 's32[1]{0}', space=sflag, size = 0x4, scoped, tag = 'scoped memory for tpu_custom_call.1']
    #allocation10 [shape = 'u8[512]{0}', space=vmem, size = 0x400, scoped, tag = 'input window, operand 4, single buffered']
    #allocation11 [shape = 'u8[98304]{0}', space=vmem, size = 0x18000, scoped, tag = 'input window, operand 6, single buffered']
    #allocation12 [shape = 's32[1]{0}', space=sflag, size = 0x4, scoped, tag = 'scoped memory for tpu_custom_call.1']
    #allocation13 [shape = 'u8[32768]{0}', space=vmem, size = 0x8000, scoped, tag = 'input window, operand 8, single buffered']
    #allocation14 [shape = 'u8[131072]{0}', space=vmem, size = 0x20000, scoped, tag = 'input window, operand 12, single buffered']
    #allocation15 [shape = 's32[1]{0}', space=sflag, size = 0x4, scoped, tag = 'scoped memory for tpu_custom_call.1']
    #allocation16 [shape = 'u8[131072]{0}', space=vmem, size = 0x20000, scoped, tag = 'input window, operand 14, single buffered']
    #allocation17 [shape = 'u8[32768]{0}', space=vmem, size = 0x8000, scoped, tag = 'output window, operand 0']
    %21 = vsyncpa [#allocation3], 0
    %s22 = scalar_lea.sflag [#allocation3], 1
    %23 = vsyncpa %s22, 0
    %24 = vsyncpa [#allocation6], 0
    %25 = vsyncpa [#allocation9], 0
    %26 = vsyncpa [#allocation12], 0
    %27 = vsyncpa [#allocation15], 0
    %28 = vsyncpa [#allocation4], 0
    %s29 = scalar_lea.sflag [#allocation4], 1
    %30 = vsyncpa %s29, 0
    loop: start=0, step=1, limit=4
    $region2: #{tpu_custom_call.1} parent=1 // loop_pre_header
      _
    $region3: #{tpu_custom_call.1} parent=1 // loop_header
      %s32 = sphi 0, %s36
      %p33 = scmp.ge.s32.totalorder %s32, 4
      %s42 = sphi 0, %s44
      %s45 = sphi 0, %s42
      %s46 = sphi 0, %s45
      %s62 = sphi 0, %s46
      %s66 = sphi 0, %s66
      %s68 = sphi 0, %s66
      %s69 = sphi 0, %s68
      %s83 = sphi 0, %s69
      %s87 = sphi 0, %s87
      %s89 = sphi 0, %s87
      %s90 = sphi 0, %s89
      %s104 = sphi 0, %s90
      %s108 = sphi 0, %s108
      %s110 = sphi 0, %s108
      %s111 = sphi 0, %s110
      %s125 = sphi 0, %s111
      %s129 = sphi 0, %s129
      %s131 = sphi 0, %s129
      %s132 = sphi 0, %s131
      %s146 = sphi 0, %s132
      %s150 = sphi 0, %s150
      %s152 = sphi 0, %s150
      %s153 = sphi 0, %s152
      %s167 = sphi 0, %s153
      %s171 = sphi 0, %s171
      %s173 = sphi 0, %s171
      %s174 = sphi 0, %s173
      %s188 = sphi 0, %s174
      %s192 = sphi 0, %s192
      %s194 = sphi 0, %s192
      %s195 = sphi 0, %s194
      %s209 = sphi 0, %s195
      %s213 = sphi 0, %s213
      %s215 = sphi 0, %s213
      %s216 = sphi 0, %s215
      %s230 = sphi 0, %s216
      %s234 = sphi 0, %s234
      %s236 = sphi 0, %s234
      %s237 = sphi 0, %s236
      %s251 = sphi 0, %s237
      %s255 = sphi 0, %s255
      %s257 = sphi 0, %s255
      %s258 = sphi 0, %s257
      %s272 = sphi 0, %s258
      %s276 = sphi 0, %s276
      %s278 = sphi 0, %s276
      %s279 = sphi 0, %s278
      %s293 = sphi 0, %s279
      %s297 = sphi 0, %s297
      %s299 = sphi 0, %s297
      %s300 = sphi 0, %s299
      %s314 = sphi 0, %s300
      %s318 = sphi 0, %s318
      %s320 = sphi 0, %s318
      %s321 = sphi 0, %s320
      %s335 = sphi 0, %s321
      %s339 = sphi 0, %s339
      %s341 = sphi 0, %s339
      %s342 = sphi 0, %s341
      %s356 = sphi 0, %s342
      %s360 = sphi 0, %s360
      %s362 = sphi 0, %s360
      %s363 = sphi 0, %s362
      %s377 = sphi 0, %s363
      %s383 = sphi 0, %s385
      %s386 = sphi 0, %s383
      %s387 = sphi 0, %s386
      %s403 = sphi 0, %s387
    $region4: #{tpu_custom_call.1} parent=1 // loop_header_branch
      %35 = sbr.rel (%p33) target = $region8
    $region5: #{tpu_custom_call.1} parent=1 // loop_body
      %s37 = ssub.s32 %s32, 1
      %s38 = ssub.s32 %s32, 2
      %s39 = sadd.s32 %s32, 1
      %s40 = ssub.s32 %s32, %s39
      %p41 = scmp.eq.s32.totalorder %s40, 0
      %s43 = sadd.s32 %s42, 1
      %s44 = scalar_select %p41, %s42, %s43
      %p47 = pneg %p41
      %p48 = scmp.eq.s32.totalorder %s32, 1
      %p49 = por %p47, %p48
      %p50 = scmp.ne.s32.totalorder %s42, %s45
      %p51 = scmp.eq.s32.totalorder %s32, 0
      %p52 = por %p50, %p51
      %p53 = scmp.ne.s32.totalorder %s42, %s45
      %p54 = scmp.eq.s32.totalorder %s37, 1
      %p55 = por %p53, %p54
      %p56 = scmp.ne.s32.totalorder %s45, %s46
      %p57 = scmp.eq.s32.totalorder %s37, 0
      %p58 = por %p56, %p57
      %p59 = scmp.ne.s32.totalorder %s45, %s46
      %p60 = scmp.eq.s32.totalorder %s38, 1
      %p61 = por %p59, %p60
      %p63 = scmp.ne.s32.totalorder %s46, %s62
      %p64 = scmp.eq.s32.totalorder %s38, 0
      %p65 = por %p63, %p64
      %s67 = sadd.s32 %s66, 1
      %p70 = scmp.eq.s32.totalorder %s32, 1
      %p71 = scmp.ne.s32.totalorder %s66, %s68
      %p72 = scmp.eq.s32.totalorder %s32, 0
      %p73 = por %p71, %p72
      %p74 = scmp.ne.s32.totalorder %s66, %s68
      %p75 = scmp.eq.s32.totalorder %s37, 1
      %p76 = por %p74, %p75
      %p77 = scmp.ne.s32.totalorder %s68, %s69
      %p78 = scmp.eq.s32.totalorder %s37, 0
      %p79 = por %p77, %p78
      %p80 = scmp.ne.s32.totalorder %s68, %s69
      %p81 = scmp.eq.s32.totalorder %s38, 1
      %p82 = por %p80, %p81
      %p84 = scmp.ne.s32.totalorder %s69, %s83
      %p85 = scmp.eq.s32.totalorder %s38, 0
      %p86 = por %p84, %p85
      %s88 = sadd.s32 %s87, 1
      %p91 = scmp.eq.s32.totalorder %s32, 1
      %p92 = scmp.ne.s32.totalorder %s87, %s89
      %p93 = scmp.eq.s32.totalorder %s32, 0
      %p94 = por %p92, %p93
      %p95 = scmp.ne.s32.totalorder %s87, %s89
      %p96 = scmp.eq.s32.totalorder %s37, 1
      %p97 = por %p95, %p96
      %p98 = scmp.ne.s32.totalorder %s89, %s90
      %p99 = scmp.eq.s32.totalorder %s37, 0
      %p100 = por %p98, %p99
      %p101 = scmp.ne.s32.totalorder %s89, %s90
      %p102 = scmp.eq.s32.totalorder %s38, 1
      %p103 = por %p101, %p102
      %p105 = scmp.ne.s32.totalorder %s90, %s104
      %p106 = scmp.eq.s32.totalorder %s38, 0
      %p107 = por %p105, %p106
      %s109 = sadd.s32 %s108, 1
      %p112 = scmp.eq.s32.totalorder %s32, 1
      %p113 = scmp.ne.s32.totalorder %s108, %s110
      %p114 = scmp.eq.s32.totalorder %s32, 0
      %p115 = por %p113, %p114
      %p116 = scmp.ne.s32.totalorder %s108, %s110
      %p117 = scmp.eq.s32.totalorder %s37, 1
      %p118 = por %p116, %p117
      %p119 = scmp.ne.s32.totalorder %s110, %s111
      %p120 = scmp.eq.s32.totalorder %s37, 0
      %p121 = por %p119, %p120
      %p122 = scmp.ne.s32.totalorder %s110, %s111
      %p123 = scmp.eq.s32.totalorder %s38, 1
      %p124 = por %p122, %p123
      %p126 = scmp.ne.s32.totalorder %s111, %s125
      %p127 = scmp.eq.s32.totalorder %s38, 0
      %p128 = por %p126, %p127
      %s130 = sadd.s32 %s129, 1
      %p133 = scmp.eq.s32.totalorder %s32, 1
      %p134 = scmp.ne.s32.totalorder %s129, %s131
      %p135 = scmp.eq.s32.totalorder %s32, 0
      %p136 = por %p134, %p135
      %p137 = scmp.ne.s32.totalorder %s129, %s131
      %p138 = scmp.eq.s32.totalorder %s37, 1
      %p139 = por %p137, %p138
      %p140 = scmp.ne.s32.totalorder %s131, %s132
      %p141 = scmp.eq.s32.totalorder %s37, 0
      %p142 = por %p140, %p141
      %p143 = scmp.ne.s32.totalorder %s131, %s132
      %p144 = scmp.eq.s32.totalorder %s38, 1
      %p145 = por %p143, %p144
      %p147 = scmp.ne.s32.totalorder %s132, %s146
      %p148 = scmp.eq.s32.totalorder %s38, 0
      %p149 = por %p147, %p148
      %s151 = sadd.s32 %s150, 1
      %p154 = scmp.eq.s32.totalorder %s32, 1
      %p155 = scmp.ne.s32.totalorder %s150, %s152
      %p156 = scmp.eq.s32.totalorder %s32, 0
      %p157 = por %p155, %p156
      %p158 = scmp.ne.s32.totalorder %s150, %s152
      %p159 = scmp.eq.s32.totalorder %s37, 1
      %p160 = por %p158, %p159
      %p161 = scmp.ne.s32.totalorder %s152, %s153
      %p162 = scmp.eq.s32.totalorder %s37, 0
      %p163 = por %p161, %p162
      %p164 = scmp.ne.s32.totalorder %s152, %s153
      %p165 = scmp.eq.s32.totalorder %s38, 1
      %p166 = por %p164, %p165
      %p168 = scmp.ne.s32.totalorder %s153, %s167
      %p169 = scmp.eq.s32.totalorder %s38, 0
      %p170 = por %p168, %p169
      %s172 = sadd.s32 %s171, 1
      %p175 = scmp.eq.s32.totalorder %s32, 1
      %p176 = scmp.ne.s32.totalorder %s171, %s173
      %p177 = scmp.eq.s32.totalorder %s32, 0
      %p178 = por %p176, %p177
      %p179 = scmp.ne.s32.totalorder %s171, %s173
      %p180 = scmp.eq.s32.totalorder %s37, 1
      %p181 = por %p179, %p180
      %p182 = scmp.ne.s32.totalorder %s173, %s174
      %p183 = scmp.eq.s32.totalorder %s37, 0
      %p184 = por %p182, %p183
      %p185 = scmp.ne.s32.totalorder %s173, %s174
      %p186 = scmp.eq.s32.totalorder %s38, 1
      %p187 = por %p185, %p186
      %p189 = scmp.ne.s32.totalorder %s174, %s188
      %p190 = scmp.eq.s32.totalorder %s38, 0
      %p191 = por %p189, %p190
      %s193 = sadd.s32 %s192, 1
      %p196 = scmp.eq.s32.totalorder %s32, 1
      %p197 = scmp.ne.s32.totalorder %s192, %s194
      %p198 = scmp.eq.s32.totalorder %s32, 0
      %p199 = por %p197, %p198
      %p200 = scmp.ne.s32.totalorder %s192, %s194
      %p201 = scmp.eq.s32.totalorder %s37, 1
      %p202 = por %p200, %p201
      %p203 = scmp.ne.s32.totalorder %s194, %s195
      %p204 = scmp.eq.s32.totalorder %s37, 0
      %p205 = por %p203, %p204
      %p206 = scmp.ne.s32.totalorder %s194, %s195
      %p207 = scmp.eq.s32.totalorder %s38, 1
      %p208 = por %p206, %p207
      %p210 = scmp.ne.s32.totalorder %s195, %s209
      %p211 = scmp.eq.s32.totalorder %s38, 0
      %p212 = por %p210, %p211
      %s214 = sadd.s32 %s213, 1
      %p217 = scmp.eq.s32.totalorder %s32, 1
      %p218 = scmp.ne.s32.totalorder %s213, %s215
      %p219 = scmp.eq.s32.totalorder %s32, 0
      %p220 = por %p218, %p219
      %p221 = scmp.ne.s32.totalorder %s213, %s215
      %p222 = scmp.eq.s32.totalorder %s37, 1
      %p223 = por %p221, %p222
      %p224 = scmp.ne.s32.totalorder %s215, %s216
      %p225 = scmp.eq.s32.totalorder %s37, 0
      %p226 = por %p224, %p225
      %p227 = scmp.ne.s32.totalorder %s215, %s216
      %p228 = scmp.eq.s32.totalorder %s38, 1
      %p229 = por %p227, %p228
      %p231 = scmp.ne.s32.totalorder %s216, %s230
      %p232 = scmp.eq.s32.totalorder %s38, 0
      %p233 = por %p231, %p232
      %s235 = sadd.s32 %s234, 1
      %p238 = scmp.eq.s32.totalorder %s32, 1
      %p239 = scmp.ne.s32.totalorder %s234, %s236
      %p240 = scmp.eq.s32.totalorder %s32, 0
      %p241 = por %p239, %p240
      %p242 = scmp.ne.s32.totalorder %s234, %s236
      %p243 = scmp.eq.s32.totalorder %s37, 1
      %p244 = por %p242, %p243
      %p245 = scmp.ne.s32.totalorder %s236, %s237
      %p246 = scmp.eq.s32.totalorder %s37, 0
      %p247 = por %p245, %p246
      %p248 = scmp.ne.s32.totalorder %s236, %s237
      %p249 = scmp.eq.s32.totalorder %s38, 1
      %p250 = por %p248, %p249
      %p252 = scmp.ne.s32.totalorder %s237, %s251
      %p253 = scmp.eq.s32.totalorder %s38, 0
      %p254 = por %p252, %p253
      %s256 = sadd.s32 %s255, 1
      %p259 = scmp.eq.s32.totalorder %s32, 1
      %p260 = scmp.ne.s32.totalorder %s255, %s257
      %p261 = scmp.eq.s32.totalorder %s32, 0
      %p262 = por %p260, %p261
      %p263 = scmp.ne.s32.totalorder %s255, %s257
      %p264 = scmp.eq.s32.totalorder %s37, 1
      %p265 = por %p263, %p264
      %p266 = scmp.ne.s32.totalorder %s257, %s258
      %p267 = scmp.eq.s32.totalorder %s37, 0
      %p268 = por %p266, %p267
      %p269 = scmp.ne.s32.totalorder %s257, %s258
      %p270 = scmp.eq.s32.totalorder %s38, 1
      %p271 = por %p269, %p270
      %p273 = scmp.ne.s32.totalorder %s258, %s272
      %p274 = scmp.eq.s32.totalorder %s38, 0
      %p275 = por %p273, %p274
      %s277 = sadd.s32 %s276, 1
      %p280 = scmp.eq.s32.totalorder %s32, 1
      %p281 = scmp.ne.s32.totalorder %s276, %s278
      %p282 = scmp.eq.s32.totalorder %s32, 0
      %p283 = por %p281, %p282
      %p284 = scmp.ne.s32.totalorder %s276, %s278
      %p285 = scmp.eq.s32.totalorder %s37, 1
      %p286 = por %p284, %p285
      %p287 = scmp.ne.s32.totalorder %s278, %s279
      %p288 = scmp.eq.s32.totalorder %s37, 0
      %p289 = por %p287, %p288
      %p290 = scmp.ne.s32.totalorder %s278, %s279
      %p291 = scmp.eq.s32.totalorder %s38, 1
      %p292 = por %p290, %p291
      %p294 = scmp.ne.s32.totalorder %s279, %s293
      %p295 = scmp.eq.s32.totalorder %s38, 0
      %p296 = por %p294, %p295
      %s298 = sadd.s32 %s297, 1
      %p301 = scmp.eq.s32.totalorder %s32, 1
      %p302 = scmp.ne.s32.totalorder %s297, %s299
      %p303 = scmp.eq.s32.totalorder %s32, 0
      %p304 = por %p302, %p303
      %p305 = scmp.ne.s32.totalorder %s297, %s299
      %p306 = scmp.eq.s32.totalorder %s37, 1
      %p307 = por %p305, %p306
      %p308 = scmp.ne.s32.totalorder %s299, %s300
      %p309 = scmp.eq.s32.totalorder %s37, 0
      %p310 = por %p308, %p309
      %p311 = scmp.ne.s32.totalorder %s299, %s300
      %p312 = scmp.eq.s32.totalorder %s38, 1
      %p313 = por %p311, %p312
      %p315 = scmp.ne.s32.totalorder %s300, %s314
      %p316 = scmp.eq.s32.totalorder %s38, 0
      %p317 = por %p315, %p316
      %s319 = sadd.s32 %s318, 1
      %p322 = scmp.eq.s32.totalorder %s32, 1
      %p323 = scmp.ne.s32.totalorder %s318, %s320
      %p324 = scmp.eq.s32.totalorder %s32, 0
      %p325 = por %p323, %p324
      %p326 = scmp.ne.s32.totalorder %s318, %s320
      %p327 = scmp.eq.s32.totalorder %s37, 1
      %p328 = por %p326, %p327
      %p329 = scmp.ne.s32.totalorder %s320, %s321
      %p330 = scmp.eq.s32.totalorder %s37, 0
      %p331 = por %p329, %p330
      %p332 = scmp.ne.s32.totalorder %s320, %s321
      %p333 = scmp.eq.s32.totalorder %s38, 1
      %p334 = por %p332, %p333
      %p336 = scmp.ne.s32.totalorder %s321, %s335
      %p337 = scmp.eq.s32.totalorder %s38, 0
      %p338 = por %p336, %p337
      %s340 = sadd.s32 %s339, 1
      %p343 = scmp.eq.s32.totalorder %s32, 1
      %p344 = scmp.ne.s32.totalorder %s339, %s341
      %p345 = scmp.eq.s32.totalorder %s32, 0
      %p346 = por %p344, %p345
      %p347 = scmp.ne.s32.totalorder %s339, %s341
      %p348 = scmp.eq.s32.totalorder %s37, 1
      %p349 = por %p347, %p348
      %p350 = scmp.ne.s32.totalorder %s341, %s342
      %p351 = scmp.eq.s32.totalorder %s37, 0
      %p352 = por %p350, %p351
      %p353 = scmp.ne.s32.totalorder %s341, %s342
      %p354 = scmp.eq.s32.totalorder %s38, 1
      %p355 = por %p353, %p354
      %p357 = scmp.ne.s32.totalorder %s342, %s356
      %p358 = scmp.eq.s32.totalorder %s38, 0
      %p359 = por %p357, %p358
      %s361 = sadd.s32 %s360, 1
      %p364 = scmp.eq.s32.totalorder %s32, 1
      %p365 = scmp.ne.s32.totalorder %s360, %s362
      %p366 = scmp.eq.s32.totalorder %s32, 0
      %p367 = por %p365, %p366
      %p368 = scmp.ne.s32.totalorder %s360, %s362
      %p369 = scmp.eq.s32.totalorder %s37, 1
      %p370 = por %p368, %p369
      %p371 = scmp.ne.s32.totalorder %s362, %s363
      %p372 = scmp.eq.s32.totalorder %s37, 0
      %p373 = por %p371, %p372
      %p374 = scmp.ne.s32.totalorder %s362, %s363
      %p375 = scmp.eq.s32.totalorder %s38, 1
      %p376 = por %p374, %p375
      %p378 = scmp.ne.s32.totalorder %s363, %s377
      %p379 = scmp.eq.s32.totalorder %s38, 0
      %p380 = por %p378, %p379
      %s381 = ssub.s32 %s32, %s39
      %p382 = scmp.eq.s32.totalorder %s381, 0
      %s384 = sadd.s32 %s383, 1
      %s385 = scalar_select %p382, %s383, %s384
      %p388 = pneg %p382
      %p389 = scmp.eq.s32.totalorder %s32, 1
      %p390 = por %p388, %p389
      %p391 = scmp.ne.s32.totalorder %s383, %s386
      %p392 = scmp.eq.s32.totalorder %s32, 0
      %p393 = por %p391, %p392
      %p394 = scmp.ne.s32.totalorder %s383, %s386
      %p395 = scmp.eq.s32.totalorder %s37, 1
      %p396 = por %p394, %p395
      %p397 = scmp.ne.s32.totalorder %s386, %s387
      %p398 = scmp.eq.s32.totalorder %s37, 0
      %p399 = por %p397, %p398
      %p400 = scmp.ne.s32.totalorder %s386, %s387
      %p401 = scmp.eq.s32.totalorder %s38, 1
      %p402 = por %p400, %p401
      %p404 = scmp.ne.s32.totalorder %s387, %s403
      %p405 = scmp.eq.s32.totalorder %s38, 0
      %p406 = por %p404, %p405
      %p407 = scmp.le.s32.totalorder 1, %s32
      %p408 = scmp.lt.s32.totalorder %s32, 3
      %p409 = pnand %p407, %p408
      %p410 = pneg %p409
      // Predicated region
      $region9: #{tpu_custom_call.1} parent=5 // pred_check
        _
      $region10: #{tpu_custom_call.1} parent=5 // pred_check_branch
        %412 = sbr.rel (%p409) target = $region12
      $region11: #{tpu_custom_call.1} parent=5 // pred_region
        %s413 = ssub.s32 %s32, 1
        // Predicated region
        $region13: #{tpu_custom_call.1} parent=11 // pred_check
          %p414 = pneg %p79
        $region14: #{tpu_custom_call.1} parent=11 // pred_check_branch
          %416 = sbr.rel (%p414) target = $region16
        $region15: #{tpu_custom_call.1} parent=11 // pred_region
          %s418 = ssub.s32 512, 512
          %419 = vsyncadd [#allocation6], %s418
          %s420 = sshll.u32 [#allocation5], 4
          %s421 = int_to_ptr.vmem [resolvable:$true] %s420
          %426 = dma.hbm_to_vmem [thread:$0]  %s1, 512, %s421, [#allocation6], 128, 128, 8
        $region16: #{tpu_custom_call.1} parent=11 // pred_fallthru
          _
        // Predicated region
        $region17: #{tpu_custom_call.1} parent=11 // pred_check
          %p427 = pneg %p100
        $region18: #{tpu_custom_call.1} parent=11 // pred_check_branch
          %429 = sbr.rel (%p427) target = $region20
        $region19: #{tpu_custom_call.1} parent=11 // pred_region
          %s431 = ssub.s32 512, 512
          %432 = vsyncadd [#allocation6], %s431
          %s433 = sshll.u32 [#allocation7], 4
          %s434 = int_to_ptr.vmem [resolvable:$true] %s433
          %439 = dma.hbm_to_vmem [thread:$0]  %s2, 512, %s434, [#allocation6], 128, 128, 8
        $region20: #{tpu_custom_call.1} parent=11 // pred_fallthru
          _
        // Predicated region
        $region21: #{tpu_custom_call.1} parent=11 // pred_check
          %p440 = pneg %p121
        $region22: #{tpu_custom_call.1} parent=11 // pred_check_branch
          %442 = sbr.rel (%p440) target = $region24
        $region23: #{tpu_custom_call.1} parent=11 // pred_region
          %s444 = ssub.s32 512, 512
          %445 = vsyncadd [#allocation9], %s444
          %s446 = sshll.u32 [#allocation8], 4
          %s447 = int_to_ptr.vmem [resolvable:$true] %s446
          %452 = dma.hbm_to_vmem [thread:$0]  %s3, 512, %s447, [#allocation9], 128, 128, 8
        $region24: #{tpu_custom_call.1} parent=11 // pred_fallthru
          _
        // Predicated region
        $region25: #{tpu_custom_call.1} parent=11 // pred_check
          %p453 = pneg %p142
        $region26: #{tpu_custom_call.1} parent=11 // pred_check_branch
          %455 = sbr.rel (%p453) target = $region28
        $region27: #{tpu_custom_call.1} parent=11 // pred_region
          %s457 = ssub.s32 16, 16
          %458 = vsyncadd [#allocation9], %s457
          %s460 = sshll.u32 [#allocation10], 4
          %s461 = int_to_ptr.vmem [resolvable:$true] %s460
          %463 = dma.hbm_to_vmem [thread:$0]  %s4, 16, %s461, [#allocation9]
        $region28: #{tpu_custom_call.1} parent=11 // pred_fallthru
          _
        // Predicated region
        $region29: #{tpu_custom_call.1} parent=11 // pred_check
          %p464 = pneg %p163
        $region30: #{tpu_custom_call.1} parent=11 // pred_check_branch
          %466 = sbr.rel (%p464) target = $region32
        $region31: #{tpu_custom_call.1} parent=11 // pred_region
          _
        $region32: #{tpu_custom_call.1} parent=11 // pred_fallthru
          _
        // Predicated region
        $region33: #{tpu_custom_call.1} parent=11 // pred_check
          %p467 = pneg %p184
        $region34: #{tpu_custom_call.1} parent=11 // pred_check_branch
          %469 = sbr.rel (%p467) target = $region36
        $region35: #{tpu_custom_call.1} parent=11 // pred_region
          %s471 = ssub.s32 3072, 3072
          %472 = vsyncadd [#allocation12], %s471
          %s473 = sshll.u32 [#allocation11], 4
          %s474 = int_to_ptr.vmem [resolvable:$true] %s473
          %479 = dma.hbm_to_vmem [thread:$0]  %s6, 3072, %s474, [#allocation12], 192, 192, 12
        $region36: #{tpu_custom_call.1} parent=11 // pred_fallthru
          _
        // Predicated region
        $region37: #{tpu_custom_call.1} parent=11 // pred_check
          %p480 = pneg %p205
        $region38: #{tpu_custom_call.1} parent=11 // pred_check_branch
          %482 = sbr.rel (%p480) target = $region40
        $region39: #{tpu_custom_call.1} parent=11 // pred_region
          _
        $region40: #{tpu_custom_call.1} parent=11 // pred_fallthru
          _
        // Predicated region
        $region41: #{tpu_custom_call.1} parent=11 // pred_check
          %p483 = pneg %p226
        $region42: #{tpu_custom_call.1} parent=11 // pred_check_branch
          %485 = sbr.rel (%p483) target = $region44
        $region43: #{tpu_custom_call.1} parent=11 // pred_region
          %s487 = ssub.s32 1024, 1024
          %488 = vsyncadd [#allocation12], %s487
          %s489 = sshll.u32 [#allocation13], 4
          %s490 = int_to_ptr.vmem [resolvable:$true] %s489
          %495 = dma.hbm_to_vmem [thread:$0]  %s8, 1024, %s490, [#allocation12], 64, 64, 4
        $region44: #{tpu_custom_call.1} parent=11 // pred_fallthru
          _
        // Predicated region
        $region45: #{tpu_custom_call.1} parent=11 // pred_check
          %p496 = pneg %p247
        $region46: #{tpu_custom_call.1} parent=11 // pred_check_branch
          %498 = sbr.rel (%p496) target = $region48
        $region47: #{tpu_custom_call.1} parent=11 // pred_region
          _
        $region48: #{tpu_custom_call.1} parent=11 // pred_fallthru
          _
        // Predicated region
        $region49: #{tpu_custom_call.1} parent=11 // pred_check
          %p499 = pneg %p268
        $region50: #{tpu_custom_call.1} parent=11 // pred_check_branch
          %501 = sbr.rel (%p499) target = $region52
        $region51: #{tpu_custom_call.1} parent=11 // pred_region
          _
        $region52: #{tpu_custom_call.1} parent=11 // pred_fallthru
          _
        // Predicated region
        $region53: #{tpu_custom_call.1} parent=11 // pred_check
          %p502 = pneg %p289
        $region54: #{tpu_custom_call.1} parent=11 // pred_check_branch
          %504 = sbr.rel (%p502) target = $region56
        $region55: #{tpu_custom_call.1} parent=11 // pred_region
          _
        $region56: #{tpu_custom_call.1} parent=11 // pred_fallthru
          _
        // Predicated region
        $region57: #{tpu_custom_call.1} parent=11 // pred_check
          %p505 = pneg %p310
        $region58: #{tpu_custom_call.1} parent=11 // pred_check_branch
          %507 = sbr.rel (%p505) target = $region60
        $region59: #{tpu_custom_call.1} parent=11 // pred_region
          %s509 = ssub.s32 4096, 4096
          %510 = vsyncadd [#allocation15], %s509
          %s511 = sshll.u32 [#allocation14], 4
          %s512 = int_to_ptr.vmem [resolvable:$true] %s511
          %517 = dma.hbm_to_vmem [thread:$0]  %s12, 4096, %s512, [#allocation15], 256, 256, 16
        $region60: #{tpu_custom_call.1} parent=11 // pred_fallthru
          _
        // Predicated region
        $region61: #{tpu_custom_call.1} parent=11 // pred_check
          %p518 = pneg %p331
        $region62: #{tpu_custom_call.1} parent=11 // pred_check_branch
          %520 = sbr.rel (%p518) target = $region64
        $region63: #{tpu_custom_call.1} parent=11 // pred_region
          _
        $region64: #{tpu_custom_call.1} parent=11 // pred_fallthru
          _
        // Predicated region
        $region65: #{tpu_custom_call.1} parent=11 // pred_check
          %p521 = pneg %p352
        $region66: #{tpu_custom_call.1} parent=11 // pred_check_branch
          %523 = sbr.rel (%p521) target = $region68
        $region67: #{tpu_custom_call.1} parent=11 // pred_region
          %s525 = ssub.s32 4096, 4096
          %526 = vsyncadd [#allocation15], %s525
          %s527 = sshll.u32 [#allocation16], 4
          %s528 = int_to_ptr.vmem [resolvable:$true] %s527
          %533 = dma.hbm_to_vmem [thread:$0]  %s14, 4096, %s528, [#allocation15], 64, 64, 4
        $region68: #{tpu_custom_call.1} parent=11 // pred_fallthru
          _
        // Predicated region
        $region69: #{tpu_custom_call.1} parent=11 // pred_check
          %p534 = pneg %p373
        $region70: #{tpu_custom_call.1} parent=11 // pred_check_branch
          %536 = sbr.rel (%p534) target = $region72
        $region71: #{tpu_custom_call.1} parent=11 // pred_region
          _
        $region72: #{tpu_custom_call.1} parent=11 // pred_fallthru
          _
      $region12: #{tpu_custom_call.1} parent=5 // pred_fallthru
        _
      %p537 = scmp.lt.s32.totalorder %s32, 2
      // Predicated region
      $region73: #{tpu_custom_call.1} parent=5 // pred_check
        %p538 = pneg %p537
      $region74: #{tpu_custom_call.1} parent=5 // pred_check_branch
        %540 = sbr.rel (%p538) target = $region76
      $region75: #{tpu_custom_call.1} parent=5 // pred_region
        // Predicated region
        $region77: #{tpu_custom_call.1} parent=75 // pred_check
          %p541 = pneg %p52
        $region78: #{tpu_custom_call.1} parent=75 // pred_check_branch
          %543 = sbr.rel (%p541) target = $region80
        $region79: #{tpu_custom_call.1} parent=75 // pred_region
          %s544 = sand.u32 %s42, 1
          %s545 = scalar_lea.sflag [#allocation3], %s544
          %s546 = sand.u32 %s42, 1
          %s547 = smul.addr %s546, 32
          %s548 = scalar_lea.vmem [#allocation2], %s547
          %s549 = smul.u32 2, %s32
          %s551 = ssub.s32 512, 512
          %552 = vsyncadd %s545, %s551
          %s553 = smul.addr %s549, 2
          %s554 = smul.addr %s553, 128
          %s555 = scalar_lea.hbm %s0, %s554
          %s556 = sshll.u32 %s548, 4
          %s557 = int_to_ptr.vmem [resolvable:$true] %s556
          %562 = dma.hbm_to_vmem [thread:$0]  %s555, 512, %s557, %s545, 128, 128, 8
        $region80: #{tpu_custom_call.1} parent=75 // pred_fallthru
          _
      $region76: #{tpu_custom_call.1} parent=5 // pred_fallthru
        _
      %p563 = scmp.le.s32.totalorder 1, %s32
      %p564 = scmp.lt.s32.totalorder %s32, 3
      %p565 = pnand %p563, %p564
      %p566 = pneg %p565
      // Predicated region
      $region81: #{tpu_custom_call.1} parent=5 // pred_check
        _
      $region82: #{tpu_custom_call.1} parent=5 // pred_check_branch
        %568 = sbr.rel (%p565) target = $region84
      $region83: #{tpu_custom_call.1} parent=5 // pred_region
        %s569 = ssub.s32 %s32, 1
        %s570 = sand.u32 %s45, 1
        %s571 = scalar_lea.sflag [#allocation3], %s570
        %s572 = sand.u32 %s45, 1
        %s573 = smul.addr %s572, 32
        %s574 = scalar_lea.vmem [#allocation2], %s573
        // Predicated region
        $region85: #{tpu_custom_call.1} parent=83 // pred_check
          %p575 = pneg %p58
        $region86: #{tpu_custom_call.1} parent=83 // pred_check_branch
          %577 = sbr.rel (%p575) target = $region88
        $region87: #{tpu_custom_call.1} parent=83 // pred_region
          %578 = dma.done %s571, 512
        $region88: #{tpu_custom_call.1} parent=83 // pred_fallthru
          _
        // Predicated region
        $region89: #{tpu_custom_call.1} parent=83 // pred_check
          %p579 = pneg %p79
        $region90: #{tpu_custom_call.1} parent=83 // pred_check_branch
          %581 = sbr.rel (%p579) target = $region92
        $region91: #{tpu_custom_call.1} parent=83 // pred_region
          %582 = dma.done [#allocation6], 512
        $region92: #{tpu_custom_call.1} parent=83 // pred_fallthru
          _
        // Predicated region
        $region93: #{tpu_custom_call.1} parent=83 // pred_check
          %p583 = pneg %p100
        $region94: #{tpu_custom_call.1} parent=83 // pred_check_branch
          %585 = sbr.rel (%p583) target = $region96
        $region95: #{tpu_custom_call.1} parent=83 // pred_region
          %586 = dma.done [#allocation6], 512
        $region96: #{tpu_custom_call.1} parent=83 // pred_fallthru
          _
        // Predicated region
        $region97: #{tpu_custom_call.1} parent=83 // pred_check
          %p587 = pneg %p121
        $region98: #{tpu_custom_call.1} parent=83 // pred_check_branch
          %589 = sbr.rel (%p587) target = $region100
        $region99: #{tpu_custom_call.1} parent=83 // pred_region
          %590 = dma.done [#allocation9], 512
        $region100: #{tpu_custom_call.1} parent=83 // pred_fallthru
          _
        // Predicated region
        $region101: #{tpu_custom_call.1} parent=83 // pred_check
          %p591 = pneg %p142
        $region102: #{tpu_custom_call.1} parent=83 // pred_check_branch
          %593 = sbr.rel (%p591) target = $region104
        $region103: #{tpu_custom_call.1} parent=83 // pred_region
          %594 = dma.done [#allocation9], 16
        $region104: #{tpu_custom_call.1} parent=83 // pred_fallthru
          _
        // Predicated region
        $region105: #{tpu_custom_call.1} parent=83 // pred_check
          %p595 = pneg %p184
        $region106: #{tpu_custom_call.1} parent=83 // pred_check_branch
          %597 = sbr.rel (%p595) target = $region108
        $region107: #{tpu_custom_call.1} parent=83 // pred_region
          %598 = dma.done [#allocation12], 3072
        $region108: #{tpu_custom_call.1} parent=83 // pred_fallthru
          _
        // Predicated region
        $region109: #{tpu_custom_call.1} parent=83 // pred_check
          %p599 = pneg %p226
        $region110: #{tpu_custom_call.1} parent=83 // pred_check_branch
          %601 = sbr.rel (%p599) target = $region112
        $region111: #{tpu_custom_call.1} parent=83 // pred_region
          %602 = dma.done [#allocation12], 1024
        $region112: #{tpu_custom_call.1} parent=83 // pred_fallthru
          _
        // Predicated region
        $region113: #{tpu_custom_call.1} parent=83 // pred_check
          %p603 = pneg %p310
        $region114: #{tpu_custom_call.1} parent=83 // pred_check_branch
          %605 = sbr.rel (%p603) target = $region116
        $region115: #{tpu_custom_call.1} parent=83 // pred_region
          %606 = dma.done [#allocation15], 4096
        $region116: #{tpu_custom_call.1} parent=83 // pred_fallthru
          _
        // Predicated region
        $region117: #{tpu_custom_call.1} parent=83 // pred_check
          %p607 = pneg %p352
        $region118: #{tpu_custom_call.1} parent=83 // pred_check_branch
          %609 = sbr.rel (%p607) target = $region120
        $region119: #{tpu_custom_call.1} parent=83 // pred_region
          %610 = dma.done [#allocation15], 4096
        $region120: #{tpu_custom_call.1} parent=83 // pred_fallthru
          _
        %s611 = sand.u32 %s45, 1
        %s612 = scalar_lea.sflag [#allocation3], %s611
        %s613 = sand.u32 %s45, 1
        %s614 = smul.addr %s613, 32
        %s615 = scalar_lea.vmem [#allocation2], %s614
        %p616 = pneg %p58
        %p617 = pneg %p55
        %p618 = pneg %p79
        %p619 = pneg %p76
        %p620 = pneg %p100
        %p621 = pneg %p97
        %p622 = pneg %p121
        %p623 = pneg %p118
        %p624 = pneg %p142
        %p625 = pneg %p139
        %p626 = pneg %p163
        %p627 = pneg %p160
        %p628 = pneg %p184
        %p629 = pneg %p181
        %p630 = pneg %p205
        %p631 = pneg %p202
        %p632 = pneg %p226
        %p633 = pneg %p223
        %p634 = pneg %p247
        %p635 = pneg %p244
        %p636 = pneg %p268
        %p637 = pneg %p265
        %p638 = pneg %p289
        %p639 = pneg %p286
        %p640 = pneg %p310
        %p641 = pneg %p307
        %p642 = pneg %p331
        %p643 = pneg %p328
        %p644 = pneg %p352
        %p645 = pneg %p349
        %p646 = pneg %p373
        %p647 = pneg %p370
        %p648 = pneg %p399
        %p649 = pneg %p396
        %s650 = sand.u32 %s386, 1
        %s651 = scalar_lea.sflag [#allocation4], %s650
        %s652 = sand.u32 %s386, 1
        %s653 = smul.addr %s652, 32
        %s654 = scalar_lea.vmem [#allocation17], %s653
        %s655 = smul.u32 2, %s37
        %s656 = smul.u32 2, %s37
        %v658 = vld [vmem:[%s574] sm:$0xff]
        %v659 = vld [vmem:[%s574 + $0x8] sm:$0xff]
        %v660 = vld [vmem:[%s574 + $0x10] sm:$0xff]
        %v661 = vld [vmem:[%s574 + $0x18] sm:$0xff]
        %v662 = vld [vmem:[#allocation5] sm:$0xff]
        %v663 = vld [vmem:[#allocation5 + $0x8] sm:$0xff]
        %v664 = vld [vmem:[#allocation5 + $0x10] sm:$0xff]
        %v665 = vld [vmem:[#allocation5 + $0x18] sm:$0xff]
        %v666 = vld [vmem:[#allocation7] sm:$0xff]
        %v667 = vld [vmem:[#allocation7 + $0x8] sm:$0xff]
        %v668 = vld [vmem:[#allocation7 + $0x10] sm:$0xff]
        %v669 = vld [vmem:[#allocation7 + $0x18] sm:$0xff]
        %v670 = vld [vmem:[#allocation8] sm:$0xff]
        %v671 = vld [vmem:[#allocation8 + $0x8] sm:$0xff]
        %v672 = vld [vmem:[#allocation8 + $0x10] sm:$0xff]
        %v673 = vld [vmem:[#allocation8 + $0x18] sm:$0xff]
        %v674 = vld [vmem:[#allocation10] sm:$0x1]
        %v675 = vld [vmem:[%s5] sm:$0x1]
        %676 = vadd.xlane.f32.xlu0 %v658
        %v677 = vpop.xlane.xlu0 %676
        %678 = vadd.xlane.f32.xlu0 %v659
        %v679 = vpop.xlane.xlu0 %678
        %680 = vadd.xlane.f32.xlu0 %v660
        %v681 = vpop.xlane.xlu0 %680
        %682 = vadd.xlane.f32.xlu0 %v661
        %v683 = vpop.xlane.xlu0 %682
        %v684 = vrcp.pop 128.0
        %v685 = vmul.f32 %v677, %v684
        %v686 = vmul.f32 %v679, %v684
        %v687 = vmul.f32 %v681, %v684
        %v688 = vmul.f32 %v683, %v684
        %v689 = vsub.f32 %v658, %v685
        %v690 = vsub.f32 %v659, %v686
        %v691 = vsub.f32 %v660, %v687
        %v692 = vsub.f32 %v661, %v688
        %v693 = vmul.f32 %v689, %v689
        %v694 = vmul.f32 %v690, %v690
        %v695 = vmul.f32 %v691, %v691
        %v696 = vmul.f32 %v692, %v692
        %697 = vadd.xlane.f32.xlu0 %v693
        %v698 = vpop.xlane.xlu0 %697
        %699 = vadd.xlane.f32.xlu0 %v694
        %v700 = vpop.xlane.xlu0 %699
        %701 = vadd.xlane.f32.xlu0 %v695
        %v702 = vpop.xlane.xlu0 %701
        %703 = vadd.xlane.f32.xlu0 %v696
        %v704 = vpop.xlane.xlu0 %703
        %v705 = vmul.f32 %v698, %v684
        %v706 = vmul.f32 %v700, %v684
        %v707 = vmul.f32 %v702, %v684
        %v708 = vmul.f32 %v704, %v684
        %v709 = vadd.f32 %v705, 1e-05
        %v710 = vadd.f32 %v706, 1e-05
        %v711 = vadd.f32 %v707, 1e-05
        %v712 = vadd.f32 %v708, 1e-05
        %v713 = vrsqrt.pop %v709
        %v714 = vrsqrt.pop %v710
        %v715 = vrsqrt.pop %v711
        %v716 = vrsqrt.pop %v712
        %v717 = vmul.f32 %v689, %v713
        %v718 = vmul.f32 %v690, %v714
        %v719 = vmul.f32 %v691, %v715
        %v720 = vmul.f32 %v692, %v716
        %v722 = vlaneseq
        %v723 = vshrl.u32 %v722, 7
        %v724 = vsub.s32 0, %v723
        %v725 = vrot.slane %v674, %v724
        %v727 = vmul.f32 %v717, %v725
        %v728 = vmul.f32 %v718, %v725
        %v729 = vmul.f32 %v719, %v725
        %v730 = vmul.f32 %v720, %v725
        %v732 = vlaneseq
        %v733 = vshrl.u32 %v732, 7
        %v734 = vsub.s32 0, %v733
        %v735 = vrot.slane %v675, %v734
        %v737 = vadd.f32 %v727, %v735
        %v738 = vadd.f32 %v728, %v735
        %v739 = vadd.f32 %v729, %v735
        %v740 = vadd.f32 %v730, %v735
        %v741 = vpack.c.bf16 %v738, %v737
        %v742 = vpack.c.bf16 %v740, %v739
        %v743 = vld [vmem:[#allocation11] sm:$0xff]
        %v744 = vld [vmem:[#allocation11 + $0x8] sm:$0xf]
        %v745 = vld [vmem:[#allocation11 + $0xc] sm:$0xff]
        %v746 = vld [vmem:[#allocation11 + $0x14] sm:$0xf]
        %v747 = vld [vmem:[#allocation11 + $0x18] sm:$0xff]
        %v748 = vld [vmem:[#allocation11 + $0x20] sm:$0xf]
        %v749 = vld [vmem:[#allocation11 + $0x24] sm:$0xff]
        %v750 = vld [vmem:[#allocation11 + $0x2c] sm:$0xf]
        %v751 = vld [vmem:[#allocation11 + $0x30] sm:$0xff]
        %v752 = vld [vmem:[#allocation11 + $0x38] sm:$0xf]
        %v753 = vld [vmem:[#allocation11 + $0x3c] sm:$0xff]
        %v754 = vld [vmem:[#allocation11 + $0x44] sm:$0xf]
        %v755 = vld [vmem:[#allocation11 + $0x48] sm:$0xff]
        %v756 = vld [vmem:[#allocation11 + $0x50] sm:$0xf]
        %v757 = vld [vmem:[#allocation11 + $0x54] sm:$0xff]
        %v758 = vld [vmem:[#allocation11 + $0x5c] sm:$0xf]
        %v759 = vld [vmem:[#allocation11 + $0x60] sm:$0xff]
        %v760 = vld [vmem:[#allocation11 + $0x68] sm:$0xf]
        %v761 = vld [vmem:[#allocation11 + $0x6c] sm:$0xff]
        %v762 = vld [vmem:[#allocation11 + $0x74] sm:$0xf]
        %v763 = vld [vmem:[#allocation11 + $0x78] sm:$0xff]
        %v764 = vld [vmem:[#allocation11 + $0x80] sm:$0xf]
        %v765 = vld [vmem:[#allocation11 + $0x84] sm:$0xff]
        %v766 = vld [vmem:[#allocation11 + $0x8c] sm:$0xf]
        %v767 = vld [vmem:[#allocation11 + $0x90] sm:$0xff]
        %v768 = vld [vmem:[#allocation11 + $0x98] sm:$0xf]
        %v769 = vld [vmem:[#allocation11 + $0x9c] sm:$0xff]
        %v770 = vld [vmem:[#allocation11 + $0xa4] sm:$0xf]
        %v771 = vld [vmem:[#allocation11 + $0xa8] sm:$0xff]
        %v772 = vld [vmem:[#allocation11 + $0xb0] sm:$0xf]
        %v773 = vld [vmem:[#allocation11 + $0xb4] sm:$0xff]
        %v774 = vld [vmem:[#allocation11 + $0xbc] sm:$0xf]
        %v775 = vld [vmem:[%s7] sm:$0x7]
        %v777 = vlaneseq
        %v778 = vshrl.u32 %v777, 7
        %v779 = vsub.s32 0, %v778
        %v780 = vrot.slane %v775, %v779
        %v781 = vlaneseq
        %v782 = vshrl.u32 %v781, 7
        %v783 = vsub.s32 1, %v782
        %v784 = vrot.slane %v775, %v783
        %v785 = vlaneseq
        %v786 = vshrl.u32 %v785, 7
        %v787 = vsub.s32 2, %v786
        %v788 = vrot.slane %v775, %v787
        %v824 = vunpack.c.l.b16 %v743
        %v825 = vunpack.c.h.b16 %v743
        %v826 = vunpack.c.l.b16 %v744
        %v827 = vunpack.c.l.b16 %v745
        %v828 = vunpack.c.h.b16 %v745
        %v829 = vunpack.c.l.b16 %v746
        %v830 = vunpack.c.l.b16 %v747
        %v831 = vunpack.c.h.b16 %v747
        %v832 = vunpack.c.l.b16 %v748
        %v833 = vunpack.c.l.b16 %v749
        %v834 = vunpack.c.h.b16 %v749
        %v835 = vunpack.c.l.b16 %v750
        %v836 = vunpack.c.l.b16 %v751
        %v837 = vunpack.c.h.b16 %v751
        %v838 = vunpack.c.l.b16 %v752
        %v839 = vunpack.c.l.b16 %v753
        %v840 = vunpack.c.h.b16 %v753
        %v841 = vunpack.c.l.b16 %v754
        %v842 = vunpack.c.l.b16 %v755
        %v843 = vunpack.c.h.b16 %v755
        %v844 = vunpack.c.l.b16 %v756
        %v845 = vunpack.c.l.b16 %v757
        %v846 = vunpack.c.h.b16 %v757
        %v847 = vunpack.c.l.b16 %v758
        %v848 = vunpack.c.l.b16 %v759
        %v849 = vunpack.c.h.b16 %v759
        %v850 = vunpack.c.l.b16 %v760
        %v851 = vunpack.c.l.b16 %v761
        %v852 = vunpack.c.h.b16 %v761
        %v853 = vunpack.c.l.b16 %v762
        %v854 = vunpack.c.l.b16 %v763
        %v855 = vunpack.c.h.b16 %v763
        %v856 = vunpack.c.l.b16 %v764
        %v857 = vunpack.c.l.b16 %v765
        %v858 = vunpack.c.h.b16 %v765
        %v859 = vunpack.c.l.b16 %v766
        %v860 = vunpack.c.l.b16 %v767
        %v861 = vunpack.c.h.b16 %v767
        %v862 = vunpack.c.l.b16 %v768
        %v863 = vunpack.c.l.b16 %v769
        %v864 = vunpack.c.h.b16 %v769
        %v865 = vunpack.c.l.b16 %v770
        %v866 = vunpack.c.l.b16 %v771
        %v867 = vunpack.c.h.b16 %v771
        %v868 = vunpack.c.l.b16 %v772
        %v869 = vunpack.c.l.b16 %v773
        %v870 = vunpack.c.h.b16 %v773
        %v871 = vunpack.c.l.b16 %v774
        %v872 = vpack.c.b16 %v827, %v824
        %v873 = vpack.c.b16 %v828, %v825
        %v874 = vpack.c.b16 %v829, %v826
        %v875 = vpack.c.b16 %v833, %v830
        %v876 = vpack.c.b16 %v834, %v831
        %v877 = vpack.c.b16 %v835, %v832
        %v878 = vpack.c.b16 %v839, %v836
        %v879 = vpack.c.b16 %v840, %v837
        %v880 = vpack.c.b16 %v841, %v838
        %v881 = vpack.c.b16 %v845, %v842
        %v882 = vpack.c.b16 %v846, %v843
        %v883 = vpack.c.b16 %v847, %v844
        %v884 = vpack.c.b16 %v851, %v848
        %v885 = vpack.c.b16 %v852, %v849
        %v886 = vpack.c.b16 %v853, %v850
        %v887 = vpack.c.b16 %v857, %v854
        %v888 = vpack.c.b16 %v858, %v855
        %v889 = vpack.c.b16 %v859, %v856
        %v890 = vpack.c.b16 %v863, %v860
        %v891 = vpack.c.b16 %v864, %v861
        %v892 = vpack.c.b16 %v865, %v862
        %v893 = vpack.c.b16 %v869, %v866
        %v894 = vpack.c.b16 %v870, %v867
        %v895 = vpack.c.b16 %v871, %v868
        %920 = vmatprep.subr.bf16.mxu0 %v894
        %921 = vmatpush1.bf16.msra.mxu0 %v893
        %922 = vmatprep.subr.bf16.mxu0 %v891
        %923 = vmatpush1.bf16.msra.mxu0 %v890
        %924 = vmatprep.subr.bf16.mxu0 %v888
        %925 = vmatpush1.bf16.msra.mxu0 %v887
        %926 = vmatprep.subr.bf16.mxu0 %v885
        %927 = vmatpush1.bf16.msra.mxu0 %v884
        %928 = vmatprep.subr.bf16.mxu0 %v882
        %929 = vmatpush1.bf16.msra.mxu0 %v881
        %930 = vmatprep.subr.bf16.mxu0 %v879
        %931 = vmatpush1.bf16.msra.mxu0 %v878
        %932 = vmatprep.subr.bf16.mxu0 %v876
        %933 = vmatpush1.bf16.msra.mxu0 %v875
        %934 = vmatprep.subr.bf16.mxu0 %v873
        %935 = vmatpush1.bf16.msra.mxu0 %v872
        %936 = vmatprep.subr.bf16.mxu0 0
        %937 = vmatpush2.bf16.msra.mxu0 0
        %938 = vmatprep.subr.bf16.mxu0 0
        %939 = vmatpush2.bf16.msra.mxu0 0
        %940 = vmatprep.subr.bf16.mxu0 0
        %941 = vmatpush2.bf16.msra.mxu0 0
        %942 = vmatprep.subr.bf16.mxu0 0
        %943 = vmatpush2.bf16.msra.mxu0 0
        %944 = vmatprep.subr.bf16.mxu0 0
        %945 = vmatpush2.bf16.msra.mxu0 0
        %946 = vmatprep.subr.bf16.mxu0 0
        %947 = vmatpush2.bf16.msra.mxu0 0
        %948 = vmatprep.subr.bf16.mxu0 0
        %949 = vmatpush2.bf16.msra.mxu0 0
        %950 = vmatprep.subr.bf16.mxu0 0
        %951 = vmatpush2.bf16.msra.mxu0 0
        %952 = vmatprep.mubr.bf16.mxu0 0
        %953 = vmatmul.mubr.bf16.gmra.mxu0 %v741
        %v954 = vpop.f32.mrf.mxu0
        %v955 = vadd.f32 %v780, %v954
        %v956 = vpop.f32.mrf.mxu0
        %v957 = vadd.f32 %v784, %v956
        %v958 = vpop.f32.mrf.mxu0
        %v959 = vadd.f32 %v780, %v958
        %v960 = vpop.f32.mrf.mxu0
        %v961 = vadd.f32 %v784, %v960
        %962 = vmatprep.mubr.bf16.mxu0 0
        %963 = vmatmul.mubr.bf16.gmra.mxu0 %v742
        %v964 = vpop.f32.mrf.mxu0
        %v965 = vadd.f32 %v780, %v964
        %v966 = vpop.f32.mrf.mxu0
        %v967 = vadd.f32 %v784, %v966
        %v968 = vpop.f32.mrf.mxu0
        %v969 = vadd.f32 %v780, %v968
        %v970 = vpop.f32.mrf.mxu0
        %v971 = vadd.f32 %v784, %v970
        %972 = vdwg.mxu0
        %973 = vmatprep.subr.bf16.mxu0 0
        %974 = vmatpush1.bf16.msra.mxu0 %v895
        %975 = vmatprep.subr.bf16.mxu0 0
        %976 = vmatpush1.bf16.msra.mxu0 %v892
        %977 = vmatprep.subr.bf16.mxu0 0
        %978 = vmatpush1.bf16.msra.mxu0 %v889
        %979 = vmatprep.subr.bf16.mxu0 0
        %980 = vmatpush1.bf16.msra.mxu0 %v886
        %981 = vmatprep.subr.bf16.mxu0 0
        %982 = vmatpush1.bf16.msra.mxu0 %v883
        %983 = vmatprep.subr.bf16.mxu0 0
        %984 = vmatpush1.bf16.msra.mxu0 %v880
        %985 = vmatprep.subr.bf16.mxu0 0
        %986 = vmatpush1.bf16.msra.mxu0 %v877
        %987 = vmatprep.subr.bf16.mxu0 0
        %988 = vmatpush1.bf16.msra.mxu0 %v874
        %989 = vmatprep.subr.bf16.mxu0 0
        %990 = vmatpush2.bf16.msra.mxu0 0
        %991 = vmatprep.subr.bf16.mxu0 0
        %992 = vmatpush2.bf16.msra.mxu0 0
        %993 = vmatprep.subr.bf16.mxu0 0
        %994 = vmatpush2.bf16.msra.mxu0 0
        %995 = vmatprep.subr.bf16.mxu0 0
        %996 = vmatpush2.bf16.msra.mxu0 0
        %997 = vmatprep.subr.bf16.mxu0 0
        %998 = vmatpush2.bf16.msra.mxu0 0
        %999 = vmatprep.subr.bf16.mxu0 0
        %1000 = vmatpush2.bf16.msra.mxu0 0
        %1001 = vmatprep.subr.bf16.mxu0 0
        %1002 = vmatpush2.bf16.msra.mxu0 0
        %1003 = vmatprep.subr.bf16.mxu0 0
        %1004 = vmatpush2.bf16.msra.mxu0 0
        %1005 = vmatprep.mubr.bf16.mxu0 0
        %1006 = vmatmul.mubr.bf16.gmra.mxu0 %v741
        %v1007 = vpop.f32.mrf.mxu0
        %v1008 = vadd.f32 %v788, %v1007
        %v1009 = vpop.f32.mrf.mxu0
        %v1010 = vpop.f32.mrf.mxu0
        %v1011 = vadd.f32 %v788, %v1010
        %v1012 = vpop.f32.mrf.mxu0
        %1013 = vmatprep.mubr.bf16.mxu0 0
        %1014 = vmatmul.mubr.bf16.gmra.mxu0 %v742
        %v1015 = vpop.f32.mrf.mxu0
        %v1016 = vadd.f32 %v788, %v1015
        %v1017 = vpop.f32.mrf.mxu0
        %v1018 = vpop.f32.mrf.mxu0
        %v1019 = vadd.f32 %v788, %v1018
        %v1020 = vpop.f32.mrf.mxu0
        %1021 = vdwg.mxu0
        %1022 = vrot.lane.b32.xlu0 %v955, 120
        %v1023 = vpop.permute.xlu0 %1022
        %1024 = vrot.lane.b32.xlu0 %v959, 120
        %v1025 = vpop.permute.xlu0 %1024
        %1026 = vrot.lane.b32.xlu0 %v965, 120
        %v1027 = vpop.permute.xlu0 %1026
        %1028 = vrot.lane.b32.xlu0 %v969, 120
        %v1029 = vpop.permute.xlu0 %1028
        %1030 = vrot.lane.b32.xlu0 %v955, 8
        %v1031 = vpop.permute.xlu0 %1030
        %1032 = vrot.lane.b32.xlu0 %v959, 8
        %v1033 = vpop.permute.xlu0 %1032
        %1034 = vrot.lane.b32.xlu0 %v965, 8
        %v1035 = vpop.permute.xlu0 %1034
        %1036 = vrot.lane.b32.xlu0 %v969, 8
        %v1037 = vpop.permute.xlu0 %1036
        %v1038 = vmul.f32 %v955, %v662
        %v1039 = vmul.f32 %v959, %v663
        %v1040 = vmul.f32 %v965, %v664
        %v1041 = vmul.f32 %v969, %v665
        %v1042 = vmul.f32 %v1023, %v666
        %v1043 = vmul.f32 %v1025, %v667
        %v1044 = vmul.f32 %v1027, %v668
        %v1045 = vmul.f32 %v1029, %v669
        %v1046 = vadd.f32 %v1038, %v1042
        %v1047 = vadd.f32 %v1039, %v1043
        %v1048 = vadd.f32 %v1040, %v1044
        %v1049 = vadd.f32 %v1041, %v1045
        %v1050 = vmul.f32 %v1031, %v670
        %v1051 = vmul.f32 %v1033, %v671
        %v1052 = vmul.f32 %v1035, %v672
        %v1053 = vmul.f32 %v1037, %v673
        %v1054 = vadd.f32 %v1046, %v1050
        %v1055 = vadd.f32 %v1047, %v1051
        %v1056 = vadd.f32 %v1048, %v1052
        %v1057 = vadd.f32 %v1049, %v1053
        %1058 = vrot.lane.b32.xlu0 %v957, 120
        %v1059 = vpop.permute.xlu0 %1058
        %1060 = vrot.lane.b32.xlu0 %v961, 120
        %v1061 = vpop.permute.xlu0 %1060
        %1062 = vrot.lane.b32.xlu0 %v967, 120
        %v1063 = vpop.permute.xlu0 %1062
        %1064 = vrot.lane.b32.xlu0 %v971, 120
        %v1065 = vpop.permute.xlu0 %1064
        %1066 = vrot.lane.b32.xlu0 %v957, 8
        %v1067 = vpop.permute.xlu0 %1066
        %1068 = vrot.lane.b32.xlu0 %v961, 8
        %v1069 = vpop.permute.xlu0 %1068
        %1070 = vrot.lane.b32.xlu0 %v967, 8
        %v1071 = vpop.permute.xlu0 %1070
        %1072 = vrot.lane.b32.xlu0 %v971, 8
        %v1073 = vpop.permute.xlu0 %1072
        %v1074 = vmul.f32 %v957, %v662
        %v1075 = vmul.f32 %v961, %v663
        %v1076 = vmul.f32 %v967, %v664
        %v1077 = vmul.f32 %v971, %v665
        %v1078 = vmul.f32 %v1059, %v666
        %v1079 = vmul.f32 %v1061, %v667
        %v1080 = vmul.f32 %v1063, %v668
        %v1081 = vmul.f32 %v1065, %v669
        %v1082 = vadd.f32 %v1074, %v1078
        %v1083 = vadd.f32 %v1075, %v1079
        %v1084 = vadd.f32 %v1076, %v1080
        %v1085 = vadd.f32 %v1077, %v1081
        %v1086 = vmul.f32 %v1067, %v670
        %v1087 = vmul.f32 %v1069, %v671
        %v1088 = vmul.f32 %v1071, %v672
        %v1089 = vmul.f32 %v1073, %v673
        %v1090 = vadd.f32 %v1082, %v1086
        %v1091 = vadd.f32 %v1083, %v1087
        %v1092 = vadd.f32 %v1084, %v1088
        %v1093 = vadd.f32 %v1085, %v1089
        %v1094 = vlaneseq
        %v1095 = vshrl.u32 %v1094, 7
        %v1096 = vadd.s32 %v1095, 8
        %v1097 = vlaneseq
        %v1098 = vand.u32 %v1097, 127
        %vm1099 = vcmp.ge.s32.totalorder %v1095, %v1098
        %vm1100 = vcmp.ge.s32.totalorder %v1096, %v1098
        %v1101 = vpack.c.bf16 %v1055, %v1054
        %v1102 = vpack.c.bf16 %v1057, %v1056
        %v1103 = vpack.c.bf16 %v1091, %v1090
        %v1104 = vpack.c.bf16 %v1093, %v1092
        %v1105 = vpack.c.bf16 %v1011, %v1008
        %v1106 = vpack.c.bf16 %v1019, %v1016
        %vm1107 = vcmask 130048
        %v1109 = vsel %vm1107, %v1101, 0
        %v1112 = vsel %vm1107, %v1103, 0
        %1114 = vmatprep.subr.bf16.mxu0 0
        %1115 = vmatpush1.bf16.xpose.msra.mxu0 0
        %1116 = vmatprep.subr.bf16.mxu0 0
        %1117 = vmatpush1.bf16.xpose.msra.mxu0 0
        %1118 = vmatprep.subr.bf16.mxu0 0
        %1119 = vmatpush1.bf16.xpose.msra.mxu0 0
        %1120 = vmatprep.subr.bf16.mxu0 0
        %1121 = vmatpush1.bf16.xpose.msra.mxu0 0
        %1122 = vmatprep.subr.bf16.mxu0 0
        %1123 = vmatpush1.bf16.xpose.msra.mxu0 0
        %1124 = vmatprep.subr.bf16.mxu0 0
        %1125 = vmatpush1.bf16.xpose.msra.mxu0 0
        %1126 = vmatprep.subr.bf16.mxu0 0
        %1127 = vmatpush1.bf16.xpose.msra.mxu0 0
        %1128 = vmatprep.subr.bf16.mxu0 0
        %1129 = vmatpush1.bf16.xpose.msra.mxu0 %v1112
        %1130 = vmatprep.subr.bf16.mxu0 0
        %1131 = vmatpush2.bf16.xpose.msra.mxu0 0
        %1132 = vmatprep.subr.bf16.mxu0 0
        %1133 = vmatpush2.bf16.xpose.msra.mxu0 0
        %1134 = vmatprep.subr.bf16.mxu0 0
        %1135 = vmatpush2.bf16.xpose.msra.mxu0 0
        %1136 = vmatprep.subr.bf16.mxu0 0
        %1137 = vmatpush2.bf16.xpose.msra.mxu0 0
        %1138 = vmatprep.subr.bf16.mxu0 0
        %1139 = vmatpush2.bf16.xpose.msra.mxu0 0
        %1140 = vmatprep.subr.bf16.mxu0 0
        %1141 = vmatpush2.bf16.xpose.msra.mxu0 0
        %1142 = vmatprep.subr.bf16.mxu0 0
        %1143 = vmatpush2.bf16.xpose.msra.mxu0 0
        %1144 = vmatprep.subr.bf16.mxu0 0
        %1145 = vmatpush2.bf16.xpose.msra.mxu0 0
        %1146 = vmatprep.mubr.bf16.mxu0 0
        %1147 = vmatmul.mubr.bf16.gmra.mxu0 %v1109
        %v1148 = vpop.f32.mrf.mxu0
        %v1149 = vadd.f32 0.0, %v1148
        %v1150 = vpop.f32.mrf.mxu0
        %v1151 = vpop.f32.mrf.mxu0
        %v1152 = vadd.f32 0.0, %v1151
        %v1153 = vpop.f32.mrf.mxu0
        %1154 = vdwg.mxu0
        %v1156 = vsel %vm1107, %v1102, 0
        %v1159 = vsel %vm1107, %v1104, 0
        %1161 = vmatprep.subr.bf16.mxu0 0
        %1162 = vmatpush1.bf16.xpose.msra.mxu0 0
        %1163 = vmatprep.subr.bf16.mxu0 0
        %1164 = vmatpush1.bf16.xpose.msra.mxu0 0
        %1165 = vmatprep.subr.bf16.mxu0 0
        %1166 = vmatpush1.bf16.xpose.msra.mxu0 0
        %1167 = vmatprep.subr.bf16.mxu0 0
        %1168 = vmatpush1.bf16.xpose.msra.mxu0 0
        %1169 = vmatprep.subr.bf16.mxu0 0
        %1170 = vmatpush1.bf16.xpose.msra.mxu0 0
        %1171 = vmatprep.subr.bf16.mxu0 0
        %1172 = vmatpush1.bf16.xpose.msra.mxu0 0
        %1173 = vmatprep.subr.bf16.mxu0 0
        %1174 = vmatpush1.bf16.xpose.msra.mxu0 0
        %1175 = vmatprep.subr.bf16.mxu0 0
        %1176 = vmatpush1.bf16.xpose.msra.mxu0 %v1159
        %1177 = vmatprep.subr.bf16.mxu0 0
        %1178 = vmatpush2.bf16.xpose.msra.mxu0 0
        %1179 = vmatprep.subr.bf16.mxu0 0
        %1180 = vmatpush2.bf16.xpose.msra.mxu0 0
        %1181 = vmatprep.subr.bf16.mxu0 0
        %1182 = vmatpush2.bf16.xpose.msra.mxu0 0
        %1183 = vmatprep.subr.bf16.mxu0 0
        %1184 = vmatpush2.bf16.xpose.msra.mxu0 0
        %1185 = vmatprep.subr.bf16.mxu0 0
        %1186 = vmatpush2.bf16.xpose.msra.mxu0 0
        %1187 = vmatprep.subr.bf16.mxu0 0
        %1188 = vmatpush2.bf16.xpose.msra.mxu0 0
        %1189 = vmatprep.subr.bf16.mxu0 0
        %1190 = vmatpush2.bf16.xpose.msra.mxu0 0
        %1191 = vmatprep.subr.bf16.mxu0 0
        %1192 = vmatpush2.bf16.xpose.msra.mxu0 0
        %1193 = vmatprep.mubr.bf16.mxu0 0
        %1194 = vmatmul.mubr.bf16.gmra.mxu0 %v1156
        %v1195 = vpop.f32.mrf.mxu0
        %v1196 = vadd.f32 0.0, %v1195
        %v1197 = vpop.f32.mrf.mxu0
        %v1198 = vpop.f32.mrf.mxu0
        %v1199 = vadd.f32 0.0, %v1198
        %v1200 = vpop.f32.mrf.mxu0
        %1201 = vdwg.mxu0
        %v1202 = vmul.f32 %v1149, 0.25
        %v1203 = vmul.f32 %v1152, 0.25
        %v1204 = vmul.f32 %v1196, 0.25
        %v1205 = vmul.f32 %v1199, 0.25
        %v1206 = vsel %vm1099, 1, 0
        %v1207 = vsel %vm1100, 1, 0
        %vm1208 = vcmp.eq.s32.totalorder %v1206, 1
        %vm1209 = vcmp.eq.s32.totalorder %v1207, 1
        %v1210 = vsel %vm1208, %v1202, -1e+30
        %v1211 = vsel %vm1209, %v1203, -1e+30
        %v1212 = vsel %vm1208, %v1204, -1e+30
        %v1213 = vsel %vm1209, %v1205, -1e+30
        %v1214 = vsel %vm1107, %v1210, -inf
        %1215 = vmax.xlane.f32.xlu0 %v1214
        %v1216 = vpop.xlane.xlu0 %1215
        %v1217 = vsel %vm1107, %v1211, -inf
        %1218 = vmax.xlane.f32.xlu0 %v1217
        %v1219 = vpop.xlane.xlu0 %1218
        %v1220 = vsel %vm1107, %v1212, -inf
        %1221 = vmax.xlane.f32.xlu0 %v1220
        %v1222 = vpop.xlane.xlu0 %1221
        %v1223 = vsel %vm1107, %v1213, -inf
        %1224 = vmax.xlane.f32.xlu0 %v1223
        %v1225 = vpop.xlane.xlu0 %1224
        %v1226 = vsub.f32 %v1210, %v1216
        %v1227 = vsub.f32 %v1211, %v1219
        %v1228 = vsub.f32 %v1212, %v1222
        %v1229 = vsub.f32 %v1213, %v1225
        %v1230 = vmul.f32 %v1226, 1.442695
        %v1231 = vpow.pop %v1230
        %v1232 = vmul.f32 %v1227, 1.442695
        %v1233 = vpow.pop %v1232
        %v1234 = vmul.f32 %v1228, 1.442695
        %v1235 = vpow.pop %v1234
        %v1236 = vmul.f32 %v1229, 1.442695
        %v1237 = vpow.pop %v1236
        %v1238 = vsel %vm1107, %v1231, 0.0
        %1239 = vadd.xlane.f32.xlu0 %v1238
        %v1240 = vpop.xlane.xlu0 %1239
        %v1241 = vsel %vm1107, %v1233, 0.0
        %1242 = vadd.xlane.f32.xlu0 %v1241
        %v1243 = vpop.xlane.xlu0 %1242
        %v1244 = vsel %vm1107, %v1235, 0.0
        %1245 = vadd.xlane.f32.xlu0 %v1244
        %v1246 = vpop.xlane.xlu0 %1245
        %v1247 = vsel %vm1107, %v1237, 0.0
        %1248 = vadd.xlane.f32.xlu0 %v1247
        %v1249 = vpop.xlane.xlu0 %1248
        %v1250 = vrcp.pop %v1240
        %v1251 = vrcp.pop %v1243
        %v1252 = vrcp.pop %v1246
        %v1253 = vrcp.pop %v1249
        %v1254 = vmul.f32 %v1231, %v1250
        %v1255 = vmul.f32 %v1233, %v1251
        %v1256 = vmul.f32 %v1235, %v1252
        %v1257 = vmul.f32 %v1237, %v1253
        %v1258 = vpack.c.bf16 %v1255, %v1254
        %v1259 = vpack.c.bf16 %v1257, %v1256
        %v1261 = vsel %vm1107, %v1258, 0
        %1263 = vmatprep.subr.bf16.mxu0 0
        %1264 = vmatpush1.bf16.msra.mxu0 0
        %1265 = vmatprep.subr.bf16.mxu0 0
        %1266 = vmatpush1.bf16.msra.mxu0 0
        %1267 = vmatprep.subr.bf16.mxu0 0
        %1268 = vmatpush1.bf16.msra.mxu0 0
        %1269 = vmatprep.subr.bf16.mxu0 0
        %1270 = vmatpush1.bf16.msra.mxu0 0
        %1271 = vmatprep.subr.bf16.mxu0 0
        %1272 = vmatpush1.bf16.msra.mxu0 0
        %1273 = vmatprep.subr.bf16.mxu0 0
        %1274 = vmatpush1.bf16.msra.mxu0 0
        %1275 = vmatprep.subr.bf16.mxu0 0
        %1276 = vmatpush1.bf16.msra.mxu0 0
        %1277 = vmatprep.subr.bf16.mxu0 0
        %1278 = vmatpush1.bf16.msra.mxu0 %v1105
        %1279 = vmatprep.subr.bf16.mxu0 0
        %1280 = vmatpush2.bf16.msra.mxu0 0
        %1281 = vmatprep.subr.bf16.mxu0 0
        %1282 = vmatpush2.bf16.msra.mxu0 0
        %1283 = vmatprep.subr.bf16.mxu0 0
        %1284 = vmatpush2.bf16.msra.mxu0 0
        %1285 = vmatprep.subr.bf16.mxu0 0
        %1286 = vmatpush2.bf16.msra.mxu0 0
        %1287 = vmatprep.subr.bf16.mxu0 0
        %1288 = vmatpush2.bf16.msra.mxu0 0
        %1289 = vmatprep.subr.bf16.mxu0 0
        %1290 = vmatpush2.bf16.msra.mxu0 0
        %1291 = vmatprep.subr.bf16.mxu0 0
        %1292 = vmatpush2.bf16.msra.mxu0 0
        %1293 = vmatprep.subr.bf16.mxu0 0
        %1294 = vmatpush2.bf16.msra.mxu0 0
        %1295 = vmatprep.mubr.bf16.mxu0 0
        %1296 = vmatmul.mubr.bf16.gmra.mxu0 %v1261
        %v1297 = vpop.f32.mrf.mxu0
        %v1298 = vadd.f32 0.0, %v1297
        %v1299 = vpop.f32.mrf.mxu0
        %v1300 = vpop.f32.mrf.mxu0
        %v1301 = vadd.f32 0.0, %v1300
        %v1302 = vpop.f32.mrf.mxu0
        %1303 = vdwg.mxu0
        %v1305 = vsel %vm1107, %v1259, 0
        %1307 = vmatprep.subr.bf16.mxu0 0
        %1308 = vmatpush1.bf16.msra.mxu0 0
        %1309 = vmatprep.subr.bf16.mxu0 0
        %1310 = vmatpush1.bf16.msra.mxu0 0
        %1311 = vmatprep.subr.bf16.mxu0 0
        %1312 = vmatpush1.bf16.msra.mxu0 0
        %1313 = vmatprep.subr.bf16.mxu0 0
        %1314 = vmatpush1.bf16.msra.mxu0 0
        %1315 = vmatprep.subr.bf16.mxu0 0
        %1316 = vmatpush1.bf16.msra.mxu0 0
        %1317 = vmatprep.subr.bf16.mxu0 0
        %1318 = vmatpush1.bf16.msra.mxu0 0
        %1319 = vmatprep.subr.bf16.mxu0 0
        %1320 = vmatpush1.bf16.msra.mxu0 0
        %1321 = vmatprep.subr.bf16.mxu0 0
        %1322 = vmatpush1.bf16.msra.mxu0 %v1106
        %1323 = vmatprep.subr.bf16.mxu0 0
        %1324 = vmatpush2.bf16.msra.mxu0 0
        %1325 = vmatprep.subr.bf16.mxu0 0
        %1326 = vmatpush2.bf16.msra.mxu0 0
        %1327 = vmatprep.subr.bf16.mxu0 0
        %1328 = vmatpush2.bf16.msra.mxu0 0
        %1329 = vmatprep.subr.bf16.mxu0 0
        %1330 = vmatpush2.bf16.msra.mxu0 0
        %1331 = vmatprep.subr.bf16.mxu0 0
        %1332 = vmatpush2.bf16.msra.mxu0 0
        %1333 = vmatprep.subr.bf16.mxu0 0
        %1334 = vmatpush2.bf16.msra.mxu0 0
        %1335 = vmatprep.subr.bf16.mxu0 0
        %1336 = vmatpush2.bf16.msra.mxu0 0
        %1337 = vmatprep.subr.bf16.mxu0 0
        %1338 = vmatpush2.bf16.msra.mxu0 0
        %1339 = vmatprep.mubr.bf16.mxu0 0
        %1340 = vmatmul.mubr.bf16.gmra.mxu0 %v1305
        %v1341 = vpop.f32.mrf.mxu0
        %v1342 = vadd.f32 0.0, %v1341
        %v1343 = vpop.f32.mrf.mxu0
        %v1344 = vpop.f32.mrf.mxu0
        %v1345 = vadd.f32 0.0, %v1344
        %v1346 = vpop.f32.mrf.mxu0
        %1347 = vdwg.mxu0
        %1349 = vrot.lane.b32.xlu0 %v1101, 112
        %v1350 = vpop.permute.xlu0 %1349
        %1352 = vrot.lane.b32.xlu0 %v1103, 112
        %v1353 = vpop.permute.xlu0 %1352
        %v1355 = vsel %vm1107, %v1350, 0
        %v1358 = vsel %vm1107, %v1353, 0
        %1360 = vmatprep.subr.bf16.mxu0 0
        %1361 = vmatpush1.bf16.xpose.msra.mxu0 0
        %1362 = vmatprep.subr.bf16.mxu0 0
        %1363 = vmatpush1.bf16.xpose.msra.mxu0 0
        %1364 = vmatprep.subr.bf16.mxu0 0
        %1365 = vmatpush1.bf16.xpose.msra.mxu0 0
        %1366 = vmatprep.subr.bf16.mxu0 0
        %1367 = vmatpush1.bf16.xpose.msra.mxu0 0
        %1368 = vmatprep.subr.bf16.mxu0 0
        %1369 = vmatpush1.bf16.xpose.msra.mxu0 0
        %1370 = vmatprep.subr.bf16.mxu0 0
        %1371 = vmatpush1.bf16.xpose.msra.mxu0 0
        %1372 = vmatprep.subr.bf16.mxu0 0
        %1373 = vmatpush1.bf16.xpose.msra.mxu0 0
        %1374 = vmatprep.subr.bf16.mxu0 0
        %1375 = vmatpush1.bf16.xpose.msra.mxu0 %v1358
        %1376 = vmatprep.subr.bf16.mxu0 0
        %1377 = vmatpush2.bf16.xpose.msra.mxu0 0
        %1378 = vmatprep.subr.bf16.mxu0 0
        %1379 = vmatpush2.bf16.xpose.msra.mxu0 0
        %1380 = vmatprep.subr.bf16.mxu0 0
        %1381 = vmatpush2.bf16.xpose.msra.mxu0 0
        %1382 = vmatprep.subr.bf16.mxu0 0
        %1383 = vmatpush2.bf16.xpose.msra.mxu0 0
        %1384 = vmatprep.subr.bf16.mxu0 0
        %1385 = vmatpush2.bf16.xpose.msra.mxu0 0
        %1386 = vmatprep.subr.bf16.mxu0 0
        %1387 = vmatpush2.bf16.xpose.msra.mxu0 0
        %1388 = vmatprep.subr.bf16.mxu0 0
        %1389 = vmatpush2.bf16.xpose.msra.mxu0 0
        %1390 = vmatprep.subr.bf16.mxu0 0
        %1391 = vmatpush2.bf16.xpose.msra.mxu0 0
        %1392 = vmatprep.mubr.bf16.mxu0 0
        %1393 = vmatmul.mubr.bf16.gmra.mxu0 %v1355
        %v1394 = vpop.f32.mrf.mxu0
        %v1395 = vadd.f32 0.0, %v1394
        %v1396 = vpop.f32.mrf.mxu0
        %v1397 = vpop.f32.mrf.mxu0
        %v1398 = vadd.f32 0.0, %v1397
        %v1399 = vpop.f32.mrf.mxu0
        %1400 = vdwg.mxu0
        %1402 = vrot.lane.b32.xlu0 %v1102, 112
        %v1403 = vpop.permute.xlu0 %1402
        %1405 = vrot.lane.b32.xlu0 %v1104, 112
        %v1406 = vpop.permute.xlu0 %1405
        %v1408 = vsel %vm1107, %v1403, 0
        %v1411 = vsel %vm1107, %v1406, 0
        %1413 = vmatprep.subr.bf16.mxu0 0
        %1414 = vmatpush1.bf16.xpose.msra.mxu0 0
        %1415 = vmatprep.subr.bf16.mxu0 0
        %1416 = vmatpush1.bf16.xpose.msra.mxu0 0
        %1417 = vmatprep.subr.bf16.mxu0 0
        %1418 = vmatpush1.bf16.xpose.msra.mxu0 0
        %1419 = vmatprep.subr.bf16.mxu0 0
        %1420 = vmatpush1.bf16.xpose.msra.mxu0 0
        %1421 = vmatprep.subr.bf16.mxu0 0
        %1422 = vmatpush1.bf16.xpose.msra.mxu0 0
        %1423 = vmatprep.subr.bf16.mxu0 0
        %1424 = vmatpush1.bf16.xpose.msra.mxu0 0
        %1425 = vmatprep.subr.bf16.mxu0 0
        %1426 = vmatpush1.bf16.xpose.msra.mxu0 0
        %1427 = vmatprep.subr.bf16.mxu0 0
        %1428 = vmatpush1.bf16.xpose.msra.mxu0 %v1411
        %1429 = vmatprep.subr.bf16.mxu0 0
        %1430 = vmatpush2.bf16.xpose.msra.mxu0 0
        %1431 = vmatprep.subr.bf16.mxu0 0
        %1432 = vmatpush2.bf16.xpose.msra.mxu0 0
        %1433 = vmatprep.subr.bf16.mxu0 0
        %1434 = vmatpush2.bf16.xpose.msra.mxu0 0
        %1435 = vmatprep.subr.bf16.mxu0 0
        %1436 = vmatpush2.bf16.xpose.msra.mxu0 0
        %1437 = vmatprep.subr.bf16.mxu0 0
        %1438 = vmatpush2.bf16.xpose.msra.mxu0 0
        %1439 = vmatprep.subr.bf16.mxu0 0
        %1440 = vmatpush2.bf16.xpose.msra.mxu0 0
        %1441 = vmatprep.subr.bf16.mxu0 0
        %1442 = vmatpush2.bf16.xpose.msra.mxu0 0
        %1443 = vmatprep.subr.bf16.mxu0 0
        %1444 = vmatpush2.bf16.xpose.msra.mxu0 0
        %1445 = vmatprep.mubr.bf16.mxu0 0
        %1446 = vmatmul.mubr.bf16.gmra.mxu0 %v1408
        %v1447 = vpop.f32.mrf.mxu0
        %v1448 = vadd.f32 0.0, %v1447
        %v1449 = vpop.f32.mrf.mxu0
        %v1450 = vpop.f32.mrf.mxu0
        %v1451 = vadd.f32 0.0, %v1450
        %v1452 = vpop.f32.mrf.mxu0
        %1453 = vdwg.mxu0
        %v1454 = vmul.f32 %v1395, 0.25
        %v1455 = vmul.f32 %v1398, 0.25
        %v1456 = vmul.f32 %v1448, 0.25
        %v1457 = vmul.f32 %v1451, 0.25
        %v1458 = vsel %vm1208, %v1454, -1e+30
        %v1459 = vsel %vm1209, %v1455, -1e+30
        %v1460 = vsel %vm1208, %v1456, -1e+30
        %v1461 = vsel %vm1209, %v1457, -1e+30
        %v1462 = vsel %vm1107, %v1458, -inf
        %1463 = vmax.xlane.f32.xlu0 %v1462
        %v1464 = vpop.xlane.xlu0 %1463
        %v1465 = vsel %vm1107, %v1459, -inf
        %1466 = vmax.xlane.f32.xlu0 %v1465
        %v1467 = vpop.xlane.xlu0 %1466
        %v1468 = vsel %vm1107, %v1460, -inf
        %1469 = vmax.xlane.f32.xlu0 %v1468
        %v1470 = vpop.xlane.xlu0 %1469
        %v1471 = vsel %vm1107, %v1461, -inf
        %1472 = vmax.xlane.f32.xlu0 %v1471
        %v1473 = vpop.xlane.xlu0 %1472
        %v1474 = vsub.f32 %v1458, %v1464
        %v1475 = vsub.f32 %v1459, %v1467
        %v1476 = vsub.f32 %v1460, %v1470
        %v1477 = vsub.f32 %v1461, %v1473
        %v1478 = vmul.f32 %v1474, 1.442695
        %v1479 = vpow.pop %v1478
        %v1480 = vmul.f32 %v1475, 1.442695
        %v1481 = vpow.pop %v1480
        %v1482 = vmul.f32 %v1476, 1.442695
        %v1483 = vpow.pop %v1482
        %v1484 = vmul.f32 %v1477, 1.442695
        %v1485 = vpow.pop %v1484
        %v1486 = vsel %vm1107, %v1479, 0.0
        %1487 = vadd.xlane.f32.xlu0 %v1486
        %v1488 = vpop.xlane.xlu0 %1487
        %v1489 = vsel %vm1107, %v1481, 0.0
        %1490 = vadd.xlane.f32.xlu0 %v1489
        %v1491 = vpop.xlane.xlu0 %1490
        %v1492 = vsel %vm1107, %v1483, 0.0
        %1493 = vadd.xlane.f32.xlu0 %v1492
        %v1494 = vpop.xlane.xlu0 %1493
        %v1495 = vsel %vm1107, %v1485, 0.0
        %1496 = vadd.xlane.f32.xlu0 %v1495
        %v1497 = vpop.xlane.xlu0 %1496
        %v1498 = vrcp.pop %v1488
        %v1499 = vrcp.pop %v1491
        %v1500 = vrcp.pop %v1494
        %v1501 = vrcp.pop %v1497
        %v1502 = vmul.f32 %v1479, %v1498
        %v1503 = vmul.f32 %v1481, %v1499
        %v1504 = vmul.f32 %v1483, %v1500
        %v1505 = vmul.f32 %v1485, %v1501
        %v1506 = vpack.c.bf16 %v1503, %v1502
        %v1507 = vpack.c.bf16 %v1505, %v1504
        %1509 = vrot.lane.b32.xlu0 %v1105, 112
        %v1510 = vpop.permute.xlu0 %1509
        %v1513 = vsel %vm1107, %v1506, 0
        %1515 = vmatprep.subr.bf16.mxu0 0
        %1516 = vmatpush1.bf16.msra.mxu0 0
        %1517 = vmatprep.subr.bf16.mxu0 0
        %1518 = vmatpush1.bf16.msra.mxu0 0
        %1519 = vmatprep.subr.bf16.mxu0 0
        %1520 = vmatpush1.bf16.msra.mxu0 0
        %1521 = vmatprep.subr.bf16.mxu0 0
        %1522 = vmatpush1.bf16.msra.mxu0 0
        %1523 = vmatprep.subr.bf16.mxu0 0
        %1524 = vmatpush1.bf16.msra.mxu0 0
        %1525 = vmatprep.subr.bf16.mxu0 0
        %1526 = vmatpush1.bf16.msra.mxu0 0
        %1527 = vmatprep.subr.bf16.mxu0 0
        %1528 = vmatpush1.bf16.msra.mxu0 0
        %1529 = vmatprep.subr.bf16.mxu0 0
        %1530 = vmatpush1.bf16.msra.mxu0 %v1510
        %1531 = vmatprep.subr.bf16.mxu0 0
        %1532 = vmatpush2.bf16.msra.mxu0 0
        %1533 = vmatprep.subr.bf16.mxu0 0
        %1534 = vmatpush2.bf16.msra.mxu0 0
        %1535 = vmatprep.subr.bf16.mxu0 0
        %1536 = vmatpush2.bf16.msra.mxu0 0
        %1537 = vmatprep.subr.bf16.mxu0 0
        %1538 = vmatpush2.bf16.msra.mxu0 0
        %1539 = vmatprep.subr.bf16.mxu0 0
        %1540 = vmatpush2.bf16.msra.mxu0 0
        %1541 = vmatprep.subr.bf16.mxu0 0
        %1542 = vmatpush2.bf16.msra.mxu0 0
        %1543 = vmatprep.subr.bf16.mxu0 0
        %1544 = vmatpush2.bf16.msra.mxu0 0
        %1545 = vmatprep.subr.bf16.mxu0 0
        %1546 = vmatpush2.bf16.msra.mxu0 0
        %1547 = vmatprep.mubr.bf16.mxu0 0
        %1548 = vmatmul.mubr.bf16.gmra.mxu0 %v1513
        %v1549 = vpop.f32.mrf.mxu0
        %v1550 = vadd.f32 0.0, %v1549
        %v1551 = vpop.f32.mrf.mxu0
        %v1552 = vpop.f32.mrf.mxu0
        %v1553 = vadd.f32 0.0, %v1552
        %v1554 = vpop.f32.mrf.mxu0
        %1555 = vdwg.mxu0
        %1557 = vrot.lane.b32.xlu0 %v1106, 112
        %v1558 = vpop.permute.xlu0 %1557
        %v1561 = vsel %vm1107, %v1507, 0
        %1563 = vmatprep.subr.bf16.mxu0 0
        %1564 = vmatpush1.bf16.msra.mxu0 0
        %1565 = vmatprep.subr.bf16.mxu0 0
        %1566 = vmatpush1.bf16.msra.mxu0 0
        %1567 = vmatprep.subr.bf16.mxu0 0
        %1568 = vmatpush1.bf16.msra.mxu0 0
        %1569 = vmatprep.subr.bf16.mxu0 0
        %1570 = vmatpush1.bf16.msra.mxu0 0
        %1571 = vmatprep.subr.bf16.mxu0 0
        %1572 = vmatpush1.bf16.msra.mxu0 0
        %1573 = vmatprep.subr.bf16.mxu0 0
        %1574 = vmatpush1.bf16.msra.mxu0 0
        %1575 = vmatprep.subr.bf16.mxu0 0
        %1576 = vmatpush1.bf16.msra.mxu0 0
        %1577 = vmatprep.subr.bf16.mxu0 0
        %1578 = vmatpush1.bf16.msra.mxu0 %v1558
        %1579 = vmatprep.subr.bf16.mxu0 0
        %1580 = vmatpush2.bf16.msra.mxu0 0
        %1581 = vmatprep.subr.bf16.mxu0 0
        %1582 = vmatpush2.bf16.msra.mxu0 0
        %1583 = vmatprep.subr.bf16.mxu0 0
        %1584 = vmatpush2.bf16.msra.mxu0 0
        %1585 = vmatprep.subr.bf16.mxu0 0
        %1586 = vmatpush2.bf16.msra.mxu0 0
        %1587 = vmatprep.subr.bf16.mxu0 0
        %1588 = vmatpush2.bf16.msra.mxu0 0
        %1589 = vmatprep.subr.bf16.mxu0 0
        %1590 = vmatpush2.bf16.msra.mxu0 0
        %1591 = vmatprep.subr.bf16.mxu0 0
        %1592 = vmatpush2.bf16.msra.mxu0 0
        %1593 = vmatprep.subr.bf16.mxu0 0
        %1594 = vmatpush2.bf16.msra.mxu0 0
        %1595 = vmatprep.mubr.bf16.mxu0 0
        %1596 = vmatmul.mubr.bf16.gmra.mxu0 %v1561
        %v1597 = vpop.f32.mrf.mxu0
        %v1598 = vadd.f32 0.0, %v1597
        %v1599 = vpop.f32.mrf.mxu0
        %v1600 = vpop.f32.mrf.mxu0
        %v1601 = vadd.f32 0.0, %v1600
        %v1602 = vpop.f32.mrf.mxu0
        %1603 = vdwg.mxu0
        %1604 = vrot.lane.b32.xlu0 %v1101, 96
        %v1605 = vpop.permute.xlu0 %1604
        %1606 = vrot.lane.b32.xlu0 %v1103, 96
        %v1607 = vpop.permute.xlu0 %1606
        %v1609 = vsel %vm1107, %v1605, 0
        %v1612 = vsel %vm1107, %v1607, 0
        %1614 = vmatprep.subr.bf16.mxu0 0
        %1615 = vmatpush1.bf16.xpose.msra.mxu0 0
        %1616 = vmatprep.subr.bf16.mxu0 0
        %1617 = vmatpush1.bf16.xpose.msra.mxu0 0
        %1618 = vmatprep.subr.bf16.mxu0 0
        %1619 = vmatpush1.bf16.xpose.msra.mxu0 0
        %1620 = vmatprep.subr.bf16.mxu0 0
        %1621 = vmatpush1.bf16.xpose.msra.mxu0 0
        %1622 = vmatprep.subr.bf16.mxu0 0
        %1623 = vmatpush1.bf16.xpose.msra.mxu0 0
        %1624 = vmatprep.subr.bf16.mxu0 0
        %1625 = vmatpush1.bf16.xpose.msra.mxu0 0
        %1626 = vmatprep.subr.bf16.mxu0 0
        %1627 = vmatpush1.bf16.xpose.msra.mxu0 0
        %1628 = vmatprep.subr.bf16.mxu0 0
        %1629 = vmatpush1.bf16.xpose.msra.mxu0 %v1612
        %1630 = vmatprep.subr.bf16.mxu0 0
        %1631 = vmatpush2.bf16.xpose.msra.mxu0 0
        %1632 = vmatprep.subr.bf16.mxu0 0
        %1633 = vmatpush2.bf16.xpose.msra.mxu0 0
        %1634 = vmatprep.subr.bf16.mxu0 0
        %1635 = vmatpush2.bf16.xpose.msra.mxu0 0
        %1636 = vmatprep.subr.bf16.mxu0 0
        %1637 = vmatpush2.bf16.xpose.msra.mxu0 0
        %1638 = vmatprep.subr.bf16.mxu0 0
        %1639 = vmatpush2.bf16.xpose.msra.mxu0 0
        %1640 = vmatprep.subr.bf16.mxu0 0
        %1641 = vmatpush2.bf16.xpose.msra.mxu0 0
        %1642 = vmatprep.subr.bf16.mxu0 0
        %1643 = vmatpush2.bf16.xpose.msra.mxu0 0
        %1644 = vmatprep.subr.bf16.mxu0 0
        %1645 = vmatpush2.bf16.xpose.msra.mxu0 0
        %1646 = vmatprep.mubr.bf16.mxu0 0
        %1647 = vmatmul.mubr.bf16.gmra.mxu0 %v1609
        %v1648 = vpop.f32.mrf.mxu0
        %v1649 = vadd.f32 0.0, %v1648
        %v1650 = vpop.f32.mrf.mxu0
        %v1651 = vpop.f32.mrf.mxu0
        %v1652 = vadd.f32 0.0, %v1651
        %v1653 = vpop.f32.mrf.mxu0
        %1654 = vdwg.mxu0
        %1655 = vrot.lane.b32.xlu0 %v1102, 96
        %v1656 = vpop.permute.xlu0 %1655
        %1657 = vrot.lane.b32.xlu0 %v1104, 96
        %v1658 = vpop.permute.xlu0 %1657
        %v1660 = vsel %vm1107, %v1656, 0
        %v1663 = vsel %vm1107, %v1658, 0
        %1665 = vmatprep.subr.bf16.mxu0 0
        %1666 = vmatpush1.bf16.xpose.msra.mxu0 0
        %1667 = vmatprep.subr.bf16.mxu0 0
        %1668 = vmatpush1.bf16.xpose.msra.mxu0 0
        %1669 = vmatprep.subr.bf16.mxu0 0
        %1670 = vmatpush1.bf16.xpose.msra.mxu0 0
        %1671 = vmatprep.subr.bf16.mxu0 0
        %1672 = vmatpush1.bf16.xpose.msra.mxu0 0
        %1673 = vmatprep.subr.bf16.mxu0 0
        %1674 = vmatpush1.bf16.xpose.msra.mxu0 0
        %1675 = vmatprep.subr.bf16.mxu0 0
        %1676 = vmatpush1.bf16.xpose.msra.mxu0 0
        %1677 = vmatprep.subr.bf16.mxu0 0
        %1678 = vmatpush1.bf16.xpose.msra.mxu0 0
        %1679 = vmatprep.subr.bf16.mxu0 0
        %1680 = vmatpush1.bf16.xpose.msra.mxu0 %v1663
        %1681 = vmatprep.subr.bf16.mxu0 0
        %1682 = vmatpush2.bf16.xpose.msra.mxu0 0
        %1683 = vmatprep.subr.bf16.mxu0 0
        %1684 = vmatpush2.bf16.xpose.msra.mxu0 0
        %1685 = vmatprep.subr.bf16.mxu0 0
        %1686 = vmatpush2.bf16.xpose.msra.mxu0 0
        %1687 = vmatprep.subr.bf16.mxu0 0
        %1688 = vmatpush2.bf16.xpose.msra.mxu0 0
        %1689 = vmatprep.subr.bf16.mxu0 0
        %1690 = vmatpush2.bf16.xpose.msra.mxu0 0
        %1691 = vmatprep.subr.bf16.mxu0 0
        %1692 = vmatpush2.bf16.xpose.msra.mxu0 0
        %1693 = vmatprep.subr.bf16.mxu0 0
        %1694 = vmatpush2.bf16.xpose.msra.mxu0 0
        %1695 = vmatprep.subr.bf16.mxu0 0
        %1696 = vmatpush2.bf16.xpose.msra.mxu0 0
        %1697 = vmatprep.mubr.bf16.mxu0 0
        %1698 = vmatmul.mubr.bf16.gmra.mxu0 %v1660
        %v1699 = vpop.f32.mrf.mxu0
        %v1700 = vadd.f32 0.0, %v1699
        %v1701 = vpop.f32.mrf.mxu0
        %v1702 = vpop.f32.mrf.mxu0
        %v1703 = vadd.f32 0.0, %v1702
        %v1704 = vpop.f32.mrf.mxu0
        %1705 = vdwg.mxu0
        %v1706 = vmul.f32 %v1649, 0.25
        %v1707 = vmul.f32 %v1652, 0.25
        %v1708 = vmul.f32 %v1700, 0.25
        %v1709 = vmul.f32 %v1703, 0.25
        %v1710 = vsel %vm1208, %v1706, -1e+30
        %v1711 = vsel %vm1209, %v1707, -1e+30
        %v1712 = vsel %vm1208, %v1708, -1e+30
        %v1713 = vsel %vm1209, %v1709, -1e+30
        %v1714 = vsel %vm1107, %v1710, -inf
        %1715 = vmax.xlane.f32.xlu0 %v1714
        %v1716 = vpop.xlane.xlu0 %1715
        %v1717 = vsel %vm1107, %v1711, -inf
        %1718 = vmax.xlane.f32.xlu0 %v1717
        %v1719 = vpop.xlane.xlu0 %1718
        %v1720 = vsel %vm1107, %v1712, -inf
        %1721 = vmax.xlane.f32.xlu0 %v1720
        %v1722 = vpop.xlane.xlu0 %1721
        %v1723 = vsel %vm1107, %v1713, -inf
        %1724 = vmax.xlane.f32.xlu0 %v1723
        %v1725 = vpop.xlane.xlu0 %1724
        %v1726 = vsub.f32 %v1710, %v1716
        %v1727 = vsub.f32 %v1711, %v1719
        %v1728 = vsub.f32 %v1712, %v1722
        %v1729 = vsub.f32 %v1713, %v1725
        %v1730 = vmul.f32 %v1726, 1.442695
        %v1731 = vpow.pop %v1730
        %v1732 = vmul.f32 %v1727, 1.442695
        %v1733 = vpow.pop %v1732
        %v1734 = vmul.f32 %v1728, 1.442695
        %v1735 = vpow.pop %v1734
        %v1736 = vmul.f32 %v1729, 1.442695
        %v1737 = vpow.pop %v1736
        %v1738 = vsel %vm1107, %v1731, 0.0
        %1739 = vadd.xlane.f32.xlu0 %v1738
        %v1740 = vpop.xlane.xlu0 %1739
        %v1741 = vsel %vm1107, %v1733, 0.0
        %1742 = vadd.xlane.f32.xlu0 %v1741
        %v1743 = vpop.xlane.xlu0 %1742
        %v1744 = vsel %vm1107, %v1735, 0.0
        %1745 = vadd.xlane.f32.xlu0 %v1744
        %v1746 = vpop.xlane.xlu0 %1745
        %v1747 = vsel %vm1107, %v1737, 0.0
        %1748 = vadd.xlane.f32.xlu0 %v1747
        %v1749 = vpop.xlane.xlu0 %1748
        %v1750 = vrcp.pop %v1740
        %v1751 = vrcp.pop %v1743
        %v1752 = vrcp.pop %v1746
        %v1753 = vrcp.pop %v1749
        %v1754 = vmul.f32 %v1731, %v1750
        %v1755 = vmul.f32 %v1733, %v1751
        %v1756 = vmul.f32 %v1735, %v1752
        %v1757 = vmul.f32 %v1737, %v1753
        %v1758 = vpack.c.bf16 %v1755, %v1754
        %v1759 = vpack.c.bf16 %v1757, %v1756
        %1760 = vrot.lane.b32.xlu0 %v1105, 96
        %v1761 = vpop.permute.xlu0 %1760
        %v1764 = vsel %vm1107, %v1758, 0
        %1766 = vmatprep.subr.bf16.mxu0 0
        %1767 = vmatpush1.bf16.msra.mxu0 0
        %1768 = vmatprep.subr.bf16.mxu0 0
        %1769 = vmatpush1.bf16.msra.mxu0 0
        %1770 = vmatprep.subr.bf16.mxu0 0
        %1771 = vmatpush1.bf16.msra.mxu0 0
        %1772 = vmatprep.subr.bf16.mxu0 0
        %1773 = vmatpush1.bf16.msra.mxu0 0
        %1774 = vmatprep.subr.bf16.mxu0 0
        %1775 = vmatpush1.bf16.msra.mxu0 0
        %1776 = vmatprep.subr.bf16.mxu0 0
        %1777 = vmatpush1.bf16.msra.mxu0 0
        %1778 = vmatprep.subr.bf16.mxu0 0
        %1779 = vmatpush1.bf16.msra.mxu0 0
        %1780 = vmatprep.subr.bf16.mxu0 0
        %1781 = vmatpush1.bf16.msra.mxu0 %v1761
        %1782 = vmatprep.subr.bf16.mxu0 0
        %1783 = vmatpush2.bf16.msra.mxu0 0
        %1784 = vmatprep.subr.bf16.mxu0 0
        %1785 = vmatpush2.bf16.msra.mxu0 0
        %1786 = vmatprep.subr.bf16.mxu0 0
        %1787 = vmatpush2.bf16.msra.mxu0 0
        %1788 = vmatprep.subr.bf16.mxu0 0
        %1789 = vmatpush2.bf16.msra.mxu0 0
        %1790 = vmatprep.subr.bf16.mxu0 0
        %1791 = vmatpush2.bf16.msra.mxu0 0
        %1792 = vmatprep.subr.bf16.mxu0 0
        %1793 = vmatpush2.bf16.msra.mxu0 0
        %1794 = vmatprep.subr.bf16.mxu0 0
        %1795 = vmatpush2.bf16.msra.mxu0 0
        %1796 = vmatprep.subr.bf16.mxu0 0
        %1797 = vmatpush2.bf16.msra.mxu0 0
        %1798 = vmatprep.mubr.bf16.mxu0 0
        %1799 = vmatmul.mubr.bf16.gmra.mxu0 %v1764
        %v1800 = vpop.f32.mrf.mxu0
        %v1801 = vadd.f32 0.0, %v1800
        %v1802 = vpop.f32.mrf.mxu0
        %v1803 = vpop.f32.mrf.mxu0
        %v1804 = vadd.f32 0.0, %v1803
        %v1805 = vpop.f32.mrf.mxu0
        %1806 = vdwg.mxu0
        %1807 = vrot.lane.b32.xlu0 %v1106, 96
        %v1808 = vpop.permute.xlu0 %1807
        %v1811 = vsel %vm1107, %v1759, 0
        %1813 = vmatprep.subr.bf16.mxu0 0
        %1814 = vmatpush1.bf16.msra.mxu0 0
        %1815 = vmatprep.subr.bf16.mxu0 0
        %1816 = vmatpush1.bf16.msra.mxu0 0
        %1817 = vmatprep.subr.bf16.mxu0 0
        %1818 = vmatpush1.bf16.msra.mxu0 0
        %1819 = vmatprep.subr.bf16.mxu0 0
        %1820 = vmatpush1.bf16.msra.mxu0 0
        %1821 = vmatprep.subr.bf16.mxu0 0
        %1822 = vmatpush1.bf16.msra.mxu0 0
        %1823 = vmatprep.subr.bf16.mxu0 0
        %1824 = vmatpush1.bf16.msra.mxu0 0
        %1825 = vmatprep.subr.bf16.mxu0 0
        %1826 = vmatpush1.bf16.msra.mxu0 0
        %1827 = vmatprep.subr.bf16.mxu0 0
        %1828 = vmatpush1.bf16.msra.mxu0 %v1808
        %1829 = vmatprep.subr.bf16.mxu0 0
        %1830 = vmatpush2.bf16.msra.mxu0 0
        %1831 = vmatprep.subr.bf16.mxu0 0
        %1832 = vmatpush2.bf16.msra.mxu0 0
        %1833 = vmatprep.subr.bf16.mxu0 0
        %1834 = vmatpush2.bf16.msra.mxu0 0
        %1835 = vmatprep.subr.bf16.mxu0 0
        %1836 = vmatpush2.bf16.msra.mxu0 0
        %1837 = vmatprep.subr.bf16.mxu0 0
        %1838 = vmatpush2.bf16.msra.mxu0 0
        %1839 = vmatprep.subr.bf16.mxu0 0
        %1840 = vmatpush2.bf16.msra.mxu0 0
        %1841 = vmatprep.subr.bf16.mxu0 0
        %1842 = vmatpush2.bf16.msra.mxu0 0
        %1843 = vmatprep.subr.bf16.mxu0 0
        %1844 = vmatpush2.bf16.msra.mxu0 0
        %1845 = vmatprep.mubr.bf16.mxu0 0
        %1846 = vmatmul.mubr.bf16.gmra.mxu0 %v1811
        %v1847 = vpop.f32.mrf.mxu0
        %v1848 = vadd.f32 0.0, %v1847
        %v1849 = vpop.f32.mrf.mxu0
        %v1850 = vpop.f32.mrf.mxu0
        %v1851 = vadd.f32 0.0, %v1850
        %v1852 = vpop.f32.mrf.mxu0
        %1853 = vdwg.mxu0
        %1854 = vrot.lane.b32.xlu0 %v1101, 80
        %v1855 = vpop.permute.xlu0 %1854
        %1856 = vrot.lane.b32.xlu0 %v1103, 80
        %v1857 = vpop.permute.xlu0 %1856
        %v1859 = vsel %vm1107, %v1855, 0
        %v1862 = vsel %vm1107, %v1857, 0
        %1864 = vmatprep.subr.bf16.mxu0 0
        %1865 = vmatpush1.bf16.xpose.msra.mxu0 0
        %1866 = vmatprep.subr.bf16.mxu0 0
        %1867 = vmatpush1.bf16.xpose.msra.mxu0 0
        %1868 = vmatprep.subr.bf16.mxu0 0
        %1869 = vmatpush1.bf16.xpose.msra.mxu0 0
        %1870 = vmatprep.subr.bf16.mxu0 0
        %1871 = vmatpush1.bf16.xpose.msra.mxu0 0
        %1872 = vmatprep.subr.bf16.mxu0 0
        %1873 = vmatpush1.bf16.xpose.msra.mxu0 0
        %1874 = vmatprep.subr.bf16.mxu0 0
        %1875 = vmatpush1.bf16.xpose.msra.mxu0 0
        %1876 = vmatprep.subr.bf16.mxu0 0
        %1877 = vmatpush1.bf16.xpose.msra.mxu0 0
        %1878 = vmatprep.subr.bf16.mxu0 0
        %1879 = vmatpush1.bf16.xpose.msra.mxu0 %v1862
        %1880 = vmatprep.subr.bf16.mxu0 0
        %1881 = vmatpush2.bf16.xpose.msra.mxu0 0
        %1882 = vmatprep.subr.bf16.mxu0 0
        %1883 = vmatpush2.bf16.xpose.msra.mxu0 0
        %1884 = vmatprep.subr.bf16.mxu0 0
        %1885 = vmatpush2.bf16.xpose.msra.mxu0 0
        %1886 = vmatprep.subr.bf16.mxu0 0
        %1887 = vmatpush2.bf16.xpose.msra.mxu0 0
        %1888 = vmatprep.subr.bf16.mxu0 0
        %1889 = vmatpush2.bf16.xpose.msra.mxu0 0
        %1890 = vmatprep.subr.bf16.mxu0 0
        %1891 = vmatpush2.bf16.xpose.msra.mxu0 0
        %1892 = vmatprep.subr.bf16.mxu0 0
        %1893 = vmatpush2.bf16.xpose.msra.mxu0 0
        %1894 = vmatprep.subr.bf16.mxu0 0
        %1895 = vmatpush2.bf16.xpose.msra.mxu0 0
        %1896 = vmatprep.mubr.bf16.mxu0 0
        %1897 = vmatmul.mubr.bf16.gmra.mxu0 %v1859
        %v1898 = vpop.f32.mrf.mxu0
        %v1899 = vadd.f32 0.0, %v1898
        %v1900 = vpop.f32.mrf.mxu0
        %v1901 = vpop.f32.mrf.mxu0
        %v1902 = vadd.f32 0.0, %v1901
        %v1903 = vpop.f32.mrf.mxu0
        %1904 = vdwg.mxu0
        %1905 = vrot.lane.b32.xlu0 %v1102, 80
        %v1906 = vpop.permute.xlu0 %1905
        %1907 = vrot.lane.b32.xlu0 %v1104, 80
        %v1908 = vpop.permute.xlu0 %1907
        %v1910 = vsel %vm1107, %v1906, 0
        %v1913 = vsel %vm1107, %v1908, 0
        %1915 = vmatprep.subr.bf16.mxu0 0
        %1916 = vmatpush1.bf16.xpose.msra.mxu0 0
        %1917 = vmatprep.subr.bf16.mxu0 0
        %1918 = vmatpush1.bf16.xpose.msra.mxu0 0
        %1919 = vmatprep.subr.bf16.mxu0 0
        %1920 = vmatpush1.bf16.xpose.msra.mxu0 0
        %1921 = vmatprep.subr.bf16.mxu0 0
        %1922 = vmatpush1.bf16.xpose.msra.mxu0 0
        %1923 = vmatprep.subr.bf16.mxu0 0
        %1924 = vmatpush1.bf16.xpose.msra.mxu0 0
        %1925 = vmatprep.subr.bf16.mxu0 0
        %1926 = vmatpush1.bf16.xpose.msra.mxu0 0
        %1927 = vmatprep.subr.bf16.mxu0 0
        %1928 = vmatpush1.bf16.xpose.msra.mxu0 0
        %1929 = vmatprep.subr.bf16.mxu0 0
        %1930 = vmatpush1.bf16.xpose.msra.mxu0 %v1913
        %1931 = vmatprep.subr.bf16.mxu0 0
        %1932 = vmatpush2.bf16.xpose.msra.mxu0 0
        %1933 = vmatprep.subr.bf16.mxu0 0
        %1934 = vmatpush2.bf16.xpose.msra.mxu0 0
        %1935 = vmatprep.subr.bf16.mxu0 0
        %1936 = vmatpush2.bf16.xpose.msra.mxu0 0
        %1937 = vmatprep.subr.bf16.mxu0 0
        %1938 = vmatpush2.bf16.xpose.msra.mxu0 0
        %1939 = vmatprep.subr.bf16.mxu0 0
        %1940 = vmatpush2.bf16.xpose.msra.mxu0 0
        %1941 = vmatprep.subr.bf16.mxu0 0
        %1942 = vmatpush2.bf16.xpose.msra.mxu0 0
        %1943 = vmatprep.subr.bf16.mxu0 0
        %1944 = vmatpush2.bf16.xpose.msra.mxu0 0
        %1945 = vmatprep.subr.bf16.mxu0 0
        %1946 = vmatpush2.bf16.xpose.msra.mxu0 0
        %1947 = vmatprep.mubr.bf16.mxu0 0
        %1948 = vmatmul.mubr.bf16.gmra.mxu0 %v1910
        %v1949 = vpop.f32.mrf.mxu0
        %v1950 = vadd.f32 0.0, %v1949
        %v1951 = vpop.f32.mrf.mxu0
        %v1952 = vpop.f32.mrf.mxu0
        %v1953 = vadd.f32 0.0, %v1952
        %v1954 = vpop.f32.mrf.mxu0
        %1955 = vdwg.mxu0
        %v1956 = vmul.f32 %v1899, 0.25
        %v1957 = vmul.f32 %v1902, 0.25
        %v1958 = vmul.f32 %v1950, 0.25
        %v1959 = vmul.f32 %v1953, 0.25
        %v1960 = vsel %vm1208, %v1956, -1e+30
        %v1961 = vsel %vm1209, %v1957, -1e+30
        %v1962 = vsel %vm1208, %v1958, -1e+30
        %v1963 = vsel %vm1209, %v1959, -1e+30
        %v1964 = vsel %vm1107, %v1960, -inf
        %1965 = vmax.xlane.f32.xlu0 %v1964
        %v1966 = vpop.xlane.xlu0 %1965
        %v1967 = vsel %vm1107, %v1961, -inf
        %1968 = vmax.xlane.f32.xlu0 %v1967
        %v1969 = vpop.xlane.xlu0 %1968
        %v1970 = vsel %vm1107, %v1962, -inf
        %1971 = vmax.xlane.f32.xlu0 %v1970
        %v1972 = vpop.xlane.xlu0 %1971
        %v1973 = vsel %vm1107, %v1963, -inf
        %1974 = vmax.xlane.f32.xlu0 %v1973
        %v1975 = vpop.xlane.xlu0 %1974
        %v1976 = vsub.f32 %v1960, %v1966
        %v1977 = vsub.f32 %v1961, %v1969
        %v1978 = vsub.f32 %v1962, %v1972
        %v1979 = vsub.f32 %v1963, %v1975
        %v1980 = vmul.f32 %v1976, 1.442695
        %v1981 = vpow.pop %v1980
        %v1982 = vmul.f32 %v1977, 1.442695
        %v1983 = vpow.pop %v1982
        %v1984 = vmul.f32 %v1978, 1.442695
        %v1985 = vpow.pop %v1984
        %v1986 = vmul.f32 %v1979, 1.442695
        %v1987 = vpow.pop %v1986
        %v1988 = vsel %vm1107, %v1981, 0.0
        %1989 = vadd.xlane.f32.xlu0 %v1988
        %v1990 = vpop.xlane.xlu0 %1989
        %v1991 = vsel %vm1107, %v1983, 0.0
        %1992 = vadd.xlane.f32.xlu0 %v1991
        %v1993 = vpop.xlane.xlu0 %1992
        %v1994 = vsel %vm1107, %v1985, 0.0
        %1995 = vadd.xlane.f32.xlu0 %v1994
        %v1996 = vpop.xlane.xlu0 %1995
        %v1997 = vsel %vm1107, %v1987, 0.0
        %1998 = vadd.xlane.f32.xlu0 %v1997
        %v1999 = vpop.xlane.xlu0 %1998
        %v2000 = vrcp.pop %v1990
        %v2001 = vrcp.pop %v1993
        %v2002 = vrcp.pop %v1996
        %v2003 = vrcp.pop %v1999
        %v2004 = vmul.f32 %v1981, %v2000
        %v2005 = vmul.f32 %v1983, %v2001
        %v2006 = vmul.f32 %v1985, %v2002
        %v2007 = vmul.f32 %v1987, %v2003
        %v2008 = vpack.c.bf16 %v2005, %v2004
        %v2009 = vpack.c.bf16 %v2007, %v2006
        %2010 = vrot.lane.b32.xlu0 %v1105, 80
        %v2011 = vpop.permute.xlu0 %2010
        %v2014 = vsel %vm1107, %v2008, 0
        %2016 = vmatprep.subr.bf16.mxu0 0
        %2017 = vmatpush1.bf16.msra.mxu0 0
        %2018 = vmatprep.subr.bf16.mxu0 0
        %2019 = vmatpush1.bf16.msra.mxu0 0
        %2020 = vmatprep.subr.bf16.mxu0 0
        %2021 = vmatpush1.bf16.msra.mxu0 0
        %2022 = vmatprep.subr.bf16.mxu0 0
        %2023 = vmatpush1.bf16.msra.mxu0 0
        %2024 = vmatprep.subr.bf16.mxu0 0
        %2025 = vmatpush1.bf16.msra.mxu0 0
        %2026 = vmatprep.subr.bf16.mxu0 0
        %2027 = vmatpush1.bf16.msra.mxu0 0
        %2028 = vmatprep.subr.bf16.mxu0 0
        %2029 = vmatpush1.bf16.msra.mxu0 0
        %2030 = vmatprep.subr.bf16.mxu0 0
        %2031 = vmatpush1.bf16.msra.mxu0 %v2011
        %2032 = vmatprep.subr.bf16.mxu0 0
        %2033 = vmatpush2.bf16.msra.mxu0 0
        %2034 = vmatprep.subr.bf16.mxu0 0
        %2035 = vmatpush2.bf16.msra.mxu0 0
        %2036 = vmatprep.subr.bf16.mxu0 0
        %2037 = vmatpush2.bf16.msra.mxu0 0
        %2038 = vmatprep.subr.bf16.mxu0 0
        %2039 = vmatpush2.bf16.msra.mxu0 0
        %2040 = vmatprep.subr.bf16.mxu0 0
        %2041 = vmatpush2.bf16.msra.mxu0 0
        %2042 = vmatprep.subr.bf16.mxu0 0
        %2043 = vmatpush2.bf16.msra.mxu0 0
        %2044 = vmatprep.subr.bf16.mxu0 0
        %2045 = vmatpush2.bf16.msra.mxu0 0
        %2046 = vmatprep.subr.bf16.mxu0 0
        %2047 = vmatpush2.bf16.msra.mxu0 0
        %2048 = vmatprep.mubr.bf16.mxu0 0
        %2049 = vmatmul.mubr.bf16.gmra.mxu0 %v2014
        %v2050 = vpop.f32.mrf.mxu0
        %v2051 = vadd.f32 0.0, %v2050
        %v2052 = vpop.f32.mrf.mxu0
        %v2053 = vpop.f32.mrf.mxu0
        %v2054 = vadd.f32 0.0, %v2053
        %v2055 = vpop.f32.mrf.mxu0
        %2056 = vdwg.mxu0
        %2057 = vrot.lane.b32.xlu0 %v1106, 80
        %v2058 = vpop.permute.xlu0 %2057
        %v2061 = vsel %vm1107, %v2009, 0
        %2063 = vmatprep.subr.bf16.mxu0 0
        %2064 = vmatpush1.bf16.msra.mxu0 0
        %2065 = vmatprep.subr.bf16.mxu0 0
        %2066 = vmatpush1.bf16.msra.mxu0 0
        %2067 = vmatprep.subr.bf16.mxu0 0
        %2068 = vmatpush1.bf16.msra.mxu0 0
        %2069 = vmatprep.subr.bf16.mxu0 0
        %2070 = vmatpush1.bf16.msra.mxu0 0
        %2071 = vmatprep.subr.bf16.mxu0 0
        %2072 = vmatpush1.bf16.msra.mxu0 0
        %2073 = vmatprep.subr.bf16.mxu0 0
        %2074 = vmatpush1.bf16.msra.mxu0 0
        %2075 = vmatprep.subr.bf16.mxu0 0
        %2076 = vmatpush1.bf16.msra.mxu0 0
        %2077 = vmatprep.subr.bf16.mxu0 0
        %2078 = vmatpush1.bf16.msra.mxu0 %v2058
        %2079 = vmatprep.subr.bf16.mxu0 0
        %2080 = vmatpush2.bf16.msra.mxu0 0
        %2081 = vmatprep.subr.bf16.mxu0 0
        %2082 = vmatpush2.bf16.msra.mxu0 0
        %2083 = vmatprep.subr.bf16.mxu0 0
        %2084 = vmatpush2.bf16.msra.mxu0 0
        %2085 = vmatprep.subr.bf16.mxu0 0
        %2086 = vmatpush2.bf16.msra.mxu0 0
        %2087 = vmatprep.subr.bf16.mxu0 0
        %2088 = vmatpush2.bf16.msra.mxu0 0
        %2089 = vmatprep.subr.bf16.mxu0 0
        %2090 = vmatpush2.bf16.msra.mxu0 0
        %2091 = vmatprep.subr.bf16.mxu0 0
        %2092 = vmatpush2.bf16.msra.mxu0 0
        %2093 = vmatprep.subr.bf16.mxu0 0
        %2094 = vmatpush2.bf16.msra.mxu0 0
        %2095 = vmatprep.mubr.bf16.mxu0 0
        %2096 = vmatmul.mubr.bf16.gmra.mxu0 %v2061
        %v2097 = vpop.f32.mrf.mxu0
        %v2098 = vadd.f32 0.0, %v2097
        %v2099 = vpop.f32.mrf.mxu0
        %v2100 = vpop.f32.mrf.mxu0
        %v2101 = vadd.f32 0.0, %v2100
        %v2102 = vpop.f32.mrf.mxu0
        %2103 = vdwg.mxu0
        %2104 = vrot.lane.b32.xlu0 %v1101, 64
        %v2105 = vpop.permute.xlu0 %2104
        %2106 = vrot.lane.b32.xlu0 %v1103, 64
        %v2107 = vpop.permute.xlu0 %2106
        %v2109 = vsel %vm1107, %v2105, 0
        %v2112 = vsel %vm1107, %v2107, 0
        %2114 = vmatprep.subr.bf16.mxu0 0
        %2115 = vmatpush1.bf16.xpose.msra.mxu0 0
        %2116 = vmatprep.subr.bf16.mxu0 0
        %2117 = vmatpush1.bf16.xpose.msra.mxu0 0
        %2118 = vmatprep.subr.bf16.mxu0 0
        %2119 = vmatpush1.bf16.xpose.msra.mxu0 0
        %2120 = vmatprep.subr.bf16.mxu0 0
        %2121 = vmatpush1.bf16.xpose.msra.mxu0 0
        %2122 = vmatprep.subr.bf16.mxu0 0
        %2123 = vmatpush1.bf16.xpose.msra.mxu0 0
        %2124 = vmatprep.subr.bf16.mxu0 0
        %2125 = vmatpush1.bf16.xpose.msra.mxu0 0
        %2126 = vmatprep.subr.bf16.mxu0 0
        %2127 = vmatpush1.bf16.xpose.msra.mxu0 0
        %2128 = vmatprep.subr.bf16.mxu0 0
        %2129 = vmatpush1.bf16.xpose.msra.mxu0 %v2112
        %2130 = vmatprep.subr.bf16.mxu0 0
        %2131 = vmatpush2.bf16.xpose.msra.mxu0 0
        %2132 = vmatprep.subr.bf16.mxu0 0
        %2133 = vmatpush2.bf16.xpose.msra.mxu0 0
        %2134 = vmatprep.subr.bf16.mxu0 0
        %2135 = vmatpush2.bf16.xpose.msra.mxu0 0
        %2136 = vmatprep.subr.bf16.mxu0 0
        %2137 = vmatpush2.bf16.xpose.msra.mxu0 0
        %2138 = vmatprep.subr.bf16.mxu0 0
        %2139 = vmatpush2.bf16.xpose.msra.mxu0 0
        %2140 = vmatprep.subr.bf16.mxu0 0
        %2141 = vmatpush2.bf16.xpose.msra.mxu0 0
        %2142 = vmatprep.subr.bf16.mxu0 0
        %2143 = vmatpush2.bf16.xpose.msra.mxu0 0
        %2144 = vmatprep.subr.bf16.mxu0 0
        %2145 = vmatpush2.bf16.xpose.msra.mxu0 0
        %2146 = vmatprep.mubr.bf16.mxu0 0
        %2147 = vmatmul.mubr.bf16.gmra.mxu0 %v2109
        %v2148 = vpop.f32.mrf.mxu0
        %v2149 = vadd.f32 0.0, %v2148
        %v2150 = vpop.f32.mrf.mxu0
        %v2151 = vpop.f32.mrf.mxu0
        %v2152 = vadd.f32 0.0, %v2151
        %v2153 = vpop.f32.mrf.mxu0
        %2154 = vdwg.mxu0
        %2155 = vrot.lane.b32.xlu0 %v1102, 64
        %v2156 = vpop.permute.xlu0 %2155
        %2157 = vrot.lane.b32.xlu0 %v1104, 64
        %v2158 = vpop.permute.xlu0 %2157
        %v2160 = vsel %vm1107, %v2156, 0
        %v2163 = vsel %vm1107, %v2158, 0
        %2165 = vmatprep.subr.bf16.mxu0 0
        %2166 = vmatpush1.bf16.xpose.msra.mxu0 0
        %2167 = vmatprep.subr.bf16.mxu0 0
        %2168 = vmatpush1.bf16.xpose.msra.mxu0 0
        %2169 = vmatprep.subr.bf16.mxu0 0
        %2170 = vmatpush1.bf16.xpose.msra.mxu0 0
        %2171 = vmatprep.subr.bf16.mxu0 0
        %2172 = vmatpush1.bf16.xpose.msra.mxu0 0
        %2173 = vmatprep.subr.bf16.mxu0 0
        %2174 = vmatpush1.bf16.xpose.msra.mxu0 0
        %2175 = vmatprep.subr.bf16.mxu0 0
        %2176 = vmatpush1.bf16.xpose.msra.mxu0 0
        %2177 = vmatprep.subr.bf16.mxu0 0
        %2178 = vmatpush1.bf16.xpose.msra.mxu0 0
        %2179 = vmatprep.subr.bf16.mxu0 0
        %2180 = vmatpush1.bf16.xpose.msra.mxu0 %v2163
        %2181 = vmatprep.subr.bf16.mxu0 0
        %2182 = vmatpush2.bf16.xpose.msra.mxu0 0
        %2183 = vmatprep.subr.bf16.mxu0 0
        %2184 = vmatpush2.bf16.xpose.msra.mxu0 0
        %2185 = vmatprep.subr.bf16.mxu0 0
        %2186 = vmatpush2.bf16.xpose.msra.mxu0 0
        %2187 = vmatprep.subr.bf16.mxu0 0
        %2188 = vmatpush2.bf16.xpose.msra.mxu0 0
        %2189 = vmatprep.subr.bf16.mxu0 0
        %2190 = vmatpush2.bf16.xpose.msra.mxu0 0
        %2191 = vmatprep.subr.bf16.mxu0 0
        %2192 = vmatpush2.bf16.xpose.msra.mxu0 0
        %2193 = vmatprep.subr.bf16.mxu0 0
        %2194 = vmatpush2.bf16.xpose.msra.mxu0 0
        %2195 = vmatprep.subr.bf16.mxu0 0
        %2196 = vmatpush2.bf16.xpose.msra.mxu0 0
        %2197 = vmatprep.mubr.bf16.mxu0 0
        %2198 = vmatmul.mubr.bf16.gmra.mxu0 %v2160
        %v2199 = vpop.f32.mrf.mxu0
        %v2200 = vadd.f32 0.0, %v2199
        %v2201 = vpop.f32.mrf.mxu0
        %v2202 = vpop.f32.mrf.mxu0
        %v2203 = vadd.f32 0.0, %v2202
        %v2204 = vpop.f32.mrf.mxu0
        %2205 = vdwg.mxu0
        %v2206 = vmul.f32 %v2149, 0.25
        %v2207 = vmul.f32 %v2152, 0.25
        %v2208 = vmul.f32 %v2200, 0.25
        %v2209 = vmul.f32 %v2203, 0.25
        %v2210 = vsel %vm1208, %v2206, -1e+30
        %v2211 = vsel %vm1209, %v2207, -1e+30
        %v2212 = vsel %vm1208, %v2208, -1e+30
        %v2213 = vsel %vm1209, %v2209, -1e+30
        %v2214 = vsel %vm1107, %v2210, -inf
        %2215 = vmax.xlane.f32.xlu0 %v2214
        %v2216 = vpop.xlane.xlu0 %2215
        %v2217 = vsel %vm1107, %v2211, -inf
        %2218 = vmax.xlane.f32.xlu0 %v2217
        %v2219 = vpop.xlane.xlu0 %2218
        %v2220 = vsel %vm1107, %v2212, -inf
        %2221 = vmax.xlane.f32.xlu0 %v2220
        %v2222 = vpop.xlane.xlu0 %2221
        %v2223 = vsel %vm1107, %v2213, -inf
        %2224 = vmax.xlane.f32.xlu0 %v2223
        %v2225 = vpop.xlane.xlu0 %2224
        %v2226 = vsub.f32 %v2210, %v2216
        %v2227 = vsub.f32 %v2211, %v2219
        %v2228 = vsub.f32 %v2212, %v2222
        %v2229 = vsub.f32 %v2213, %v2225
        %v2230 = vmul.f32 %v2226, 1.442695
        %v2231 = vpow.pop %v2230
        %v2232 = vmul.f32 %v2227, 1.442695
        %v2233 = vpow.pop %v2232
        %v2234 = vmul.f32 %v2228, 1.442695
        %v2235 = vpow.pop %v2234
        %v2236 = vmul.f32 %v2229, 1.442695
        %v2237 = vpow.pop %v2236
        %v2238 = vsel %vm1107, %v2231, 0.0
        %2239 = vadd.xlane.f32.xlu0 %v2238
        %v2240 = vpop.xlane.xlu0 %2239
        %v2241 = vsel %vm1107, %v2233, 0.0
        %2242 = vadd.xlane.f32.xlu0 %v2241
        %v2243 = vpop.xlane.xlu0 %2242
        %v2244 = vsel %vm1107, %v2235, 0.0
        %2245 = vadd.xlane.f32.xlu0 %v2244
        %v2246 = vpop.xlane.xlu0 %2245
        %v2247 = vsel %vm1107, %v2237, 0.0
        %2248 = vadd.xlane.f32.xlu0 %v2247
        %v2249 = vpop.xlane.xlu0 %2248
        %v2250 = vrcp.pop %v2240
        %v2251 = vrcp.pop %v2243
        %v2252 = vrcp.pop %v2246
        %v2253 = vrcp.pop %v2249
        %v2254 = vmul.f32 %v2231, %v2250
        %v2255 = vmul.f32 %v2233, %v2251
        %v2256 = vmul.f32 %v2235, %v2252
        %v2257 = vmul.f32 %v2237, %v2253
        %v2258 = vpack.c.bf16 %v2255, %v2254
        %v2259 = vpack.c.bf16 %v2257, %v2256
        %2260 = vrot.lane.b32.xlu0 %v1105, 64
        %v2261 = vpop.permute.xlu0 %2260
        %v2264 = vsel %vm1107, %v2258, 0
        %2266 = vmatprep.subr.bf16.mxu0 0
        %2267 = vmatpush1.bf16.msra.mxu0 0
        %2268 = vmatprep.subr.bf16.mxu0 0
        %2269 = vmatpush1.bf16.msra.mxu0 0
        %2270 = vmatprep.subr.bf16.mxu0 0
        %2271 = vmatpush1.bf16.msra.mxu0 0
        %2272 = vmatprep.subr.bf16.mxu0 0
        %2273 = vmatpush1.bf16.msra.mxu0 0
        %2274 = vmatprep.subr.bf16.mxu0 0
        %2275 = vmatpush1.bf16.msra.mxu0 0
        %2276 = vmatprep.subr.bf16.mxu0 0
        %2277 = vmatpush1.bf16.msra.mxu0 0
        %2278 = vmatprep.subr.bf16.mxu0 0
        %2279 = vmatpush1.bf16.msra.mxu0 0
        %2280 = vmatprep.subr.bf16.mxu0 0
        %2281 = vmatpush1.bf16.msra.mxu0 %v2261
        %2282 = vmatprep.subr.bf16.mxu0 0
        %2283 = vmatpush2.bf16.msra.mxu0 0
        %2284 = vmatprep.subr.bf16.mxu0 0
        %2285 = vmatpush2.bf16.msra.mxu0 0
        %2286 = vmatprep.subr.bf16.mxu0 0
        %2287 = vmatpush2.bf16.msra.mxu0 0
        %2288 = vmatprep.subr.bf16.mxu0 0
        %2289 = vmatpush2.bf16.msra.mxu0 0
        %2290 = vmatprep.subr.bf16.mxu0 0
        %2291 = vmatpush2.bf16.msra.mxu0 0
        %2292 = vmatprep.subr.bf16.mxu0 0
        %2293 = vmatpush2.bf16.msra.mxu0 0
        %2294 = vmatprep.subr.bf16.mxu0 0
        %2295 = vmatpush2.bf16.msra.mxu0 0
        %2296 = vmatprep.subr.bf16.mxu0 0
        %2297 = vmatpush2.bf16.msra.mxu0 0
        %2298 = vmatprep.mubr.bf16.mxu0 0
        %2299 = vmatmul.mubr.bf16.gmra.mxu0 %v2264
        %v2300 = vpop.f32.mrf.mxu0
        %v2301 = vadd.f32 0.0, %v2300
        %v2302 = vpop.f32.mrf.mxu0
        %v2303 = vpop.f32.mrf.mxu0
        %v2304 = vadd.f32 0.0, %v2303
        %v2305 = vpop.f32.mrf.mxu0
        %2306 = vdwg.mxu0
        %2307 = vrot.lane.b32.xlu0 %v1106, 64
        %v2308 = vpop.permute.xlu0 %2307
        %v2311 = vsel %vm1107, %v2259, 0
        %2313 = vmatprep.subr.bf16.mxu0 0
        %2314 = vmatpush1.bf16.msra.mxu0 0
        %2315 = vmatprep.subr.bf16.mxu0 0
        %2316 = vmatpush1.bf16.msra.mxu0 0
        %2317 = vmatprep.subr.bf16.mxu0 0
        %2318 = vmatpush1.bf16.msra.mxu0 0
        %2319 = vmatprep.subr.bf16.mxu0 0
        %2320 = vmatpush1.bf16.msra.mxu0 0
        %2321 = vmatprep.subr.bf16.mxu0 0
        %2322 = vmatpush1.bf16.msra.mxu0 0
        %2323 = vmatprep.subr.bf16.mxu0 0
        %2324 = vmatpush1.bf16.msra.mxu0 0
        %2325 = vmatprep.subr.bf16.mxu0 0
        %2326 = vmatpush1.bf16.msra.mxu0 0
        %2327 = vmatprep.subr.bf16.mxu0 0
        %2328 = vmatpush1.bf16.msra.mxu0 %v2308
        %2329 = vmatprep.subr.bf16.mxu0 0
        %2330 = vmatpush2.bf16.msra.mxu0 0
        %2331 = vmatprep.subr.bf16.mxu0 0
        %2332 = vmatpush2.bf16.msra.mxu0 0
        %2333 = vmatprep.subr.bf16.mxu0 0
        %2334 = vmatpush2.bf16.msra.mxu0 0
        %2335 = vmatprep.subr.bf16.mxu0 0
        %2336 = vmatpush2.bf16.msra.mxu0 0
        %2337 = vmatprep.subr.bf16.mxu0 0
        %2338 = vmatpush2.bf16.msra.mxu0 0
        %2339 = vmatprep.subr.bf16.mxu0 0
        %2340 = vmatpush2.bf16.msra.mxu0 0
        %2341 = vmatprep.subr.bf16.mxu0 0
        %2342 = vmatpush2.bf16.msra.mxu0 0
        %2343 = vmatprep.subr.bf16.mxu0 0
        %2344 = vmatpush2.bf16.msra.mxu0 0
        %2345 = vmatprep.mubr.bf16.mxu0 0
        %2346 = vmatmul.mubr.bf16.gmra.mxu0 %v2311
        %v2347 = vpop.f32.mrf.mxu0
        %v2348 = vadd.f32 0.0, %v2347
        %v2349 = vpop.f32.mrf.mxu0
        %v2350 = vpop.f32.mrf.mxu0
        %v2351 = vadd.f32 0.0, %v2350
        %v2352 = vpop.f32.mrf.mxu0
        %2353 = vdwg.mxu0
        %2354 = vrot.lane.b32.xlu0 %v1101, 48
        %v2355 = vpop.permute.xlu0 %2354
        %2356 = vrot.lane.b32.xlu0 %v1103, 48
        %v2357 = vpop.permute.xlu0 %2356
        %v2359 = vsel %vm1107, %v2355, 0
        %v2362 = vsel %vm1107, %v2357, 0
        %2364 = vmatprep.subr.bf16.mxu0 0
        %2365 = vmatpush1.bf16.xpose.msra.mxu0 0
        %2366 = vmatprep.subr.bf16.mxu0 0
        %2367 = vmatpush1.bf16.xpose.msra.mxu0 0
        %2368 = vmatprep.subr.bf16.mxu0 0
        %2369 = vmatpush1.bf16.xpose.msra.mxu0 0
        %2370 = vmatprep.subr.bf16.mxu0 0
        %2371 = vmatpush1.bf16.xpose.msra.mxu0 0
        %2372 = vmatprep.subr.bf16.mxu0 0
        %2373 = vmatpush1.bf16.xpose.msra.mxu0 0
        %2374 = vmatprep.subr.bf16.mxu0 0
        %2375 = vmatpush1.bf16.xpose.msra.mxu0 0
        %2376 = vmatprep.subr.bf16.mxu0 0
        %2377 = vmatpush1.bf16.xpose.msra.mxu0 0
        %2378 = vmatprep.subr.bf16.mxu0 0
        %2379 = vmatpush1.bf16.xpose.msra.mxu0 %v2362
        %2380 = vmatprep.subr.bf16.mxu0 0
        %2381 = vmatpush2.bf16.xpose.msra.mxu0 0
        %2382 = vmatprep.subr.bf16.mxu0 0
        %2383 = vmatpush2.bf16.xpose.msra.mxu0 0
        %2384 = vmatprep.subr.bf16.mxu0 0
        %2385 = vmatpush2.bf16.xpose.msra.mxu0 0
        %2386 = vmatprep.subr.bf16.mxu0 0
        %2387 = vmatpush2.bf16.xpose.msra.mxu0 0
        %2388 = vmatprep.subr.bf16.mxu0 0
        %2389 = vmatpush2.bf16.xpose.msra.mxu0 0
        %2390 = vmatprep.subr.bf16.mxu0 0
        %2391 = vmatpush2.bf16.xpose.msra.mxu0 0
        %2392 = vmatprep.subr.bf16.mxu0 0
        %2393 = vmatpush2.bf16.xpose.msra.mxu0 0
        %2394 = vmatprep.subr.bf16.mxu0 0
        %2395 = vmatpush2.bf16.xpose.msra.mxu0 0
        %2396 = vmatprep.mubr.bf16.mxu0 0
        %2397 = vmatmul.mubr.bf16.gmra.mxu0 %v2359
        %v2398 = vpop.f32.mrf.mxu0
        %v2399 = vadd.f32 0.0, %v2398
        %v2400 = vpop.f32.mrf.mxu0
        %v2401 = vpop.f32.mrf.mxu0
        %v2402 = vadd.f32 0.0, %v2401
        %v2403 = vpop.f32.mrf.mxu0
        %2404 = vdwg.mxu0
        %2405 = vrot.lane.b32.xlu0 %v1102, 48
        %v2406 = vpop.permute.xlu0 %2405
        %2407 = vrot.lane.b32.xlu0 %v1104, 48
        %v2408 = vpop.permute.xlu0 %2407
        %v2410 = vsel %vm1107, %v2406, 0
        %v2413 = vsel %vm1107, %v2408, 0
        %2415 = vmatprep.subr.bf16.mxu0 0
        %2416 = vmatpush1.bf16.xpose.msra.mxu0 0
        %2417 = vmatprep.subr.bf16.mxu0 0
        %2418 = vmatpush1.bf16.xpose.msra.mxu0 0
        %2419 = vmatprep.subr.bf16.mxu0 0
        %2420 = vmatpush1.bf16.xpose.msra.mxu0 0
        %2421 = vmatprep.subr.bf16.mxu0 0
        %2422 = vmatpush1.bf16.xpose.msra.mxu0 0
        %2423 = vmatprep.subr.bf16.mxu0 0
        %2424 = vmatpush1.bf16.xpose.msra.mxu0 0
        %2425 = vmatprep.subr.bf16.mxu0 0
        %2426 = vmatpush1.bf16.xpose.msra.mxu0 0
        %2427 = vmatprep.subr.bf16.mxu0 0
        %2428 = vmatpush1.bf16.xpose.msra.mxu0 0
        %2429 = vmatprep.subr.bf16.mxu0 0
        %2430 = vmatpush1.bf16.xpose.msra.mxu0 %v2413
        %2431 = vmatprep.subr.bf16.mxu0 0
        %2432 = vmatpush2.bf16.xpose.msra.mxu0 0
        %2433 = vmatprep.subr.bf16.mxu0 0
        %2434 = vmatpush2.bf16.xpose.msra.mxu0 0
        %2435 = vmatprep.subr.bf16.mxu0 0
        %2436 = vmatpush2.bf16.xpose.msra.mxu0 0
        %2437 = vmatprep.subr.bf16.mxu0 0
        %2438 = vmatpush2.bf16.xpose.msra.mxu0 0
        %2439 = vmatprep.subr.bf16.mxu0 0
        %2440 = vmatpush2.bf16.xpose.msra.mxu0 0
        %2441 = vmatprep.subr.bf16.mxu0 0
        %2442 = vmatpush2.bf16.xpose.msra.mxu0 0
        %2443 = vmatprep.subr.bf16.mxu0 0
        %2444 = vmatpush2.bf16.xpose.msra.mxu0 0
        %2445 = vmatprep.subr.bf16.mxu0 0
        %2446 = vmatpush2.bf16.xpose.msra.mxu0 0
        %2447 = vmatprep.mubr.bf16.mxu0 0
        %2448 = vmatmul.mubr.bf16.gmra.mxu0 %v2410
        %v2449 = vpop.f32.mrf.mxu0
        %v2450 = vadd.f32 0.0, %v2449
        %v2451 = vpop.f32.mrf.mxu0
        %v2452 = vpop.f32.mrf.mxu0
        %v2453 = vadd.f32 0.0, %v2452
        %v2454 = vpop.f32.mrf.mxu0
        %2455 = vdwg.mxu0
        %v2456 = vmul.f32 %v2399, 0.25
        %v2457 = vmul.f32 %v2402, 0.25
        %v2458 = vmul.f32 %v2450, 0.25
        %v2459 = vmul.f32 %v2453, 0.25
        %v2460 = vsel %vm1208, %v2456, -1e+30
        %v2461 = vsel %vm1209, %v2457, -1e+30
        %v2462 = vsel %vm1208, %v2458, -1e+30
        %v2463 = vsel %vm1209, %v2459, -1e+30
        %v2464 = vsel %vm1107, %v2460, -inf
        %2465 = vmax.xlane.f32.xlu0 %v2464
        %v2466 = vpop.xlane.xlu0 %2465
        %v2467 = vsel %vm1107, %v2461, -inf
        %2468 = vmax.xlane.f32.xlu0 %v2467
        %v2469 = vpop.xlane.xlu0 %2468
        %v2470 = vsel %vm1107, %v2462, -inf
        %2471 = vmax.xlane.f32.xlu0 %v2470
        %v2472 = vpop.xlane.xlu0 %2471
        %v2473 = vsel %vm1107, %v2463, -inf
        %2474 = vmax.xlane.f32.xlu0 %v2473
        %v2475 = vpop.xlane.xlu0 %2474
        %v2476 = vsub.f32 %v2460, %v2466
        %v2477 = vsub.f32 %v2461, %v2469
        %v2478 = vsub.f32 %v2462, %v2472
        %v2479 = vsub.f32 %v2463, %v2475
        %v2480 = vmul.f32 %v2476, 1.442695
        %v2481 = vpow.pop %v2480
        %v2482 = vmul.f32 %v2477, 1.442695
        %v2483 = vpow.pop %v2482
        %v2484 = vmul.f32 %v2478, 1.442695
        %v2485 = vpow.pop %v2484
        %v2486 = vmul.f32 %v2479, 1.442695
        %v2487 = vpow.pop %v2486
        %v2488 = vsel %vm1107, %v2481, 0.0
        %2489 = vadd.xlane.f32.xlu0 %v2488
        %v2490 = vpop.xlane.xlu0 %2489
        %v2491 = vsel %vm1107, %v2483, 0.0
        %2492 = vadd.xlane.f32.xlu0 %v2491
        %v2493 = vpop.xlane.xlu0 %2492
        %v2494 = vsel %vm1107, %v2485, 0.0
        %2495 = vadd.xlane.f32.xlu0 %v2494
        %v2496 = vpop.xlane.xlu0 %2495
        %v2497 = vsel %vm1107, %v2487, 0.0
        %2498 = vadd.xlane.f32.xlu0 %v2497
        %v2499 = vpop.xlane.xlu0 %2498
        %v2500 = vrcp.pop %v2490
        %v2501 = vrcp.pop %v2493
        %v2502 = vrcp.pop %v2496
        %v2503 = vrcp.pop %v2499
        %v2504 = vmul.f32 %v2481, %v2500
        %v2505 = vmul.f32 %v2483, %v2501
        %v2506 = vmul.f32 %v2485, %v2502
        %v2507 = vmul.f32 %v2487, %v2503
        %v2508 = vpack.c.bf16 %v2505, %v2504
        %v2509 = vpack.c.bf16 %v2507, %v2506
        %2510 = vrot.lane.b32.xlu0 %v1105, 48
        %v2511 = vpop.permute.xlu0 %2510
        %v2514 = vsel %vm1107, %v2508, 0
        %2516 = vmatprep.subr.bf16.mxu0 0
        %2517 = vmatpush1.bf16.msra.mxu0 0
        %2518 = vmatprep.subr.bf16.mxu0 0
        %2519 = vmatpush1.bf16.msra.mxu0 0
        %2520 = vmatprep.subr.bf16.mxu0 0
        %2521 = vmatpush1.bf16.msra.mxu0 0
        %2522 = vmatprep.subr.bf16.mxu0 0
        %2523 = vmatpush1.bf16.msra.mxu0 0
        %2524 = vmatprep.subr.bf16.mxu0 0
        %2525 = vmatpush1.bf16.msra.mxu0 0
        %2526 = vmatprep.subr.bf16.mxu0 0
        %2527 = vmatpush1.bf16.msra.mxu0 0
        %2528 = vmatprep.subr.bf16.mxu0 0
        %2529 = vmatpush1.bf16.msra.mxu0 0
        %2530 = vmatprep.subr.bf16.mxu0 0
        %2531 = vmatpush1.bf16.msra.mxu0 %v2511
        %2532 = vmatprep.subr.bf16.mxu0 0
        %2533 = vmatpush2.bf16.msra.mxu0 0
        %2534 = vmatprep.subr.bf16.mxu0 0
        %2535 = vmatpush2.bf16.msra.mxu0 0
        %2536 = vmatprep.subr.bf16.mxu0 0
        %2537 = vmatpush2.bf16.msra.mxu0 0
        %2538 = vmatprep.subr.bf16.mxu0 0
        %2539 = vmatpush2.bf16.msra.mxu0 0
        %2540 = vmatprep.subr.bf16.mxu0 0
        %2541 = vmatpush2.bf16.msra.mxu0 0
        %2542 = vmatprep.subr.bf16.mxu0 0
        %2543 = vmatpush2.bf16.msra.mxu0 0
        %2544 = vmatprep.subr.bf16.mxu0 0
        %2545 = vmatpush2.bf16.msra.mxu0 0
        %2546 = vmatprep.subr.bf16.mxu0 0
        %2547 = vmatpush2.bf16.msra.mxu0 0
        %2548 = vmatprep.mubr.bf16.mxu0 0
        %2549 = vmatmul.mubr.bf16.gmra.mxu0 %v2514
        %v2550 = vpop.f32.mrf.mxu0
        %v2551 = vadd.f32 0.0, %v2550
        %v2552 = vpop.f32.mrf.mxu0
        %v2553 = vpop.f32.mrf.mxu0
        %v2554 = vadd.f32 0.0, %v2553
        %v2555 = vpop.f32.mrf.mxu0
        %2556 = vdwg.mxu0
        %2557 = vrot.lane.b32.xlu0 %v1106, 48
        %v2558 = vpop.permute.xlu0 %2557
        %v2561 = vsel %vm1107, %v2509, 0
        %2563 = vmatprep.subr.bf16.mxu0 0
        %2564 = vmatpush1.bf16.msra.mxu0 0
        %2565 = vmatprep.subr.bf16.mxu0 0
        %2566 = vmatpush1.bf16.msra.mxu0 0
        %2567 = vmatprep.subr.bf16.mxu0 0
        %2568 = vmatpush1.bf16.msra.mxu0 0
        %2569 = vmatprep.subr.bf16.mxu0 0
        %2570 = vmatpush1.bf16.msra.mxu0 0
        %2571 = vmatprep.subr.bf16.mxu0 0
        %2572 = vmatpush1.bf16.msra.mxu0 0
        %2573 = vmatprep.subr.bf16.mxu0 0
        %2574 = vmatpush1.bf16.msra.mxu0 0
        %2575 = vmatprep.subr.bf16.mxu0 0
        %2576 = vmatpush1.bf16.msra.mxu0 0
        %2577 = vmatprep.subr.bf16.mxu0 0
        %2578 = vmatpush1.bf16.msra.mxu0 %v2558
        %2579 = vmatprep.subr.bf16.mxu0 0
        %2580 = vmatpush2.bf16.msra.mxu0 0
        %2581 = vmatprep.subr.bf16.mxu0 0
        %2582 = vmatpush2.bf16.msra.mxu0 0
        %2583 = vmatprep.subr.bf16.mxu0 0
        %2584 = vmatpush2.bf16.msra.mxu0 0
        %2585 = vmatprep.subr.bf16.mxu0 0
        %2586 = vmatpush2.bf16.msra.mxu0 0
        %2587 = vmatprep.subr.bf16.mxu0 0
        %2588 = vmatpush2.bf16.msra.mxu0 0
        %2589 = vmatprep.subr.bf16.mxu0 0
        %2590 = vmatpush2.bf16.msra.mxu0 0
        %2591 = vmatprep.subr.bf16.mxu0 0
        %2592 = vmatpush2.bf16.msra.mxu0 0
        %2593 = vmatprep.subr.bf16.mxu0 0
        %2594 = vmatpush2.bf16.msra.mxu0 0
        %2595 = vmatprep.mubr.bf16.mxu0 0
        %2596 = vmatmul.mubr.bf16.gmra.mxu0 %v2561
        %v2597 = vpop.f32.mrf.mxu0
        %v2598 = vadd.f32 0.0, %v2597
        %v2599 = vpop.f32.mrf.mxu0
        %v2600 = vpop.f32.mrf.mxu0
        %v2601 = vadd.f32 0.0, %v2600
        %v2602 = vpop.f32.mrf.mxu0
        %2603 = vdwg.mxu0
        %2604 = vrot.lane.b32.xlu0 %v1101, 32
        %v2605 = vpop.permute.xlu0 %2604
        %2606 = vrot.lane.b32.xlu0 %v1103, 32
        %v2607 = vpop.permute.xlu0 %2606
        %v2609 = vsel %vm1107, %v2605, 0
        %v2612 = vsel %vm1107, %v2607, 0
        %2614 = vmatprep.subr.bf16.mxu0 0
        %2615 = vmatpush1.bf16.xpose.msra.mxu0 0
        %2616 = vmatprep.subr.bf16.mxu0 0
        %2617 = vmatpush1.bf16.xpose.msra.mxu0 0
        %2618 = vmatprep.subr.bf16.mxu0 0
        %2619 = vmatpush1.bf16.xpose.msra.mxu0 0
        %2620 = vmatprep.subr.bf16.mxu0 0
        %2621 = vmatpush1.bf16.xpose.msra.mxu0 0
        %2622 = vmatprep.subr.bf16.mxu0 0
        %2623 = vmatpush1.bf16.xpose.msra.mxu0 0
        %2624 = vmatprep.subr.bf16.mxu0 0
        %2625 = vmatpush1.bf16.xpose.msra.mxu0 0
        %2626 = vmatprep.subr.bf16.mxu0 0
        %2627 = vmatpush1.bf16.xpose.msra.mxu0 0
        %2628 = vmatprep.subr.bf16.mxu0 0
        %2629 = vmatpush1.bf16.xpose.msra.mxu0 %v2612
        %2630 = vmatprep.subr.bf16.mxu0 0
        %2631 = vmatpush2.bf16.xpose.msra.mxu0 0
        %2632 = vmatprep.subr.bf16.mxu0 0
        %2633 = vmatpush2.bf16.xpose.msra.mxu0 0
        %2634 = vmatprep.subr.bf16.mxu0 0
        %2635 = vmatpush2.bf16.xpose.msra.mxu0 0
        %2636 = vmatprep.subr.bf16.mxu0 0
        %2637 = vmatpush2.bf16.xpose.msra.mxu0 0
        %2638 = vmatprep.subr.bf16.mxu0 0
        %2639 = vmatpush2.bf16.xpose.msra.mxu0 0
        %2640 = vmatprep.subr.bf16.mxu0 0
        %2641 = vmatpush2.bf16.xpose.msra.mxu0 0
        %2642 = vmatprep.subr.bf16.mxu0 0
        %2643 = vmatpush2.bf16.xpose.msra.mxu0 0
        %2644 = vmatprep.subr.bf16.mxu0 0
        %2645 = vmatpush2.bf16.xpose.msra.mxu0 0
        %2646 = vmatprep.mubr.bf16.mxu0 0
        %2647 = vmatmul.mubr.bf16.gmra.mxu0 %v2609
        %v2648 = vpop.f32.mrf.mxu0
        %v2649 = vadd.f32 0.0, %v2648
        %v2650 = vpop.f32.mrf.mxu0
        %v2651 = vpop.f32.mrf.mxu0
        %v2652 = vadd.f32 0.0, %v2651
        %v2653 = vpop.f32.mrf.mxu0
        %2654 = vdwg.mxu0
        %2655 = vrot.lane.b32.xlu0 %v1102, 32
        %v2656 = vpop.permute.xlu0 %2655
        %2657 = vrot.lane.b32.xlu0 %v1104, 32
        %v2658 = vpop.permute.xlu0 %2657
        %v2660 = vsel %vm1107, %v2656, 0
        %v2663 = vsel %vm1107, %v2658, 0
        %2665 = vmatprep.subr.bf16.mxu0 0
        %2666 = vmatpush1.bf16.xpose.msra.mxu0 0
        %2667 = vmatprep.subr.bf16.mxu0 0
        %2668 = vmatpush1.bf16.xpose.msra.mxu0 0
        %2669 = vmatprep.subr.bf16.mxu0 0
        %2670 = vmatpush1.bf16.xpose.msra.mxu0 0
        %2671 = vmatprep.subr.bf16.mxu0 0
        %2672 = vmatpush1.bf16.xpose.msra.mxu0 0
        %2673 = vmatprep.subr.bf16.mxu0 0
        %2674 = vmatpush1.bf16.xpose.msra.mxu0 0
        %2675 = vmatprep.subr.bf16.mxu0 0
        %2676 = vmatpush1.bf16.xpose.msra.mxu0 0
        %2677 = vmatprep.subr.bf16.mxu0 0
        %2678 = vmatpush1.bf16.xpose.msra.mxu0 0
        %2679 = vmatprep.subr.bf16.mxu0 0
        %2680 = vmatpush1.bf16.xpose.msra.mxu0 %v2663
        %2681 = vmatprep.subr.bf16.mxu0 0
        %2682 = vmatpush2.bf16.xpose.msra.mxu0 0
        %2683 = vmatprep.subr.bf16.mxu0 0
        %2684 = vmatpush2.bf16.xpose.msra.mxu0 0
        %2685 = vmatprep.subr.bf16.mxu0 0
        %2686 = vmatpush2.bf16.xpose.msra.mxu0 0
        %2687 = vmatprep.subr.bf16.mxu0 0
        %2688 = vmatpush2.bf16.xpose.msra.mxu0 0
        %2689 = vmatprep.subr.bf16.mxu0 0
        %2690 = vmatpush2.bf16.xpose.msra.mxu0 0
        %2691 = vmatprep.subr.bf16.mxu0 0
        %2692 = vmatpush2.bf16.xpose.msra.mxu0 0
        %2693 = vmatprep.subr.bf16.mxu0 0
        %2694 = vmatpush2.bf16.xpose.msra.mxu0 0
        %2695 = vmatprep.subr.bf16.mxu0 0
        %2696 = vmatpush2.bf16.xpose.msra.mxu0 0
        %2697 = vmatprep.mubr.bf16.mxu0 0
        %2698 = vmatmul.mubr.bf16.gmra.mxu0 %v2660
        %v2699 = vpop.f32.mrf.mxu0
        %v2700 = vadd.f32 0.0, %v2699
        %v2701 = vpop.f32.mrf.mxu0
        %v2702 = vpop.f32.mrf.mxu0
        %v2703 = vadd.f32 0.0, %v2702
        %v2704 = vpop.f32.mrf.mxu0
        %2705 = vdwg.mxu0
        %v2706 = vmul.f32 %v2649, 0.25
        %v2707 = vmul.f32 %v2652, 0.25
        %v2708 = vmul.f32 %v2700, 0.25
        %v2709 = vmul.f32 %v2703, 0.25
        %v2710 = vsel %vm1208, %v2706, -1e+30
        %v2711 = vsel %vm1209, %v2707, -1e+30
        %v2712 = vsel %vm1208, %v2708, -1e+30
        %v2713 = vsel %vm1209, %v2709, -1e+30
        %v2714 = vsel %vm1107, %v2710, -inf
        %2715 = vmax.xlane.f32.xlu0 %v2714
        %v2716 = vpop.xlane.xlu0 %2715
        %v2717 = vsel %vm1107, %v2711, -inf
        %2718 = vmax.xlane.f32.xlu0 %v2717
        %v2719 = vpop.xlane.xlu0 %2718
        %v2720 = vsel %vm1107, %v2712, -inf
        %2721 = vmax.xlane.f32.xlu0 %v2720
        %v2722 = vpop.xlane.xlu0 %2721
        %v2723 = vsel %vm1107, %v2713, -inf
        %2724 = vmax.xlane.f32.xlu0 %v2723
        %v2725 = vpop.xlane.xlu0 %2724
        %v2726 = vsub.f32 %v2710, %v2716
        %v2727 = vsub.f32 %v2711, %v2719
        %v2728 = vsub.f32 %v2712, %v2722
        %v2729 = vsub.f32 %v2713, %v2725
        %v2730 = vmul.f32 %v2726, 1.442695
        %v2731 = vpow.pop %v2730
        %v2732 = vmul.f32 %v2727, 1.442695
        %v2733 = vpow.pop %v2732
        %v2734 = vmul.f32 %v2728, 1.442695
        %v2735 = vpow.pop %v2734
        %v2736 = vmul.f32 %v2729, 1.442695
        %v2737 = vpow.pop %v2736
        %v2738 = vsel %vm1107, %v2731, 0.0
        %2739 = vadd.xlane.f32.xlu0 %v2738
        %v2740 = vpop.xlane.xlu0 %2739
        %v2741 = vsel %vm1107, %v2733, 0.0
        %2742 = vadd.xlane.f32.xlu0 %v2741
        %v2743 = vpop.xlane.xlu0 %2742
        %v2744 = vsel %vm1107, %v2735, 0.0
        %2745 = vadd.xlane.f32.xlu0 %v2744
        %v2746 = vpop.xlane.xlu0 %2745
        %v2747 = vsel %vm1107, %v2737, 0.0
        %2748 = vadd.xlane.f32.xlu0 %v2747
        %v2749 = vpop.xlane.xlu0 %2748
        %v2750 = vrcp.pop %v2740
        %v2751 = vrcp.pop %v2743
        %v2752 = vrcp.pop %v2746
        %v2753 = vrcp.pop %v2749
        %v2754 = vmul.f32 %v2731, %v2750
        %v2755 = vmul.f32 %v2733, %v2751
        %v2756 = vmul.f32 %v2735, %v2752
        %v2757 = vmul.f32 %v2737, %v2753
        %v2758 = vpack.c.bf16 %v2755, %v2754
        %v2759 = vpack.c.bf16 %v2757, %v2756
        %2760 = vrot.lane.b32.xlu0 %v1105, 32
        %v2761 = vpop.permute.xlu0 %2760
        %v2764 = vsel %vm1107, %v2758, 0
        %2766 = vmatprep.subr.bf16.mxu0 0
        %2767 = vmatpush1.bf16.msra.mxu0 0
        %2768 = vmatprep.subr.bf16.mxu0 0
        %2769 = vmatpush1.bf16.msra.mxu0 0
        %2770 = vmatprep.subr.bf16.mxu0 0
        %2771 = vmatpush1.bf16.msra.mxu0 0
        %2772 = vmatprep.subr.bf16.mxu0 0
        %2773 = vmatpush1.bf16.msra.mxu0 0
        %2774 = vmatprep.subr.bf16.mxu0 0
        %2775 = vmatpush1.bf16.msra.mxu0 0
        %2776 = vmatprep.subr.bf16.mxu0 0
        %2777 = vmatpush1.bf16.msra.mxu0 0
        %2778 = vmatprep.subr.bf16.mxu0 0
        %2779 = vmatpush1.bf16.msra.mxu0 0
        %2780 = vmatprep.subr.bf16.mxu0 0
        %2781 = vmatpush1.bf16.msra.mxu0 %v2761
        %2782 = vmatprep.subr.bf16.mxu0 0
        %2783 = vmatpush2.bf16.msra.mxu0 0
        %2784 = vmatprep.subr.bf16.mxu0 0
        %2785 = vmatpush2.bf16.msra.mxu0 0
        %2786 = vmatprep.subr.bf16.mxu0 0
        %2787 = vmatpush2.bf16.msra.mxu0 0
        %2788 = vmatprep.subr.bf16.mxu0 0
        %2789 = vmatpush2.bf16.msra.mxu0 0
        %2790 = vmatprep.subr.bf16.mxu0 0
        %2791 = vmatpush2.bf16.msra.mxu0 0
        %2792 = vmatprep.subr.bf16.mxu0 0
        %2793 = vmatpush2.bf16.msra.mxu0 0
        %2794 = vmatprep.subr.bf16.mxu0 0
        %2795 = vmatpush2.bf16.msra.mxu0 0
        %2796 = vmatprep.subr.bf16.mxu0 0
        %2797 = vmatpush2.bf16.msra.mxu0 0
        %2798 = vmatprep.mubr.bf16.mxu0 0
        %2799 = vmatmul.mubr.bf16.gmra.mxu0 %v2764
        %v2800 = vpop.f32.mrf.mxu0
        %v2801 = vadd.f32 0.0, %v2800
        %v2802 = vpop.f32.mrf.mxu0
        %v2803 = vpop.f32.mrf.mxu0
        %v2804 = vadd.f32 0.0, %v2803
        %v2805 = vpop.f32.mrf.mxu0
        %2806 = vdwg.mxu0
        %2807 = vrot.lane.b32.xlu0 %v1106, 32
        %v2808 = vpop.permute.xlu0 %2807
        %v2811 = vsel %vm1107, %v2759, 0
        %2813 = vmatprep.subr.bf16.mxu0 0
        %2814 = vmatpush1.bf16.msra.mxu0 0
        %2815 = vmatprep.subr.bf16.mxu0 0
        %2816 = vmatpush1.bf16.msra.mxu0 0
        %2817 = vmatprep.subr.bf16.mxu0 0
        %2818 = vmatpush1.bf16.msra.mxu0 0
        %2819 = vmatprep.subr.bf16.mxu0 0
        %2820 = vmatpush1.bf16.msra.mxu0 0
        %2821 = vmatprep.subr.bf16.mxu0 0
        %2822 = vmatpush1.bf16.msra.mxu0 0
        %2823 = vmatprep.subr.bf16.mxu0 0
        %2824 = vmatpush1.bf16.msra.mxu0 0
        %2825 = vmatprep.subr.bf16.mxu0 0
        %2826 = vmatpush1.bf16.msra.mxu0 0
        %2827 = vmatprep.subr.bf16.mxu0 0
        %2828 = vmatpush1.bf16.msra.mxu0 %v2808
        %2829 = vmatprep.subr.bf16.mxu0 0
        %2830 = vmatpush2.bf16.msra.mxu0 0
        %2831 = vmatprep.subr.bf16.mxu0 0
        %2832 = vmatpush2.bf16.msra.mxu0 0
        %2833 = vmatprep.subr.bf16.mxu0 0
        %2834 = vmatpush2.bf16.msra.mxu0 0
        %2835 = vmatprep.subr.bf16.mxu0 0
        %2836 = vmatpush2.bf16.msra.mxu0 0
        %2837 = vmatprep.subr.bf16.mxu0 0
        %2838 = vmatpush2.bf16.msra.mxu0 0
        %2839 = vmatprep.subr.bf16.mxu0 0
        %2840 = vmatpush2.bf16.msra.mxu0 0
        %2841 = vmatprep.subr.bf16.mxu0 0
        %2842 = vmatpush2.bf16.msra.mxu0 0
        %2843 = vmatprep.subr.bf16.mxu0 0
        %2844 = vmatpush2.bf16.msra.mxu0 0
        %2845 = vmatprep.mubr.bf16.mxu0 0
        %2846 = vmatmul.mubr.bf16.gmra.mxu0 %v2811
        %v2847 = vpop.f32.mrf.mxu0
        %v2848 = vadd.f32 0.0, %v2847
        %v2849 = vpop.f32.mrf.mxu0
        %v2850 = vpop.f32.mrf.mxu0
        %v2851 = vadd.f32 0.0, %v2850
        %v2852 = vpop.f32.mrf.mxu0
        %2853 = vdwg.mxu0
        %2854 = vrot.lane.b32.xlu0 %v1101, 16
        %v2855 = vpop.permute.xlu0 %2854
        %2856 = vrot.lane.b32.xlu0 %v1103, 16
        %v2857 = vpop.permute.xlu0 %2856
        %v2859 = vsel %vm1107, %v2855, 0
        %v2862 = vsel %vm1107, %v2857, 0
        %2864 = vmatprep.subr.bf16.mxu0 0
        %2865 = vmatpush1.bf16.xpose.msra.mxu0 0
        %2866 = vmatprep.subr.bf16.mxu0 0
        %2867 = vmatpush1.bf16.xpose.msra.mxu0 0
        %2868 = vmatprep.subr.bf16.mxu0 0
        %2869 = vmatpush1.bf16.xpose.msra.mxu0 0
        %2870 = vmatprep.subr.bf16.mxu0 0
        %2871 = vmatpush1.bf16.xpose.msra.mxu0 0
        %2872 = vmatprep.subr.bf16.mxu0 0
        %2873 = vmatpush1.bf16.xpose.msra.mxu0 0
        %2874 = vmatprep.subr.bf16.mxu0 0
        %2875 = vmatpush1.bf16.xpose.msra.mxu0 0
        %2876 = vmatprep.subr.bf16.mxu0 0
        %2877 = vmatpush1.bf16.xpose.msra.mxu0 0
        %2878 = vmatprep.subr.bf16.mxu0 0
        %2879 = vmatpush1.bf16.xpose.msra.mxu0 %v2862
        %2880 = vmatprep.subr.bf16.mxu0 0
        %2881 = vmatpush2.bf16.xpose.msra.mxu0 0
        %2882 = vmatprep.subr.bf16.mxu0 0
        %2883 = vmatpush2.bf16.xpose.msra.mxu0 0
        %2884 = vmatprep.subr.bf16.mxu0 0
        %2885 = vmatpush2.bf16.xpose.msra.mxu0 0
        %2886 = vmatprep.subr.bf16.mxu0 0
        %2887 = vmatpush2.bf16.xpose.msra.mxu0 0
        %2888 = vmatprep.subr.bf16.mxu0 0
        %2889 = vmatpush2.bf16.xpose.msra.mxu0 0
        %2890 = vmatprep.subr.bf16.mxu0 0
        %2891 = vmatpush2.bf16.xpose.msra.mxu0 0
        %2892 = vmatprep.subr.bf16.mxu0 0
        %2893 = vmatpush2.bf16.xpose.msra.mxu0 0
        %2894 = vmatprep.subr.bf16.mxu0 0
        %2895 = vmatpush2.bf16.xpose.msra.mxu0 0
        %2896 = vmatprep.mubr.bf16.mxu0 0
        %2897 = vmatmul.mubr.bf16.gmra.mxu0 %v2859
        %v2898 = vpop.f32.mrf.mxu0
        %v2899 = vadd.f32 0.0, %v2898
        %v2900 = vpop.f32.mrf.mxu0
        %v2901 = vpop.f32.mrf.mxu0
        %v2902 = vadd.f32 0.0, %v2901
        %v2903 = vpop.f32.mrf.mxu0
        %2904 = vdwg.mxu0
        %2905 = vrot.lane.b32.xlu0 %v1102, 16
        %v2906 = vpop.permute.xlu0 %2905
        %2907 = vrot.lane.b32.xlu0 %v1104, 16
        %v2908 = vpop.permute.xlu0 %2907
        %v2910 = vsel %vm1107, %v2906, 0
        %v2913 = vsel %vm1107, %v2908, 0
        %2915 = vmatprep.subr.bf16.mxu0 0
        %2916 = vmatpush1.bf16.xpose.msra.mxu0 0
        %2917 = vmatprep.subr.bf16.mxu0 0
        %2918 = vmatpush1.bf16.xpose.msra.mxu0 0
        %2919 = vmatprep.subr.bf16.mxu0 0
        %2920 = vmatpush1.bf16.xpose.msra.mxu0 0
        %2921 = vmatprep.subr.bf16.mxu0 0
        %2922 = vmatpush1.bf16.xpose.msra.mxu0 0
        %2923 = vmatprep.subr.bf16.mxu0 0
        %2924 = vmatpush1.bf16.xpose.msra.mxu0 0
        %2925 = vmatprep.subr.bf16.mxu0 0
        %2926 = vmatpush1.bf16.xpose.msra.mxu0 0
        %2927 = vmatprep.subr.bf16.mxu0 0
        %2928 = vmatpush1.bf16.xpose.msra.mxu0 0
        %2929 = vmatprep.subr.bf16.mxu0 0
        %2930 = vmatpush1.bf16.xpose.msra.mxu0 %v2913
        %2931 = vmatprep.subr.bf16.mxu0 0
        %2932 = vmatpush2.bf16.xpose.msra.mxu0 0
        %2933 = vmatprep.subr.bf16.mxu0 0
        %2934 = vmatpush2.bf16.xpose.msra.mxu0 0
        %2935 = vmatprep.subr.bf16.mxu0 0
        %2936 = vmatpush2.bf16.xpose.msra.mxu0 0
        %2937 = vmatprep.subr.bf16.mxu0 0
        %2938 = vmatpush2.bf16.xpose.msra.mxu0 0
        %2939 = vmatprep.subr.bf16.mxu0 0
        %2940 = vmatpush2.bf16.xpose.msra.mxu0 0
        %2941 = vmatprep.subr.bf16.mxu0 0
        %2942 = vmatpush2.bf16.xpose.msra.mxu0 0
        %2943 = vmatprep.subr.bf16.mxu0 0
        %2944 = vmatpush2.bf16.xpose.msra.mxu0 0
        %2945 = vmatprep.subr.bf16.mxu0 0
        %2946 = vmatpush2.bf16.xpose.msra.mxu0 0
        %2947 = vmatprep.mubr.bf16.mxu0 0
        %2948 = vmatmul.mubr.bf16.gmra.mxu0 %v2910
        %v2949 = vpop.f32.mrf.mxu0
        %v2950 = vadd.f32 0.0, %v2949
        %v2951 = vpop.f32.mrf.mxu0
        %v2952 = vpop.f32.mrf.mxu0
        %v2953 = vadd.f32 0.0, %v2952
        %v2954 = vpop.f32.mrf.mxu0
        %2955 = vdwg.mxu0
        %v2956 = vmul.f32 %v2899, 0.25
        %v2957 = vmul.f32 %v2902, 0.25
        %v2958 = vmul.f32 %v2950, 0.25
        %v2959 = vmul.f32 %v2953, 0.25
        %v2960 = vsel %vm1208, %v2956, -1e+30
        %v2961 = vsel %vm1209, %v2957, -1e+30
        %v2962 = vsel %vm1208, %v2958, -1e+30
        %v2963 = vsel %vm1209, %v2959, -1e+30
        %v2964 = vsel %vm1107, %v2960, -inf
        %2965 = vmax.xlane.f32.xlu0 %v2964
        %v2966 = vpop.xlane.xlu0 %2965
        %v2967 = vsel %vm1107, %v2961, -inf
        %2968 = vmax.xlane.f32.xlu0 %v2967
        %v2969 = vpop.xlane.xlu0 %2968
        %v2970 = vsel %vm1107, %v2962, -inf
        %2971 = vmax.xlane.f32.xlu0 %v2970
        %v2972 = vpop.xlane.xlu0 %2971
        %v2973 = vsel %vm1107, %v2963, -inf
        %2974 = vmax.xlane.f32.xlu0 %v2973
        %v2975 = vpop.xlane.xlu0 %2974
        %v2976 = vsub.f32 %v2960, %v2966
        %v2977 = vsub.f32 %v2961, %v2969
        %v2978 = vsub.f32 %v2962, %v2972
        %v2979 = vsub.f32 %v2963, %v2975
        %v2980 = vmul.f32 %v2976, 1.442695
        %v2981 = vpow.pop %v2980
        %v2982 = vmul.f32 %v2977, 1.442695
        %v2983 = vpow.pop %v2982
        %v2984 = vmul.f32 %v2978, 1.442695
        %v2985 = vpow.pop %v2984
        %v2986 = vmul.f32 %v2979, 1.442695
        %v2987 = vpow.pop %v2986
        %v2988 = vsel %vm1107, %v2981, 0.0
        %2989 = vadd.xlane.f32.xlu0 %v2988
        %v2990 = vpop.xlane.xlu0 %2989
        %v2991 = vsel %vm1107, %v2983, 0.0
        %2992 = vadd.xlane.f32.xlu0 %v2991
        %v2993 = vpop.xlane.xlu0 %2992
        %v2994 = vsel %vm1107, %v2985, 0.0
        %2995 = vadd.xlane.f32.xlu0 %v2994
        %v2996 = vpop.xlane.xlu0 %2995
        %v2997 = vsel %vm1107, %v2987, 0.0
        %2998 = vadd.xlane.f32.xlu0 %v2997
        %v2999 = vpop.xlane.xlu0 %2998
        %v3000 = vrcp.pop %v2990
        %v3001 = vrcp.pop %v2993
        %v3002 = vrcp.pop %v2996
        %v3003 = vrcp.pop %v2999
        %v3004 = vmul.f32 %v2981, %v3000
        %v3005 = vmul.f32 %v2983, %v3001
        %v3006 = vmul.f32 %v2985, %v3002
        %v3007 = vmul.f32 %v2987, %v3003
        %v3008 = vpack.c.bf16 %v3005, %v3004
        %v3009 = vpack.c.bf16 %v3007, %v3006
        %3010 = vrot.lane.b32.xlu0 %v1105, 16
        %v3011 = vpop.permute.xlu0 %3010
        %v3014 = vsel %vm1107, %v3008, 0
        %3016 = vmatprep.subr.bf16.mxu0 0
        %3017 = vmatpush1.bf16.msra.mxu0 0
        %3018 = vmatprep.subr.bf16.mxu0 0
        %3019 = vmatpush1.bf16.msra.mxu0 0
        %3020 = vmatprep.subr.bf16.mxu0 0
        %3021 = vmatpush1.bf16.msra.mxu0 0
        %3022 = vmatprep.subr.bf16.mxu0 0
        %3023 = vmatpush1.bf16.msra.mxu0 0
        %3024 = vmatprep.subr.bf16.mxu0 0
        %3025 = vmatpush1.bf16.msra.mxu0 0
        %3026 = vmatprep.subr.bf16.mxu0 0
        %3027 = vmatpush1.bf16.msra.mxu0 0
        %3028 = vmatprep.subr.bf16.mxu0 0
        %3029 = vmatpush1.bf16.msra.mxu0 0
        %3030 = vmatprep.subr.bf16.mxu0 0
        %3031 = vmatpush1.bf16.msra.mxu0 %v3011
        %3032 = vmatprep.subr.bf16.mxu0 0
        %3033 = vmatpush2.bf16.msra.mxu0 0
        %3034 = vmatprep.subr.bf16.mxu0 0
        %3035 = vmatpush2.bf16.msra.mxu0 0
        %3036 = vmatprep.subr.bf16.mxu0 0
        %3037 = vmatpush2.bf16.msra.mxu0 0
        %3038 = vmatprep.subr.bf16.mxu0 0
        %3039 = vmatpush2.bf16.msra.mxu0 0
        %3040 = vmatprep.subr.bf16.mxu0 0
        %3041 = vmatpush2.bf16.msra.mxu0 0
        %3042 = vmatprep.subr.bf16.mxu0 0
        %3043 = vmatpush2.bf16.msra.mxu0 0
        %3044 = vmatprep.subr.bf16.mxu0 0
        %3045 = vmatpush2.bf16.msra.mxu0 0
        %3046 = vmatprep.subr.bf16.mxu0 0
        %3047 = vmatpush2.bf16.msra.mxu0 0
        %3048 = vmatprep.mubr.bf16.mxu0 0
        %3049 = vmatmul.mubr.bf16.gmra.mxu0 %v3014
        %v3050 = vpop.f32.mrf.mxu0
        %v3051 = vadd.f32 0.0, %v3050
        %v3052 = vpop.f32.mrf.mxu0
        %v3053 = vpop.f32.mrf.mxu0
        %v3054 = vadd.f32 0.0, %v3053
        %v3055 = vpop.f32.mrf.mxu0
        %3056 = vdwg.mxu0
        %3057 = vrot.lane.b32.xlu0 %v1106, 16
        %v3058 = vpop.permute.xlu0 %3057
        %v3061 = vsel %vm1107, %v3009, 0
        %3063 = vmatprep.subr.bf16.mxu0 0
        %3064 = vmatpush1.bf16.msra.mxu0 0
        %3065 = vmatprep.subr.bf16.mxu0 0
        %3066 = vmatpush1.bf16.msra.mxu0 0
        %3067 = vmatprep.subr.bf16.mxu0 0
        %3068 = vmatpush1.bf16.msra.mxu0 0
        %3069 = vmatprep.subr.bf16.mxu0 0
        %3070 = vmatpush1.bf16.msra.mxu0 0
        %3071 = vmatprep.subr.bf16.mxu0 0
        %3072 = vmatpush1.bf16.msra.mxu0 0
        %3073 = vmatprep.subr.bf16.mxu0 0
        %3074 = vmatpush1.bf16.msra.mxu0 0
        %3075 = vmatprep.subr.bf16.mxu0 0
        %3076 = vmatpush1.bf16.msra.mxu0 0
        %3077 = vmatprep.subr.bf16.mxu0 0
        %3078 = vmatpush1.bf16.msra.mxu0 %v3058
        %3079 = vmatprep.subr.bf16.mxu0 0
        %3080 = vmatpush2.bf16.msra.mxu0 0
        %3081 = vmatprep.subr.bf16.mxu0 0
        %3082 = vmatpush2.bf16.msra.mxu0 0
        %3083 = vmatprep.subr.bf16.mxu0 0
        %3084 = vmatpush2.bf16.msra.mxu0 0
        %3085 = vmatprep.subr.bf16.mxu0 0
        %3086 = vmatpush2.bf16.msra.mxu0 0
        %3087 = vmatprep.subr.bf16.mxu0 0
        %3088 = vmatpush2.bf16.msra.mxu0 0
        %3089 = vmatprep.subr.bf16.mxu0 0
        %3090 = vmatpush2.bf16.msra.mxu0 0
        %3091 = vmatprep.subr.bf16.mxu0 0
        %3092 = vmatpush2.bf16.msra.mxu0 0
        %3093 = vmatprep.subr.bf16.mxu0 0
        %3094 = vmatpush2.bf16.msra.mxu0 0
        %3095 = vmatprep.mubr.bf16.mxu0 0
        %3096 = vmatmul.mubr.bf16.gmra.mxu0 %v3061
        %v3097 = vpop.f32.mrf.mxu0
        %v3098 = vadd.f32 0.0, %v3097
        %v3099 = vpop.f32.mrf.mxu0
        %v3100 = vpop.f32.mrf.mxu0
        %v3101 = vadd.f32 0.0, %v3100
        %v3102 = vpop.f32.mrf.mxu0
        %3103 = vdwg.mxu0
        %3108 = vrot.lane.b32.xlu0 %v1550, 16
        %v3109 = vpop.permute.xlu0 %3108
        %3110 = vrot.lane.b32.xlu0 %v1553, 16
        %v3111 = vpop.permute.xlu0 %3110
        %3112 = vrot.lane.b32.xlu0 %v1598, 16
        %v3113 = vpop.permute.xlu0 %3112
        %3114 = vrot.lane.b32.xlu0 %v1601, 16
        %v3115 = vpop.permute.xlu0 %3114
        %3124 = vrot.lane.b32.xlu0 %v1801, 32
        %v3125 = vpop.permute.xlu0 %3124
        %3126 = vrot.lane.b32.xlu0 %v1804, 32
        %v3127 = vpop.permute.xlu0 %3126
        %3128 = vrot.lane.b32.xlu0 %v1848, 32
        %v3129 = vpop.permute.xlu0 %3128
        %3130 = vrot.lane.b32.xlu0 %v1851, 32
        %v3131 = vpop.permute.xlu0 %3130
        %3140 = vrot.lane.b32.xlu0 %v2051, 48
        %v3141 = vpop.permute.xlu0 %3140
        %3142 = vrot.lane.b32.xlu0 %v2054, 48
        %v3143 = vpop.permute.xlu0 %3142
        %3144 = vrot.lane.b32.xlu0 %v2098, 48
        %v3145 = vpop.permute.xlu0 %3144
        %3146 = vrot.lane.b32.xlu0 %v2101, 48
        %v3147 = vpop.permute.xlu0 %3146
        %3156 = vrot.lane.b32.xlu0 %v2301, 64
        %v3157 = vpop.permute.xlu0 %3156
        %3158 = vrot.lane.b32.xlu0 %v2304, 64
        %v3159 = vpop.permute.xlu0 %3158
        %3160 = vrot.lane.b32.xlu0 %v2348, 64
        %v3161 = vpop.permute.xlu0 %3160
        %3162 = vrot.lane.b32.xlu0 %v2351, 64
        %v3163 = vpop.permute.xlu0 %3162
        %3172 = vrot.lane.b32.xlu0 %v2551, 80
        %v3173 = vpop.permute.xlu0 %3172
        %3174 = vrot.lane.b32.xlu0 %v2554, 80
        %v3175 = vpop.permute.xlu0 %3174
        %3176 = vrot.lane.b32.xlu0 %v2598, 80
        %v3177 = vpop.permute.xlu0 %3176
        %3178 = vrot.lane.b32.xlu0 %v2601, 80
        %v3179 = vpop.permute.xlu0 %3178
        %3188 = vrot.lane.b32.xlu0 %v2801, 96
        %v3189 = vpop.permute.xlu0 %3188
        %3190 = vrot.lane.b32.xlu0 %v2804, 96
        %v3191 = vpop.permute.xlu0 %3190
        %3192 = vrot.lane.b32.xlu0 %v2848, 96
        %v3193 = vpop.permute.xlu0 %3192
        %3194 = vrot.lane.b32.xlu0 %v2851, 96
        %v3195 = vpop.permute.xlu0 %3194
        %3204 = vrot.lane.b32.xlu0 %v3051, 112
        %v3205 = vpop.permute.xlu0 %3204
        %3206 = vrot.lane.b32.xlu0 %v3054, 112
        %v3207 = vpop.permute.xlu0 %3206
        %3208 = vrot.lane.b32.xlu0 %v3098, 112
        %v3209 = vpop.permute.xlu0 %3208
        %3210 = vrot.lane.b32.xlu0 %v3101, 112
        %v3211 = vpop.permute.xlu0 %3210
        %v3216 = vsel %vm1107, %v1298, %v3109
        %v3217 = vsel %vm1107, %v1301, %v3111
        %v3218 = vsel %vm1107, %v1342, %v3113
        %v3219 = vsel %vm1107, %v1345, %v3115
        %vm3220 = vcmask 261120
        %v3221 = vsel %vm3220, %v3216, %v3125
        %v3222 = vsel %vm3220, %v3217, %v3127
        %v3223 = vsel %vm3220, %v3218, %v3129
        %v3224 = vsel %vm3220, %v3219, %v3131
        %vm3225 = vcmask 392192
        %v3226 = vsel %vm3225, %v3221, %v3141
        %v3227 = vsel %vm3225, %v3222, %v3143
        %v3228 = vsel %vm3225, %v3223, %v3145
        %v3229 = vsel %vm3225, %v3224, %v3147
        %vm3230 = vcmask 523264
        %v3231 = vsel %vm3230, %v3226, %v3157
        %v3232 = vsel %vm3230, %v3227, %v3159
        %v3233 = vsel %vm3230, %v3228, %v3161
        %v3234 = vsel %vm3230, %v3229, %v3163
        %vm3235 = vcmask 654336
        %v3236 = vsel %vm3235, %v3231, %v3173
        %v3237 = vsel %vm3235, %v3232, %v3175
        %v3238 = vsel %vm3235, %v3233, %v3177
        %v3239 = vsel %vm3235, %v3234, %v3179
        %vm3240 = vcmask 785408
        %v3241 = vsel %vm3240, %v3236, %v3189
        %v3242 = vsel %vm3240, %v3237, %v3191
        %v3243 = vsel %vm3240, %v3238, %v3193
        %v3244 = vsel %vm3240, %v3239, %v3195
        %vm3245 = vcmask 916480
        %v3246 = vsel %vm3245, %v3241, %v3205
        %v3247 = vsel %vm3245, %v3242, %v3207
        %v3248 = vsel %vm3245, %v3243, %v3209
        %v3249 = vsel %vm3245, %v3244, %v3211
        %v3250 = vpack.c.bf16 %v3247, %v3246
        %v3251 = vpack.c.bf16 %v3249, %v3248
        %v3252 = vld [vmem:[#allocation13] sm:$0xf]
        %v3253 = vld [vmem:[#allocation13 + $0x4] sm:$0xf]
        %v3254 = vld [vmem:[#allocation13 + $0x8] sm:$0xf]
        %v3255 = vld [vmem:[#allocation13 + $0xc] sm:$0xf]
        %v3256 = vld [vmem:[#allocation13 + $0x10] sm:$0xf]
        %v3257 = vld [vmem:[#allocation13 + $0x14] sm:$0xf]
        %v3258 = vld [vmem:[#allocation13 + $0x18] sm:$0xf]
        %v3259 = vld [vmem:[#allocation13 + $0x1c] sm:$0xf]
        %v3260 = vld [vmem:[#allocation13 + $0x20] sm:$0xf]
        %v3261 = vld [vmem:[#allocation13 + $0x24] sm:$0xf]
        %v3262 = vld [vmem:[#allocation13 + $0x28] sm:$0xf]
        %v3263 = vld [vmem:[#allocation13 + $0x2c] sm:$0xf]
        %v3264 = vld [vmem:[#allocation13 + $0x30] sm:$0xf]
        %v3265 = vld [vmem:[#allocation13 + $0x34] sm:$0xf]
        %v3266 = vld [vmem:[#allocation13 + $0x38] sm:$0xf]
        %v3267 = vld [vmem:[#allocation13 + $0x3c] sm:$0xf]
        %v3268 = vld [vmem:[%s9] sm:$0x1]
        %v3270 = vlaneseq
        %v3271 = vshrl.u32 %v3270, 7
        %v3272 = vsub.s32 0, %v3271
        %v3273 = vrot.slane %v3268, %v3272
        %v3291 = vunpack.c.l.b16 %v3252
        %v3292 = vunpack.c.l.b16 %v3253
        %v3293 = vunpack.c.l.b16 %v3254
        %v3294 = vunpack.c.l.b16 %v3255
        %v3295 = vunpack.c.l.b16 %v3256
        %v3296 = vunpack.c.l.b16 %v3257
        %v3297 = vunpack.c.l.b16 %v3258
        %v3298 = vunpack.c.l.b16 %v3259
        %v3299 = vunpack.c.l.b16 %v3260
        %v3300 = vunpack.c.l.b16 %v3261
        %v3301 = vunpack.c.l.b16 %v3262
        %v3302 = vunpack.c.l.b16 %v3263
        %v3303 = vunpack.c.l.b16 %v3264
        %v3304 = vunpack.c.l.b16 %v3265
        %v3305 = vunpack.c.l.b16 %v3266
        %v3306 = vunpack.c.l.b16 %v3267
        %v3307 = vpack.c.b16 %v3292, %v3291
        %v3308 = vpack.c.b16 %v3294, %v3293
        %v3309 = vpack.c.b16 %v3296, %v3295
        %v3310 = vpack.c.b16 %v3298, %v3297
        %v3311 = vpack.c.b16 %v3300, %v3299
        %v3312 = vpack.c.b16 %v3302, %v3301
        %v3313 = vpack.c.b16 %v3304, %v3303
        %v3314 = vpack.c.b16 %v3306, %v3305
        %3323 = vmatprep.subr.bf16.mxu0 0
        %3324 = vmatpush1.bf16.msra.mxu0 %v3314
        %3325 = vmatprep.subr.bf16.mxu0 0
        %3326 = vmatpush1.bf16.msra.mxu0 %v3313
        %3327 = vmatprep.subr.bf16.mxu0 0
        %3328 = vmatpush1.bf16.msra.mxu0 %v3312
        %3329 = vmatprep.subr.bf16.mxu0 0
        %3330 = vmatpush1.bf16.msra.mxu0 %v3311
        %3331 = vmatprep.subr.bf16.mxu0 0
        %3332 = vmatpush1.bf16.msra.mxu0 %v3310
        %3333 = vmatprep.subr.bf16.mxu0 0
        %3334 = vmatpush1.bf16.msra.mxu0 %v3309
        %3335 = vmatprep.subr.bf16.mxu0 0
        %3336 = vmatpush1.bf16.msra.mxu0 %v3308
        %3337 = vmatprep.subr.bf16.mxu0 0
        %3338 = vmatpush1.bf16.msra.mxu0 %v3307
        %3339 = vmatprep.subr.bf16.mxu0 0
        %3340 = vmatpush2.bf16.msra.mxu0 0
        %3341 = vmatprep.subr.bf16.mxu0 0
        %3342 = vmatpush2.bf16.msra.mxu0 0
        %3343 = vmatprep.subr.bf16.mxu0 0
        %3344 = vmatpush2.bf16.msra.mxu0 0
        %3345 = vmatprep.subr.bf16.mxu0 0
        %3346 = vmatpush2.bf16.msra.mxu0 0
        %3347 = vmatprep.subr.bf16.mxu0 0
        %3348 = vmatpush2.bf16.msra.mxu0 0
        %3349 = vmatprep.subr.bf16.mxu0 0
        %3350 = vmatpush2.bf16.msra.mxu0 0
        %3351 = vmatprep.subr.bf16.mxu0 0
        %3352 = vmatpush2.bf16.msra.mxu0 0
        %3353 = vmatprep.subr.bf16.mxu0 0
        %3354 = vmatpush2.bf16.msra.mxu0 0
        %3355 = vmatprep.mubr.bf16.mxu0 0
        %3356 = vmatmul.mubr.bf16.gmra.mxu0 %v3250
        %v3357 = vpop.f32.mrf.mxu0
        %v3358 = vadd.f32 %v3273, %v3357
        %v3359 = vpop.f32.mrf.mxu0
        %v3360 = vpop.f32.mrf.mxu0
        %v3361 = vadd.f32 %v3273, %v3360
        %v3362 = vpop.f32.mrf.mxu0
        %3363 = vmatprep.mubr.bf16.mxu0 0
        %3364 = vmatmul.mubr.bf16.gmra.mxu0 %v3251
        %v3365 = vpop.f32.mrf.mxu0
        %v3366 = vadd.f32 %v3273, %v3365
        %v3367 = vpop.f32.mrf.mxu0
        %v3368 = vpop.f32.mrf.mxu0
        %v3369 = vadd.f32 %v3273, %v3368
        %v3370 = vpop.f32.mrf.mxu0
        %3371 = vdwg.mxu0
        %v3372 = vadd.f32 %v658, %v3358
        %v3373 = vadd.f32 %v659, %v3361
        %v3374 = vadd.f32 %v660, %v3366
        %v3375 = vadd.f32 %v661, %v3369
        %v3376 = vld [vmem:[%s10] sm:$0x1]
        %v3377 = vld [vmem:[%s11] sm:$0x1]
        %3378 = vadd.xlane.f32.xlu0 %v3372
        %v3379 = vpop.xlane.xlu0 %3378
        %3380 = vadd.xlane.f32.xlu0 %v3373
        %v3381 = vpop.xlane.xlu0 %3380
        %3382 = vadd.xlane.f32.xlu0 %v3374
        %v3383 = vpop.xlane.xlu0 %3382
        %3384 = vadd.xlane.f32.xlu0 %v3375
        %v3385 = vpop.xlane.xlu0 %3384
        %v3386 = vmul.f32 %v3379, %v684
        %v3387 = vmul.f32 %v3381, %v684
        %v3388 = vmul.f32 %v3383, %v684
        %v3389 = vmul.f32 %v3385, %v684
        %v3390 = vsub.f32 %v3372, %v3386
        %v3391 = vsub.f32 %v3373, %v3387
        %v3392 = vsub.f32 %v3374, %v3388
        %v3393 = vsub.f32 %v3375, %v3389
        %v3394 = vmul.f32 %v3390, %v3390
        %v3395 = vmul.f32 %v3391, %v3391
        %v3396 = vmul.f32 %v3392, %v3392
        %v3397 = vmul.f32 %v3393, %v3393
        %3398 = vadd.xlane.f32.xlu0 %v3394
        %v3399 = vpop.xlane.xlu0 %3398
        %3400 = vadd.xlane.f32.xlu0 %v3395
        %v3401 = vpop.xlane.xlu0 %3400
        %3402 = vadd.xlane.f32.xlu0 %v3396
        %v3403 = vpop.xlane.xlu0 %3402
        %3404 = vadd.xlane.f32.xlu0 %v3397
        %v3405 = vpop.xlane.xlu0 %3404
        %v3406 = vmul.f32 %v3399, %v684
        %v3407 = vmul.f32 %v3401, %v684
        %v3408 = vmul.f32 %v3403, %v684
        %v3409 = vmul.f32 %v3405, %v684
        %v3410 = vadd.f32 %v3406, 1e-05
        %v3411 = vadd.f32 %v3407, 1e-05
        %v3412 = vadd.f32 %v3408, 1e-05
        %v3413 = vadd.f32 %v3409, 1e-05
        %v3414 = vrsqrt.pop %v3410
        %v3415 = vrsqrt.pop %v3411
        %v3416 = vrsqrt.pop %v3412
        %v3417 = vrsqrt.pop %v3413
        %v3418 = vmul.f32 %v3390, %v3414
        %v3419 = vmul.f32 %v3391, %v3415
        %v3420 = vmul.f32 %v3392, %v3416
        %v3421 = vmul.f32 %v3393, %v3417
        %v3423 = vlaneseq
        %v3424 = vshrl.u32 %v3423, 7
        %v3425 = vsub.s32 0, %v3424
        %v3426 = vrot.slane %v3376, %v3425
        %v3428 = vmul.f32 %v3418, %v3426
        %v3429 = vmul.f32 %v3419, %v3426
        %v3430 = vmul.f32 %v3420, %v3426
        %v3431 = vmul.f32 %v3421, %v3426
        %v3433 = vlaneseq
        %v3434 = vshrl.u32 %v3433, 7
        %v3435 = vsub.s32 0, %v3434
        %v3436 = vrot.slane %v3377, %v3435
        %v3438 = vadd.f32 %v3428, %v3436
        %v3439 = vadd.f32 %v3429, %v3436
        %v3440 = vadd.f32 %v3430, %v3436
        %v3441 = vadd.f32 %v3431, %v3436
        %v3442 = vpack.c.bf16 %v3439, %v3438
        %v3443 = vpack.c.bf16 %v3441, %v3440
        %v3444 = vld [vmem:[#allocation14] sm:$0xff]
        %v3445 = vld [vmem:[#allocation14 + $0x8] sm:$0xff]
        %v3446 = vld [vmem:[#allocation14 + $0x10] sm:$0xff]
        %v3447 = vld [vmem:[#allocation14 + $0x18] sm:$0xff]
        %v3448 = vld [vmem:[#allocation14 + $0x20] sm:$0xff]
        %v3449 = vld [vmem:[#allocation14 + $0x28] sm:$0xff]
        %v3450 = vld [vmem:[#allocation14 + $0x30] sm:$0xff]
        %v3451 = vld [vmem:[#allocation14 + $0x38] sm:$0xff]
        %v3452 = vld [vmem:[#allocation14 + $0x40] sm:$0xff]
        %v3453 = vld [vmem:[#allocation14 + $0x48] sm:$0xff]
        %v3454 = vld [vmem:[#allocation14 + $0x50] sm:$0xff]
        %v3455 = vld [vmem:[#allocation14 + $0x58] sm:$0xff]
        %v3456 = vld [vmem:[#allocation14 + $0x60] sm:$0xff]
        %v3457 = vld [vmem:[#allocation14 + $0x68] sm:$0xff]
        %v3458 = vld [vmem:[#allocation14 + $0x70] sm:$0xff]
        %v3459 = vld [vmem:[#allocation14 + $0x78] sm:$0xff]
        %v3460 = vld [vmem:[#allocation14 + $0x80] sm:$0xff]
        %v3461 = vld [vmem:[#allocation14 + $0x88] sm:$0xff]
        %v3462 = vld [vmem:[#allocation14 + $0x90] sm:$0xff]
        %v3463 = vld [vmem:[#allocation14 + $0x98] sm:$0xff]
        %v3464 = vld [vmem:[#allocation14 + $0xa0] sm:$0xff]
        %v3465 = vld [vmem:[#allocation14 + $0xa8] sm:$0xff]
        %v3466 = vld [vmem:[#allocation14 + $0xb0] sm:$0xff]
        %v3467 = vld [vmem:[#allocation14 + $0xb8] sm:$0xff]
        %v3468 = vld [vmem:[#allocation14 + $0xc0] sm:$0xff]
        %v3469 = vld [vmem:[#allocation14 + $0xc8] sm:$0xff]
        %v3470 = vld [vmem:[#allocation14 + $0xd0] sm:$0xff]
        %v3471 = vld [vmem:[#allocation14 + $0xd8] sm:$0xff]
        %v3472 = vld [vmem:[#allocation14 + $0xe0] sm:$0xff]
        %v3473 = vld [vmem:[#allocation14 + $0xe8] sm:$0xff]
        %v3474 = vld [vmem:[#allocation14 + $0xf0] sm:$0xff]
        %v3475 = vld [vmem:[#allocation14 + $0xf8] sm:$0xff]
        %v3476 = vld [vmem:[%s13] sm:$0xf]
        %v3478 = vlaneseq
        %v3479 = vshrl.u32 %v3478, 7
        %v3480 = vsub.s32 0, %v3479
        %v3481 = vrot.slane %v3476, %v3480
        %v3482 = vlaneseq
        %v3483 = vshrl.u32 %v3482, 7
        %v3484 = vsub.s32 1, %v3483
        %v3485 = vrot.slane %v3476, %v3484
        %v3486 = vlaneseq
        %v3487 = vshrl.u32 %v3486, 7
        %v3488 = vsub.s32 2, %v3487
        %v3489 = vrot.slane %v3476, %v3488
        %v3490 = vlaneseq
        %v3491 = vshrl.u32 %v3490, 7
        %v3492 = vsub.s32 3, %v3491
        %v3493 = vrot.slane %v3476, %v3492
        %v3530 = vunpack.c.l.b16 %v3444
        %v3531 = vunpack.c.h.b16 %v3444
        %v3532 = vunpack.c.l.b16 %v3445
        %v3533 = vunpack.c.h.b16 %v3445
        %v3534 = vunpack.c.l.b16 %v3446
        %v3535 = vunpack.c.h.b16 %v3446
        %v3536 = vunpack.c.l.b16 %v3447
        %v3537 = vunpack.c.h.b16 %v3447
        %v3538 = vunpack.c.l.b16 %v3448
        %v3539 = vunpack.c.h.b16 %v3448
        %v3540 = vunpack.c.l.b16 %v3449
        %v3541 = vunpack.c.h.b16 %v3449
        %v3542 = vunpack.c.l.b16 %v3450
        %v3543 = vunpack.c.h.b16 %v3450
        %v3544 = vunpack.c.l.b16 %v3451
        %v3545 = vunpack.c.h.b16 %v3451
        %v3546 = vunpack.c.l.b16 %v3452
        %v3547 = vunpack.c.h.b16 %v3452
        %v3548 = vunpack.c.l.b16 %v3453
        %v3549 = vunpack.c.h.b16 %v3453
        %v3550 = vunpack.c.l.b16 %v3454
        %v3551 = vunpack.c.h.b16 %v3454
        %v3552 = vunpack.c.l.b16 %v3455
        %v3553 = vunpack.c.h.b16 %v3455
        %v3554 = vunpack.c.l.b16 %v3456
        %v3555 = vunpack.c.h.b16 %v3456
        %v3556 = vunpack.c.l.b16 %v3457
        %v3557 = vunpack.c.h.b16 %v3457
        %v3558 = vunpack.c.l.b16 %v3458
        %v3559 = vunpack.c.h.b16 %v3458
        %v3560 = vunpack.c.l.b16 %v3459
        %v3561 = vunpack.c.h.b16 %v3459
        %v3562 = vunpack.c.l.b16 %v3460
        %v3563 = vunpack.c.h.b16 %v3460
        %v3564 = vunpack.c.l.b16 %v3461
        %v3565 = vunpack.c.h.b16 %v3461
        %v3566 = vunpack.c.l.b16 %v3462
        %v3567 = vunpack.c.h.b16 %v3462
        %v3568 = vunpack.c.l.b16 %v3463
        %v3569 = vunpack.c.h.b16 %v3463
        %v3570 = vunpack.c.l.b16 %v3464
        %v3571 = vunpack.c.h.b16 %v3464
        %v3572 = vunpack.c.l.b16 %v3465
        %v3573 = vunpack.c.h.b16 %v3465
        %v3574 = vunpack.c.l.b16 %v3466
        %v3575 = vunpack.c.h.b16 %v3466
        %v3576 = vunpack.c.l.b16 %v3467
        %v3577 = vunpack.c.h.b16 %v3467
        %v3578 = vunpack.c.l.b16 %v3468
        %v3579 = vunpack.c.h.b16 %v3468
        %v3580 = vunpack.c.l.b16 %v3469
        %v3581 = vunpack.c.h.b16 %v3469
        %v3582 = vunpack.c.l.b16 %v3470
        %v3583 = vunpack.c.h.b16 %v3470
        %v3584 = vunpack.c.l.b16 %v3471
        %v3585 = vunpack.c.h.b16 %v3471
        %v3586 = vunpack.c.l.b16 %v3472
        %v3587 = vunpack.c.h.b16 %v3472
        %v3588 = vunpack.c.l.b16 %v3473
        %v3589 = vunpack.c.h.b16 %v3473
        %v3590 = vunpack.c.l.b16 %v3474
        %v3591 = vunpack.c.h.b16 %v3474
        %v3592 = vunpack.c.l.b16 %v3475
        %v3593 = vunpack.c.h.b16 %v3475
        %v3594 = vpack.c.b16 %v3534, %v3530
        %v3595 = vpack.c.b16 %v3535, %v3531
        %v3596 = vpack.c.b16 %v3536, %v3532
        %v3597 = vpack.c.b16 %v3537, %v3533
        %v3598 = vpack.c.b16 %v3542, %v3538
        %v3599 = vpack.c.b16 %v3543, %v3539
        %v3600 = vpack.c.b16 %v3544, %v3540
        %v3601 = vpack.c.b16 %v3545, %v3541
        %v3602 = vpack.c.b16 %v3550, %v3546
        %v3603 = vpack.c.b16 %v3551, %v3547
        %v3604 = vpack.c.b16 %v3552, %v3548
        %v3605 = vpack.c.b16 %v3553, %v3549
        %v3606 = vpack.c.b16 %v3558, %v3554
        %v3607 = vpack.c.b16 %v3559, %v3555
        %v3608 = vpack.c.b16 %v3560, %v3556
        %v3609 = vpack.c.b16 %v3561, %v3557
        %v3610 = vpack.c.b16 %v3566, %v3562
        %v3611 = vpack.c.b16 %v3567, %v3563
        %v3612 = vpack.c.b16 %v3568, %v3564
        %v3613 = vpack.c.b16 %v3569, %v3565
        %v3614 = vpack.c.b16 %v3574, %v3570
        %v3615 = vpack.c.b16 %v3575, %v3571
        %v3616 = vpack.c.b16 %v3576, %v3572
        %v3617 = vpack.c.b16 %v3577, %v3573
        %v3618 = vpack.c.b16 %v3582, %v3578
        %v3619 = vpack.c.b16 %v3583, %v3579
        %v3620 = vpack.c.b16 %v3584, %v3580
        %v3621 = vpack.c.b16 %v3585, %v3581
        %v3622 = vpack.c.b16 %v3590, %v3586
        %v3623 = vpack.c.b16 %v3591, %v3587
        %v3624 = vpack.c.b16 %v3592, %v3588
        %v3625 = vpack.c.b16 %v3593, %v3589
        %3658 = vmatprep.subr.bf16.mxu0 %v3623
        %3659 = vmatpush1.bf16.msra.mxu0 %v3622
        %3660 = vmatprep.subr.bf16.mxu0 %v3619
        %3661 = vmatpush1.bf16.msra.mxu0 %v3618
        %3662 = vmatprep.subr.bf16.mxu0 %v3615
        %3663 = vmatpush1.bf16.msra.mxu0 %v3614
        %3664 = vmatprep.subr.bf16.mxu0 %v3611
        %3665 = vmatpush1.bf16.msra.mxu0 %v3610
        %3666 = vmatprep.subr.bf16.mxu0 %v3607
        %3667 = vmatpush1.bf16.msra.mxu0 %v3606
        %3668 = vmatprep.subr.bf16.mxu0 %v3603
        %3669 = vmatpush1.bf16.msra.mxu0 %v3602
        %3670 = vmatprep.subr.bf16.mxu0 %v3599
        %3671 = vmatpush1.bf16.msra.mxu0 %v3598
        %3672 = vmatprep.subr.bf16.mxu0 %v3595
        %3673 = vmatpush1.bf16.msra.mxu0 %v3594
        %3674 = vmatprep.subr.bf16.mxu0 0
        %3675 = vmatpush2.bf16.msra.mxu0 0
        %3676 = vmatprep.subr.bf16.mxu0 0
        %3677 = vmatpush2.bf16.msra.mxu0 0
        %3678 = vmatprep.subr.bf16.mxu0 0
        %3679 = vmatpush2.bf16.msra.mxu0 0
        %3680 = vmatprep.subr.bf16.mxu0 0
        %3681 = vmatpush2.bf16.msra.mxu0 0
        %3682 = vmatprep.subr.bf16.mxu0 0
        %3683 = vmatpush2.bf16.msra.mxu0 0
        %3684 = vmatprep.subr.bf16.mxu0 0
        %3685 = vmatpush2.bf16.msra.mxu0 0
        %3686 = vmatprep.subr.bf16.mxu0 0
        %3687 = vmatpush2.bf16.msra.mxu0 0
        %3688 = vmatprep.subr.bf16.mxu0 0
        %3689 = vmatpush2.bf16.msra.mxu0 0
        %3690 = vmatprep.mubr.bf16.mxu0 0
        %3691 = vmatmul.mubr.bf16.gmra.mxu0 %v3442
        %v3692 = vpop.f32.mrf.mxu0
        %v3693 = vadd.f32 %v3481, %v3692
        %v3694 = vpop.f32.mrf.mxu0
        %v3695 = vadd.f32 %v3485, %v3694
        %v3696 = vpop.f32.mrf.mxu0
        %v3697 = vadd.f32 %v3481, %v3696
        %v3698 = vpop.f32.mrf.mxu0
        %v3699 = vadd.f32 %v3485, %v3698
        %3700 = vmatprep.mubr.bf16.mxu0 0
        %3701 = vmatmul.mubr.bf16.gmra.mxu0 %v3443
        %v3702 = vpop.f32.mrf.mxu0
        %v3703 = vadd.f32 %v3481, %v3702
        %v3704 = vpop.f32.mrf.mxu0
        %v3705 = vadd.f32 %v3485, %v3704
        %v3706 = vpop.f32.mrf.mxu0
        %v3707 = vadd.f32 %v3481, %v3706
        %v3708 = vpop.f32.mrf.mxu0
        %v3709 = vadd.f32 %v3485, %v3708
        %3710 = vdwg.mxu0
        %3711 = vmatprep.subr.bf16.mxu0 %v3625
        %3712 = vmatpush1.bf16.msra.mxu0 %v3624
        %3713 = vmatprep.subr.bf16.mxu0 %v3621
        %3714 = vmatpush1.bf16.msra.mxu0 %v3620
        %3715 = vmatprep.subr.bf16.mxu0 %v3617
        %3716 = vmatpush1.bf16.msra.mxu0 %v3616
        %3717 = vmatprep.subr.bf16.mxu0 %v3613
        %3718 = vmatpush1.bf16.msra.mxu0 %v3612
        %3719 = vmatprep.subr.bf16.mxu0 %v3609
        %3720 = vmatpush1.bf16.msra.mxu0 %v3608
        %3721 = vmatprep.subr.bf16.mxu0 %v3605
        %3722 = vmatpush1.bf16.msra.mxu0 %v3604
        %3723 = vmatprep.subr.bf16.mxu0 %v3601
        %3724 = vmatpush1.bf16.msra.mxu0 %v3600
        %3725 = vmatprep.subr.bf16.mxu0 %v3597
        %3726 = vmatpush1.bf16.msra.mxu0 %v3596
        %3727 = vmatprep.subr.bf16.mxu0 0
        %3728 = vmatpush2.bf16.msra.mxu0 0
        %3729 = vmatprep.subr.bf16.mxu0 0
        %3730 = vmatpush2.bf16.msra.mxu0 0
        %3731 = vmatprep.subr.bf16.mxu0 0
        %3732 = vmatpush2.bf16.msra.mxu0 0
        %3733 = vmatprep.subr.bf16.mxu0 0
        %3734 = vmatpush2.bf16.msra.mxu0 0
        %3735 = vmatprep.subr.bf16.mxu0 0
        %3736 = vmatpush2.bf16.msra.mxu0 0
        %3737 = vmatprep.subr.bf16.mxu0 0
        %3738 = vmatpush2.bf16.msra.mxu0 0
        %3739 = vmatprep.subr.bf16.mxu0 0
        %3740 = vmatpush2.bf16.msra.mxu0 0
        %3741 = vmatprep.subr.bf16.mxu0 0
        %3742 = vmatpush2.bf16.msra.mxu0 0
        %3743 = vmatprep.mubr.bf16.mxu0 0
        %3744 = vmatmul.mubr.bf16.gmra.mxu0 %v3442
        %v3745 = vpop.f32.mrf.mxu0
        %v3746 = vadd.f32 %v3489, %v3745
        %v3747 = vpop.f32.mrf.mxu0
        %v3748 = vadd.f32 %v3493, %v3747
        %v3749 = vpop.f32.mrf.mxu0
        %v3750 = vadd.f32 %v3489, %v3749
        %v3751 = vpop.f32.mrf.mxu0
        %v3752 = vadd.f32 %v3493, %v3751
        %3753 = vmatprep.mubr.bf16.mxu0 0
        %3754 = vmatmul.mubr.bf16.gmra.mxu0 %v3443
        %v3755 = vpop.f32.mrf.mxu0
        %v3756 = vadd.f32 %v3489, %v3755
        %v3757 = vpop.f32.mrf.mxu0
        %v3758 = vadd.f32 %v3493, %v3757
        %v3759 = vpop.f32.mrf.mxu0
        %v3760 = vadd.f32 %v3489, %v3759
        %v3761 = vpop.f32.mrf.mxu0
        %v3762 = vadd.f32 %v3493, %v3761
        %3763 = vdwg.mxu0
        %v3764 = vmul.f32 %v3693, 0.5
        %v3765 = vmul.f32 %v3695, 0.5
        %v3766 = vmul.f32 %v3746, 0.5
        %v3767 = vmul.f32 %v3748, 0.5
        %v3768 = vmul.f32 %v3697, 0.5
        %v3769 = vmul.f32 %v3699, 0.5
        %v3770 = vmul.f32 %v3750, 0.5
        %v3771 = vmul.f32 %v3752, 0.5
        %v3772 = vmul.f32 %v3703, 0.5
        %v3773 = vmul.f32 %v3705, 0.5
        %v3774 = vmul.f32 %v3756, 0.5
        %v3775 = vmul.f32 %v3758, 0.5
        %v3776 = vmul.f32 %v3707, 0.5
        %v3777 = vmul.f32 %v3709, 0.5
        %v3778 = vmul.f32 %v3760, 0.5
        %v3779 = vmul.f32 %v3762, 0.5
        %v3780 = vmul.f32 %v3693, %v3693
        %v3781 = vmul.f32 %v3695, %v3695
        %v3782 = vmul.f32 %v3746, %v3746
        %v3783 = vmul.f32 %v3748, %v3748
        %v3784 = vmul.f32 %v3697, %v3697
        %v3785 = vmul.f32 %v3699, %v3699
        %v3786 = vmul.f32 %v3750, %v3750
        %v3787 = vmul.f32 %v3752, %v3752
        %v3788 = vmul.f32 %v3703, %v3703
        %v3789 = vmul.f32 %v3705, %v3705
        %v3790 = vmul.f32 %v3756, %v3756
        %v3791 = vmul.f32 %v3758, %v3758
        %v3792 = vmul.f32 %v3707, %v3707
        %v3793 = vmul.f32 %v3709, %v3709
        %v3794 = vmul.f32 %v3760, %v3760
        %v3795 = vmul.f32 %v3762, %v3762
        %v3796 = vmul.f32 %v3693, %v3780
        %v3797 = vmul.f32 %v3695, %v3781
        %v3798 = vmul.f32 %v3746, %v3782
        %v3799 = vmul.f32 %v3748, %v3783
        %v3800 = vmul.f32 %v3697, %v3784
        %v3801 = vmul.f32 %v3699, %v3785
        %v3802 = vmul.f32 %v3750, %v3786
        %v3803 = vmul.f32 %v3752, %v3787
        %v3804 = vmul.f32 %v3703, %v3788
        %v3805 = vmul.f32 %v3705, %v3789
        %v3806 = vmul.f32 %v3756, %v3790
        %v3807 = vmul.f32 %v3758, %v3791
        %v3808 = vmul.f32 %v3707, %v3792
        %v3809 = vmul.f32 %v3709, %v3793
        %v3810 = vmul.f32 %v3760, %v3794
        %v3811 = vmul.f32 %v3762, %v3795
        %v3812 = vmul.f32 %v3796, 0.044715
        %v3813 = vmul.f32 %v3797, 0.044715
        %v3814 = vmul.f32 %v3798, 0.044715
        %v3815 = vmul.f32 %v3799, 0.044715
        %v3816 = vmul.f32 %v3800, 0.044715
        %v3817 = vmul.f32 %v3801, 0.044715
        %v3818 = vmul.f32 %v3802, 0.044715
        %v3819 = vmul.f32 %v3803, 0.044715
        %v3820 = vmul.f32 %v3804, 0.044715
        %v3821 = vmul.f32 %v3805, 0.044715
        %v3822 = vmul.f32 %v3806, 0.044715
        %v3823 = vmul.f32 %v3807, 0.044715
        %v3824 = vmul.f32 %v3808, 0.044715
        %v3825 = vmul.f32 %v3809, 0.044715
        %v3826 = vmul.f32 %v3810, 0.044715
        %v3827 = vmul.f32 %v3811, 0.044715
        %v3828 = vadd.f32 %v3693, %v3812
        %v3829 = vadd.f32 %v3695, %v3813
        %v3830 = vadd.f32 %v3746, %v3814
        %v3831 = vadd.f32 %v3748, %v3815
        %v3832 = vadd.f32 %v3697, %v3816
        %v3833 = vadd.f32 %v3699, %v3817
        %v3834 = vadd.f32 %v3750, %v3818
        %v3835 = vadd.f32 %v3752, %v3819
        %v3836 = vadd.f32 %v3703, %v3820
        %v3837 = vadd.f32 %v3705, %v3821
        %v3838 = vadd.f32 %v3756, %v3822
        %v3839 = vadd.f32 %v3758, %v3823
        %v3840 = vadd.f32 %v3707, %v3824
        %v3841 = vadd.f32 %v3709, %v3825
        %v3842 = vadd.f32 %v3760, %v3826
        %v3843 = vadd.f32 %v3762, %v3827
        %v3844 = vmul.f32 %v3828, 0.7978846
        %v3845 = vmul.f32 %v3829, 0.7978846
        %v3846 = vmul.f32 %v3830, 0.7978846
        %v3847 = vmul.f32 %v3831, 0.7978846
        %v3848 = vmul.f32 %v3832, 0.7978846
        %v3849 = vmul.f32 %v3833, 0.7978846
        %v3850 = vmul.f32 %v3834, 0.7978846
        %v3851 = vmul.f32 %v3835, 0.7978846
        %v3852 = vmul.f32 %v3836, 0.7978846
        %v3853 = vmul.f32 %v3837, 0.7978846
        %v3854 = vmul.f32 %v3838, 0.7978846
        %v3855 = vmul.f32 %v3839, 0.7978846
        %v3856 = vmul.f32 %v3840, 0.7978846
        %v3857 = vmul.f32 %v3841, 0.7978846
        %v3858 = vmul.f32 %v3842, 0.7978846
        %v3859 = vmul.f32 %v3843, 0.7978846
        %v3860 = vtanh.pop %v3844
        %v3861 = vtanh.pop %v3845
        %v3862 = vtanh.pop %v3846
        %v3863 = vtanh.pop %v3847
        %v3864 = vtanh.pop %v3848
        %v3865 = vtanh.pop %v3849
        %v3866 = vtanh.pop %v3850
        %v3867 = vtanh.pop %v3851
        %v3868 = vtanh.pop %v3852
        %v3869 = vtanh.pop %v3853
        %v3870 = vtanh.pop %v3854
        %v3871 = vtanh.pop %v3855
        %v3872 = vtanh.pop %v3856
        %v3873 = vtanh.pop %v3857
        %v3874 = vtanh.pop %v3858
        %v3875 = vtanh.pop %v3859
        %v3876 = vadd.f32 %v3860, 1.0
        %v3877 = vadd.f32 %v3861, 1.0
        %v3878 = vadd.f32 %v3862, 1.0
        %v3879 = vadd.f32 %v3863, 1.0
        %v3880 = vadd.f32 %v3864, 1.0
        %v3881 = vadd.f32 %v3865, 1.0
        %v3882 = vadd.f32 %v3866, 1.0
        %v3883 = vadd.f32 %v3867, 1.0
        %v3884 = vadd.f32 %v3868, 1.0
        %v3885 = vadd.f32 %v3869, 1.0
        %v3886 = vadd.f32 %v3870, 1.0
        %v3887 = vadd.f32 %v3871, 1.0
        %v3888 = vadd.f32 %v3872, 1.0
        %v3889 = vadd.f32 %v3873, 1.0
        %v3890 = vadd.f32 %v3874, 1.0
        %v3891 = vadd.f32 %v3875, 1.0
        %v3892 = vmul.f32 %v3764, %v3876
        %v3893 = vmul.f32 %v3765, %v3877
        %v3894 = vmul.f32 %v3766, %v3878
        %v3895 = vmul.f32 %v3767, %v3879
        %v3896 = vmul.f32 %v3768, %v3880
        %v3897 = vmul.f32 %v3769, %v3881
        %v3898 = vmul.f32 %v3770, %v3882
        %v3899 = vmul.f32 %v3771, %v3883
        %v3900 = vmul.f32 %v3772, %v3884
        %v3901 = vmul.f32 %v3773, %v3885
        %v3902 = vmul.f32 %v3774, %v3886
        %v3903 = vmul.f32 %v3775, %v3887
        %v3904 = vmul.f32 %v3776, %v3888
        %v3905 = vmul.f32 %v3777, %v3889
        %v3906 = vmul.f32 %v3778, %v3890
        %v3907 = vmul.f32 %v3779, %v3891
        %v3908 = vpack.c.bf16 %v3896, %v3892
        %v3909 = vpack.c.bf16 %v3897, %v3893
        %v3910 = vpack.c.bf16 %v3898, %v3894
        %v3911 = vpack.c.bf16 %v3899, %v3895
        %v3912 = vpack.c.bf16 %v3904, %v3900
        %v3913 = vpack.c.bf16 %v3905, %v3901
        %v3914 = vpack.c.bf16 %v3906, %v3902
        %v3915 = vpack.c.bf16 %v3907, %v3903
        %v3916 = vld [vmem:[#allocation16] sm:$0xf]
        %v3917 = vld [vmem:[#allocation16 + $0x4] sm:$0xf]
        %v3918 = vld [vmem:[#allocation16 + $0x8] sm:$0xf]
        %v3919 = vld [vmem:[#allocation16 + $0xc] sm:$0xf]
        %v3920 = vld [vmem:[#allocation16 + $0x10] sm:$0xf]
        %v3921 = vld [vmem:[#allocation16 + $0x14] sm:$0xf]
        %v3922 = vld [vmem:[#allocation16 + $0x18] sm:$0xf]
        %v3923 = vld [vmem:[#allocation16 + $0x1c] sm:$0xf]
        %v3924 = vld [vmem:[#allocation16 + $0x20] sm:$0xf]
        %v3925 = vld [vmem:[#allocation16 + $0x24] sm:$0xf]
        %v3926 = vld [vmem:[#allocation16 + $0x28] sm:$0xf]
        %v3927 = vld [vmem:[#allocation16 + $0x2c] sm:$0xf]
        %v3928 = vld [vmem:[#allocation16 + $0x30] sm:$0xf]
        %v3929 = vld [vmem:[#allocation16 + $0x34] sm:$0xf]
        %v3930 = vld [vmem:[#allocation16 + $0x38] sm:$0xf]
        %v3931 = vld [vmem:[#allocation16 + $0x3c] sm:$0xf]
        %v3932 = vld [vmem:[#allocation16 + $0x40] sm:$0xf]
        %v3933 = vld [vmem:[#allocation16 + $0x44] sm:$0xf]
        %v3934 = vld [vmem:[#allocation16 + $0x48] sm:$0xf]
        %v3935 = vld [vmem:[#allocation16 + $0x4c] sm:$0xf]
        %v3936 = vld [vmem:[#allocation16 + $0x50] sm:$0xf]
        %v3937 = vld [vmem:[#allocation16 + $0x54] sm:$0xf]
        %v3938 = vld [vmem:[#allocation16 + $0x58] sm:$0xf]
        %v3939 = vld [vmem:[#allocation16 + $0x5c] sm:$0xf]
        %v3940 = vld [vmem:[#allocation16 + $0x60] sm:$0xf]
        %v3941 = vld [vmem:[#allocation16 + $0x64] sm:$0xf]
        %v3942 = vld [vmem:[#allocation16 + $0x68] sm:$0xf]
        %v3943 = vld [vmem:[#allocation16 + $0x6c] sm:$0xf]
        %v3944 = vld [vmem:[#allocation16 + $0x70] sm:$0xf]
        %v3945 = vld [vmem:[#allocation16 + $0x74] sm:$0xf]
        %v3946 = vld [vmem:[#allocation16 + $0x78] sm:$0xf]
        %v3947 = vld [vmem:[#allocation16 + $0x7c] sm:$0xf]
        %v3948 = vld [vmem:[#allocation16 + $0x80] sm:$0xf]
        %v3949 = vld [vmem:[#allocation16 + $0x84] sm:$0xf]
        %v3950 = vld [vmem:[#allocation16 + $0x88] sm:$0xf]
        %v3951 = vld [vmem:[#allocation16 + $0x8c] sm:$0xf]
        %v3952 = vld [vmem:[#allocation16 + $0x90] sm:$0xf]
        %v3953 = vld [vmem:[#allocation16 + $0x94] sm:$0xf]
        %v3954 = vld [vmem:[#allocation16 + $0x98] sm:$0xf]
        %v3955 = vld [vmem:[#allocation16 + $0x9c] sm:$0xf]
        %v3956 = vld [vmem:[#allocation16 + $0xa0] sm:$0xf]
        %v3957 = vld [vmem:[#allocation16 + $0xa4] sm:$0xf]
        %v3958 = vld [vmem:[#allocation16 + $0xa8] sm:$0xf]
        %v3959 = vld [vmem:[#allocation16 + $0xac] sm:$0xf]
        %v3960 = vld [vmem:[#allocation16 + $0xb0] sm:$0xf]
        %v3961 = vld [vmem:[#allocation16 + $0xb4] sm:$0xf]
        %v3962 = vld [vmem:[#allocation16 + $0xb8] sm:$0xf]
        %v3963 = vld [vmem:[#allocation16 + $0xbc] sm:$0xf]
        %v3964 = vld [vmem:[#allocation16 + $0xc0] sm:$0xf]
        %v3965 = vld [vmem:[#allocation16 + $0xc4] sm:$0xf]
        %v3966 = vld [vmem:[#allocation16 + $0xc8] sm:$0xf]
        %v3967 = vld [vmem:[#allocation16 + $0xcc] sm:$0xf]
        %v3968 = vld [vmem:[#allocation16 + $0xd0] sm:$0xf]
        %v3969 = vld [vmem:[#allocation16 + $0xd4] sm:$0xf]
        %v3970 = vld [vmem:[#allocation16 + $0xd8] sm:$0xf]
        %v3971 = vld [vmem:[#allocation16 + $0xdc] sm:$0xf]
        %v3972 = vld [vmem:[#allocation16 + $0xe0] sm:$0xf]
        %v3973 = vld [vmem:[#allocation16 + $0xe4] sm:$0xf]
        %v3974 = vld [vmem:[#allocation16 + $0xe8] sm:$0xf]
        %v3975 = vld [vmem:[#allocation16 + $0xec] sm:$0xf]
        %v3976 = vld [vmem:[#allocation16 + $0xf0] sm:$0xf]
        %v3977 = vld [vmem:[#allocation16 + $0xf4] sm:$0xf]
        %v3978 = vld [vmem:[#allocation16 + $0xf8] sm:$0xf]
        %v3979 = vld [vmem:[#allocation16 + $0xfc] sm:$0xf]
        %v3980 = vld [vmem:[%s15] sm:$0x1]
        %v3982 = vlaneseq
        %v3983 = vshrl.u32 %v3982, 7
        %v3984 = vsub.s32 0, %v3983
        %v3985 = vrot.slane %v3980, %v3984
        %v4051 = vunpack.c.l.b16 %v3916
        %v4052 = vunpack.c.l.b16 %v3917
        %v4053 = vunpack.c.l.b16 %v3918
        %v4054 = vunpack.c.l.b16 %v3919
        %v4055 = vunpack.c.l.b16 %v3920
        %v4056 = vunpack.c.l.b16 %v3921
        %v4057 = vunpack.c.l.b16 %v3922
        %v4058 = vunpack.c.l.b16 %v3923
        %v4059 = vunpack.c.l.b16 %v3924
        %v4060 = vunpack.c.l.b16 %v3925
        %v4061 = vunpack.c.l.b16 %v3926
        %v4062 = vunpack.c.l.b16 %v3927
        %v4063 = vunpack.c.l.b16 %v3928
        %v4064 = vunpack.c.l.b16 %v3929
        %v4065 = vunpack.c.l.b16 %v3930
        %v4066 = vunpack.c.l.b16 %v3931
        %v4067 = vunpack.c.l.b16 %v3932
        %v4068 = vunpack.c.l.b16 %v3933
        %v4069 = vunpack.c.l.b16 %v3934
        %v4070 = vunpack.c.l.b16 %v3935
        %v4071 = vunpack.c.l.b16 %v3936
        %v4072 = vunpack.c.l.b16 %v3937
        %v4073 = vunpack.c.l.b16 %v3938
        %v4074 = vunpack.c.l.b16 %v3939
        %v4075 = vunpack.c.l.b16 %v3940
        %v4076 = vunpack.c.l.b16 %v3941
        %v4077 = vunpack.c.l.b16 %v3942
        %v4078 = vunpack.c.l.b16 %v3943
        %v4079 = vunpack.c.l.b16 %v3944
        %v4080 = vunpack.c.l.b16 %v3945
        %v4081 = vunpack.c.l.b16 %v3946
        %v4082 = vunpack.c.l.b16 %v3947
        %v4083 = vunpack.c.l.b16 %v3948
        %v4084 = vunpack.c.l.b16 %v3949
        %v4085 = vunpack.c.l.b16 %v3950
        %v4086 = vunpack.c.l.b16 %v3951
        %v4087 = vunpack.c.l.b16 %v3952
        %v4088 = vunpack.c.l.b16 %v3953
        %v4089 = vunpack.c.l.b16 %v3954
        %v4090 = vunpack.c.l.b16 %v3955
        %v4091 = vunpack.c.l.b16 %v3956
        %v4092 = vunpack.c.l.b16 %v3957
        %v4093 = vunpack.c.l.b16 %v3958
        %v4094 = vunpack.c.l.b16 %v3959
        %v4095 = vunpack.c.l.b16 %v3960
        %v4096 = vunpack.c.l.b16 %v3961
        %v4097 = vunpack.c.l.b16 %v3962
        %v4098 = vunpack.c.l.b16 %v3963
        %v4099 = vunpack.c.l.b16 %v3964
        %v4100 = vunpack.c.l.b16 %v3965
        %v4101 = vunpack.c.l.b16 %v3966
        %v4102 = vunpack.c.l.b16 %v3967
        %v4103 = vunpack.c.l.b16 %v3968
        %v4104 = vunpack.c.l.b16 %v3969
        %v4105 = vunpack.c.l.b16 %v3970
        %v4106 = vunpack.c.l.b16 %v3971
        %v4107 = vunpack.c.l.b16 %v3972
        %v4108 = vunpack.c.l.b16 %v3973
        %v4109 = vunpack.c.l.b16 %v3974
        %v4110 = vunpack.c.l.b16 %v3975
        %v4111 = vunpack.c.l.b16 %v3976
        %v4112 = vunpack.c.l.b16 %v3977
        %v4113 = vunpack.c.l.b16 %v3978
        %v4114 = vunpack.c.l.b16 %v3979
        %v4115 = vpack.c.b16 %v4052, %v4051
        %v4116 = vpack.c.b16 %v4054, %v4053
        %v4117 = vpack.c.b16 %v4056, %v4055
        %v4118 = vpack.c.b16 %v4058, %v4057
        %v4119 = vpack.c.b16 %v4060, %v4059
        %v4120 = vpack.c.b16 %v4062, %v4061
        %v4121 = vpack.c.b16 %v4064, %v4063
        %v4122 = vpack.c.b16 %v4066, %v4065
        %v4123 = vpack.c.b16 %v4068, %v4067
        %v4124 = vpack.c.b16 %v4070, %v4069
        %v4125 = vpack.c.b16 %v4072, %v4071
        %v4126 = vpack.c.b16 %v4074, %v4073
        %v4127 = vpack.c.b16 %v4076, %v4075
        %v4128 = vpack.c.b16 %v4078, %v4077
        %v4129 = vpack.c.b16 %v4080, %v4079
        %v4130 = vpack.c.b16 %v4082, %v4081
        %v4131 = vpack.c.b16 %v4084, %v4083
        %v4132 = vpack.c.b16 %v4086, %v4085
        %v4133 = vpack.c.b16 %v4088, %v4087
        %v4134 = vpack.c.b16 %v4090, %v4089
        %v4135 = vpack.c.b16 %v4092, %v4091
        %v4136 = vpack.c.b16 %v4094, %v4093
        %v4137 = vpack.c.b16 %v4096, %v4095
        %v4138 = vpack.c.b16 %v4098, %v4097
        %v4139 = vpack.c.b16 %v4100, %v4099
        %v4140 = vpack.c.b16 %v4102, %v4101
        %v4141 = vpack.c.b16 %v4104, %v4103
        %v4142 = vpack.c.b16 %v4106, %v4105
        %v4143 = vpack.c.b16 %v4108, %v4107
        %v4144 = vpack.c.b16 %v4110, %v4109
        %v4145 = vpack.c.b16 %v4112, %v4111
        %v4146 = vpack.c.b16 %v4114, %v4113
        %4179 = vmatprep.subr.bf16.mxu0 0
        %4180 = vmatpush1.bf16.msra.mxu0 %v4122
        %4181 = vmatprep.subr.bf16.mxu0 0
        %4182 = vmatpush1.bf16.msra.mxu0 %v4121
        %4183 = vmatprep.subr.bf16.mxu0 0
        %4184 = vmatpush1.bf16.msra.mxu0 %v4120
        %4185 = vmatprep.subr.bf16.mxu0 0
        %4186 = vmatpush1.bf16.msra.mxu0 %v4119
        %4187 = vmatprep.subr.bf16.mxu0 0
        %4188 = vmatpush1.bf16.msra.mxu0 %v4118
        %4189 = vmatprep.subr.bf16.mxu0 0
        %4190 = vmatpush1.bf16.msra.mxu0 %v4117
        %4191 = vmatprep.subr.bf16.mxu0 0
        %4192 = vmatpush1.bf16.msra.mxu0 %v4116
        %4193 = vmatprep.subr.bf16.mxu0 0
        %4194 = vmatpush1.bf16.msra.mxu0 %v4115
        %4195 = vmatprep.subr.bf16.mxu0 0
        %4196 = vmatpush2.bf16.msra.mxu0 %v4130
        %4197 = vmatprep.subr.bf16.mxu0 0
        %4198 = vmatpush2.bf16.msra.mxu0 %v4129
        %4199 = vmatprep.subr.bf16.mxu0 0
        %4200 = vmatpush2.bf16.msra.mxu0 %v4128
        %4201 = vmatprep.subr.bf16.mxu0 0
        %4202 = vmatpush2.bf16.msra.mxu0 %v4127
        %4203 = vmatprep.subr.bf16.mxu0 0
        %4204 = vmatpush2.bf16.msra.mxu0 %v4126
        %4205 = vmatprep.subr.bf16.mxu0 0
        %4206 = vmatpush2.bf16.msra.mxu0 %v4125
        %4207 = vmatprep.subr.bf16.mxu0 0
        %4208 = vmatpush2.bf16.msra.mxu0 %v4124
        %4209 = vmatprep.subr.bf16.mxu0 0
        %4210 = vmatpush2.bf16.msra.mxu0 %v4123
        %4211 = vmatprep.mubr.bf16.mxu0 %v3909
        %4212 = vmatmul.mubr.bf16.gmra.mxu0 %v3908
        %v4213 = vpop.f32.mrf.mxu0
        %v4214 = vadd.f32 %v3985, %v4213
        %v4215 = vpop.f32.mrf.mxu0
        %v4216 = vpop.f32.mrf.mxu0
        %v4217 = vadd.f32 %v3985, %v4216
        %v4218 = vpop.f32.mrf.mxu0
        %4219 = vmatprep.mubr.bf16.mxu0 %v3913
        %4220 = vmatmul.mubr.bf16.gmra.mxu0 %v3912
        %v4221 = vpop.f32.mrf.mxu0
        %v4222 = vadd.f32 %v3985, %v4221
        %v4223 = vpop.f32.mrf.mxu0
        %v4224 = vpop.f32.mrf.mxu0
        %v4225 = vadd.f32 %v3985, %v4224
        %v4226 = vpop.f32.mrf.mxu0
        %4227 = vdwg.mxu0
        %4228 = vmatprep.subr.bf16.mxu0 0
        %4229 = vmatpush1.bf16.msra.mxu0 %v4138
        %4230 = vmatprep.subr.bf16.mxu0 0
        %4231 = vmatpush1.bf16.msra.mxu0 %v4137
        %4232 = vmatprep.subr.bf16.mxu0 0
        %4233 = vmatpush1.bf16.msra.mxu0 %v4136
        %4234 = vmatprep.subr.bf16.mxu0 0
        %4235 = vmatpush1.bf16.msra.mxu0 %v4135
        %4236 = vmatprep.subr.bf16.mxu0 0
        %4237 = vmatpush1.bf16.msra.mxu0 %v4134
        %4238 = vmatprep.subr.bf16.mxu0 0
        %4239 = vmatpush1.bf16.msra.mxu0 %v4133
        %4240 = vmatprep.subr.bf16.mxu0 0
        %4241 = vmatpush1.bf16.msra.mxu0 %v4132
        %4242 = vmatprep.subr.bf16.mxu0 0
        %4243 = vmatpush1.bf16.msra.mxu0 %v4131
        %4244 = vmatprep.subr.bf16.mxu0 0
        %4245 = vmatpush2.bf16.msra.mxu0 %v4146
        %4246 = vmatprep.subr.bf16.mxu0 0
        %4247 = vmatpush2.bf16.msra.mxu0 %v4145
        %4248 = vmatprep.subr.bf16.mxu0 0
        %4249 = vmatpush2.bf16.msra.mxu0 %v4144
        %4250 = vmatprep.subr.bf16.mxu0 0
        %4251 = vmatpush2.bf16.msra.mxu0 %v4143
        %4252 = vmatprep.subr.bf16.mxu0 0
        %4253 = vmatpush2.bf16.msra.mxu0 %v4142
        %4254 = vmatprep.subr.bf16.mxu0 0
        %4255 = vmatpush2.bf16.msra.mxu0 %v4141
        %4256 = vmatprep.subr.bf16.mxu0 0
        %4257 = vmatpush2.bf16.msra.mxu0 %v4140
        %4258 = vmatprep.subr.bf16.mxu0 0
        %4259 = vmatpush2.bf16.msra.mxu0 %v4139
        %4260 = vmatprep.mubr.bf16.mxu0 %v3911
        %4261 = vmatmul.mubr.bf16.gmra.mxu0 %v3910
        %v4262 = vpop.f32.mrf.mxu0
        %v4263 = vadd.f32 %v4214, %v4262
        %v4264 = vpop.f32.mrf.mxu0
        %v4265 = vpop.f32.mrf.mxu0
        %v4266 = vadd.f32 %v4217, %v4265
        %v4267 = vpop.f32.mrf.mxu0
        %4268 = vmatprep.mubr.bf16.mxu0 %v3915
        %4269 = vmatmul.mubr.bf16.gmra.mxu0 %v3914
        %v4270 = vpop.f32.mrf.mxu0
        %v4271 = vadd.f32 %v4222, %v4270
        %v4272 = vpop.f32.mrf.mxu0
        %v4273 = vpop.f32.mrf.mxu0
        %v4274 = vadd.f32 %v4225, %v4273
        %v4275 = vpop.f32.mrf.mxu0
        %4276 = vdwg.mxu0
        %v4277 = vadd.f32 %v3372, %v4263
        %v4278 = vadd.f32 %v3373, %v4266
        %v4279 = vadd.f32 %v3374, %v4271
        %v4280 = vadd.f32 %v3375, %v4274
        %4281 = vst [vmem:[%s654] sm:$0xff] %v4277
        %4282 = vst [vmem:[%s654 + $0x8] sm:$0xff] %v4278
        %4283 = vst [vmem:[%s654 + $0x10] sm:$0xff] %v4279
        %4284 = vst [vmem:[%s654 + $0x18] sm:$0xff] %v4280
        %s4285 = sand.u32 %s386, 1
        %s4286 = scalar_lea.sflag [#allocation4], %s4285
        %s4287 = sand.u32 %s386, 1
        %s4288 = smul.addr %s4287, 32
        %s4289 = scalar_lea.vmem [#allocation17], %s4288
        // Predicated region
        $region121: #{tpu_custom_call.1} parent=83 // pred_check
          %p4290 = pneg %p396
        $region122: #{tpu_custom_call.1} parent=83 // pred_check_branch
          %4292 = sbr.rel (%p4290) target = $region124
        $region123: #{tpu_custom_call.1} parent=83 // pred_region
          %s4293 = smul.u32 2, %s37
          %s4295 = ssub.s32 512, 512
          %4296 = vsyncadd %s4286, %s4295
          %s4297 = smul.addr %s4293, 2
          %s4298 = smul.addr %s4297, 128
          %s4299 = scalar_lea.hbm %s16, %s4298
          %s4300 = sshll.u32 %s4289, 4
          %s4301 = int_to_ptr.vmem [resolvable:$true] %s4300
          %4306 = dma.vmem_to_hbm [thread:$0]  %s4301, 512, %s4299, %s4286, 128, 128, 8
        $region124: #{tpu_custom_call.1} parent=83 // pred_fallthru
          _
      $region84: #{tpu_custom_call.1} parent=5 // pred_fallthru
        _
      %p4307 = scmp.le.s32.totalorder 2, %s32
      // Predicated region
      $region125: #{tpu_custom_call.1} parent=5 // pred_check
        %p4308 = pneg %p4307
      $region126: #{tpu_custom_call.1} parent=5 // pred_check_branch
        %4310 = sbr.rel (%p4308) target = $region128
      $region127: #{tpu_custom_call.1} parent=5 // pred_region
        %s4311 = ssub.s32 %s32, 2
        // Predicated region
        $region129: #{tpu_custom_call.1} parent=127 // pred_check
          %p4312 = pneg %p402
        $region130: #{tpu_custom_call.1} parent=127 // pred_check_branch
          %4314 = sbr.rel (%p4312) target = $region132
        $region131: #{tpu_custom_call.1} parent=127 // pred_region
          %s4315 = sand.u32 %s387, 1
          %s4316 = scalar_lea.sflag [#allocation4], %s4315
          %s4317 = sand.u32 %s387, 1
          %s4318 = smul.addr %s4317, 32
          %s4319 = scalar_lea.vmem [#allocation17], %s4318
          %4320 = dma.done %s4316, 512
        $region132: #{tpu_custom_call.1} parent=127 // pred_fallthru
          _
      $region128: #{tpu_custom_call.1} parent=5 // pred_fallthru
        _
    $region6: #{tpu_custom_call.1} parent=1 // loop_footer
      %s36 = sadd.s32 1, %s32
    $region7: #{tpu_custom_call.1} parent=1 // loop_footer_branch
      %31 = sbr.rel target = $region3
    $region8: #{tpu_custom_call.1} parent=1 // loop_exit
      _
    %4321 = vsyncpa [#allocation3], 1
    %s4322 = scalar_lea.sflag [#allocation3], 1
    %4323 = vsyncpa %s4322, 1
    %4324 = vsyncpa [#allocation6], 1
    %4325 = vsyncpa [#allocation9], 1
    %4326 = vsyncpa [#allocation12], 1
    %4327 = vsyncpa [#allocation15], 1
    %4328 = vsyncpa [#allocation4], 1
    %s4329 = scalar_lea.sflag [#allocation4], 1
    %4330 = vsyncpa %s4329, 1

</llo_original>
